<compile_context>
chip_gen: v7x
topology: tpu7x:2x2x1
jax: 0.10.0
libtpu: 0.0.40
codegen_flags: <defaults>
</compile_context>

<pallas_src>
import functools

import jax
import jax.numpy as jnp
from jax import lax
from jax.experimental import pallas as pl
from jax.experimental.pallas import tpu as pltpu

EPS = 1e-5


def _round_up(v, m):
    return (v + m - 1) // m * m


def _bn_scale_shift(sum_ref, sq_ref, gamma, beta, inv_n):
    """Fold BatchNorm (batch stats, biased var) into per-feature scale/shift."""
    mean = sum_ref[...] * inv_n
    var = jnp.maximum(sq_ref[...] * inv_n - mean * mean, 0.0)
    scale = gamma * lax.rsqrt(var + EPS)
    shift = beta - mean * scale
    return scale, shift


# --------------------------------------------------------------------------- kernels
def _stats1_kernel(x_ref, w1_ref, b1_ref, sum_ref, sq_ref, *, tile_n, n_valid):
    i = pl.program_id(0)

    @pl.when(i == 0)
    def _():
        sum_ref[...] = jnp.zeros_like(sum_ref)
        sq_ref[...] = jnp.zeros_like(sq_ref)

    # mask rows that are batch padding
    row = i * tile_n + lax.broadcasted_iota(jnp.int32, (tile_n, 1), 0)
    valid = (row < n_valid).astype(jnp.float32)

    h1 = jnp.dot(x_ref[...], w1_ref[...],
                 preferred_element_type=jnp.float32) + b1_ref[...]
    hm = h1 * valid
    sum_ref[...] += jnp.sum(hm, axis=0, keepdims=True)
    sq_ref[...] += jnp.sum(hm * hm, axis=0, keepdims=True)


def _stats2_kernel(x_ref, w1_ref, b1_ref, g1_ref, be1_ref, w2_ref, b2_ref,
                   sum1_ref, sq1_ref, sum2_ref, sq2_ref, *, tile_n, n_valid):
    i = pl.program_id(0)

    @pl.when(i == 0)
    def _():
        sum2_ref[...] = jnp.zeros_like(sum2_ref)
        sq2_ref[...] = jnp.zeros_like(sq2_ref)

    inv_n = 1.0 / float(n_valid)
    row = i * tile_n + lax.broadcasted_iota(jnp.int32, (tile_n, 1), 0)
    valid = (row < n_valid).astype(jnp.float32)

    h1 = jnp.dot(x_ref[...], w1_ref[...],
                 preferred_element_type=jnp.float32) + b1_ref[...]
    s1, t1 = _bn_scale_shift(sum1_ref, sq1_ref, g1_ref[...], be1_ref[...], inv_n)
    a1 = jnp.maximum(h1 * s1 + t1, 0.0)

    h2 = jnp.dot(a1.astype(jnp.bfloat16), w2_ref[...],
                 preferred_element_type=jnp.float32) + b2_ref[...]
    hm = h2 * valid
    sum2_ref[...] += jnp.sum(hm, axis=0, keepdims=True)
    sq2_ref[...] += jnp.sum(hm * hm, axis=0, keepdims=True)


def _apply_kernel(x_ref, w1_ref, b1_ref, g1_ref, be1_ref,
                  w2_ref, b2_ref, g2_ref, be2_ref, w3_ref, b3_ref,
                  sum1_ref, sq1_ref, sum2_ref, sq2_ref, o_ref, *, n_valid):
    inv_n = 1.0 / float(n_valid)

    h1 = jnp.dot(x_ref[...], w1_ref[...],
                 preferred_element_type=jnp.float32) + b1_ref[...]
    s1, t1 = _bn_scale_shift(sum1_ref, sq1_ref, g1_ref[...], be1_ref[...], inv_n)
    a1 = jnp.maximum(h1 * s1 + t1, 0.0)

    h2 = jnp.dot(a1.astype(jnp.bfloat16), w2_ref[...],
                 preferred_element_type=jnp.float32) + b2_ref[...]
    s2, t2 = _bn_scale_shift(sum2_ref, sq2_ref, g2_ref[...], be2_ref[...], inv_n)
    a2 = jnp.maximum(h2 * s2 + t2, 0.0)

    # (tile_n, 4C) @ (4C, 1) as VPU multiply + lane reduce (keeps the MXU clean).
    logit = jnp.sum(a2 * w3_ref[...], axis=-1, keepdims=True) + b3_ref[...]
    o_ref[...] = jax.nn.sigmoid(logit)


# --------------------------------------------------------------------------- wrapper
@functools.partial(jax.jit, static_argnames=("tile_n",))
def simnet_forward(x, params, tile_n=512):
    """x: (N, 2*C) float32 -> (N, 1) float32 (PyTorch train-mode BN semantics)."""
    n, c2 = x.shape
    h = params["w1"].shape[1]

    tile_n = max(8, min(_round_up(tile_n, 8), _round_up(n, 8)))
    n_pad = _round_up(n, tile_n)
    num_tiles = n_pad // tile_n

    xb = x.astype(jnp.bfloat16)
    if n_pad != n:
        xb = jnp.pad(xb, ((0, n_pad - n), (0, 0)))
    w1b = params["w1"].astype(jnp.bfloat16)
    w2b = params["w2"].astype(jnp.bfloat16)
    w3_row = params["w3"].reshape(1, h).astype(jnp.float32)

    x_spec = pl.BlockSpec((tile_n, c2), lambda i: (i, 0))

    def const_spec(shape):
        # Same block for every grid step -> stays VMEM-resident (no per-step DMA).
        return pl.BlockSpec(shape, lambda i: (0,) * len(shape))

    vec = jax.ShapeDtypeStruct((1, h), jnp.float32)

    # ---- pass 1: BN1 statistics ----------------------------------------------------
    sum1, sq1 = pl.pallas_call(
        functools.partial(_stats1_kernel, tile_n=tile_n, n_valid=n),
        out_shape=(vec, vec),
        grid_spec=pltpu.PrefetchScalarGridSpec(
            num_scalar_prefetch=0,
            grid=(num_tiles,),
            in_specs=[x_spec, const_spec((c2, h)), const_spec((1, h))],
            out_specs=[const_spec((1, h)), const_spec((1, h))],
        ),
        compiler_params=pltpu.CompilerParams(dimension_semantics=("arbitrary",)),
    )(xb, w1b, params["b1"])

    # ---- pass 2: BN2 statistics ----------------------------------------------------
    sum2, sq2 = pl.pallas_call(
        functools.partial(_stats2_kernel, tile_n=tile_n, n_valid=n),
        out_shape=(vec, vec),
        grid_spec=pltpu.PrefetchScalarGridSpec(
            num_scalar_prefetch=0,
            grid=(num_tiles,),
            in_specs=[x_spec,
                      const_spec((c2, h)), const_spec((1, h)),   # w1, b1
                      const_spec((1, h)), const_spec((1, h)),    # g1, be1
                      const_spec((h, h)), const_spec((1, h)),    # w2, b2
                      const_spec((1, h)), const_spec((1, h))],   # sum1, sq1
            out_specs=[const_spec((1, h)), const_spec((1, h))],
        ),
        compiler_params=pltpu.CompilerParams(dimension_semantics=("arbitrary",)),
    )(xb, w1b, params["b1"], params["g1"], params["be1"],
      w2b, params["b2"], sum1, sq1)

    # ---- pass 3: row-parallel apply (megacore-friendly) -----------------------------
    out = pl.pallas_call(
        functools.partial(_apply_kernel, n_valid=n),
        out_shape=jax.ShapeDtypeStruct((n_pad, 1), jnp.float32),
        grid_spec=pltpu.PrefetchScalarGridSpec(
            num_scalar_prefetch=0,
            grid=(num_tiles,),
            in_specs=[x_spec,
                      const_spec((c2, h)), const_spec((1, h)),   # w1, b1
                      const_spec((1, h)), const_spec((1, h)),    # g1, be1
                      const_spec((h, h)), const_spec((1, h)),    # w2, b2
                      const_spec((1, h)), const_spec((1, h)),    # g2, be2
                      const_spec((1, h)), const_spec((1, 1)),    # w3 row, b3
                      const_spec((1, h)), const_spec((1, h)),    # sum1, sq1
                      const_spec((1, h)), const_spec((1, h))],   # sum2, sq2
            out_specs=pl.BlockSpec((tile_n, 1), lambda i: (i, 0)),
        ),
        compiler_params=pltpu.CompilerParams(dimension_semantics=("parallel",)),
    )(xb, w1b, params["b1"], params["g1"], params["be1"],
      w2b, params["b2"], params["g2"], params["be2"],
      w3_row, params["b3"], sum1, sq1, sum2, sq2)

    return out[:n]


# --------------------------------------------------------------------------- params / refs
def init_params(key, inchannel):
    c2, c4 = 2 * inchannel, 4 * inchannel
    ks = jax.random.split(key, 6)

    def lin(kw, kb, fan_in, fan_out):
        bound = 1.0 / jnp.sqrt(fan_in)
        w = jax.random.uniform(kw, (fan_in, fan_out), jnp.float32, -bound, bound)
        b = jax.random.uniform(kb, (1, fan_out), jnp.float32, -bound, bound)
        return w, b

    w1, b1 = lin(ks[0], ks[1], c2, c4)
    w2, b2 = lin(ks[2], ks[3], c4, c4)
    w3, b3 = lin(ks[4], ks[5], c4, 1)
    return {
        "w1": w1, "b1": b1, "g1": jnp.ones((1, c4), jnp.float32), "be1": jnp.zeros((1, c4), jnp.float32),
        "w2": w2, "b2": b2, "g2": jnp.ones((1, c4), jnp.float32), "be2": jnp.zeros((1, c4), jnp.float32),
        "w3": w3, "b3": b3,
    }


def simnet_reference_f32(x, p):
    """Pure-JAX f32 reference mirroring the PyTorch train-mode forward."""
    h = x @ p["w1"] + p["b1"]
    h = (h - h.mean(0, keepdims=True)) / jnp.sqrt(h.var(0, keepdims=True) + EPS) * p["g1"] + p["be1"]
    h = jnp.maximum(h, 0.0)
    h = h @ p["w2"] + p["b2"]
    h = (h - h.mean(0, keepdims=True)) / jnp.sqrt(h.var(0, keepdims=True) + EPS) * p["g2"] + p["be2"]
    h = jnp.maximum(h, 0.0)
    return jax.nn.sigmoid(h @ p["w3"] + p["b3"])


def simnet_reference_matched(x, p):
    """Reference mirroring the kernel numerics (bf16 MXU inputs, f32 accumulation/BN)."""
    def bn(h, g, be):
        m = h.mean(0, keepdims=True)
        v = jnp.maximum((h * h).mean(0, keepdims=True) - m * m, 0.0)
        s = g * lax.rsqrt(v + EPS)
        return h * s + (be - m * s)

    h = jnp.dot(x.astype(jnp.bfloat16), p["w1"].astype(jnp.bfloat16),
                preferred_element_type=jnp.float32) + p["b1"]
    h = jnp.maximum(bn(h, p["g1"], p["be1"]), 0.0)
    h = jnp.dot(h.astype(jnp.bfloat16), p["w2"].astype(jnp.bfloat16),
                preferred_element_type=jnp.float32) + p["b2"]
    h = jnp.maximum(bn(h, p["g2"], p["be2"]), 0.0)
    return jax.nn.sigmoid(h @ p["w3"] + p["b3"])


if __name__ == "__main__":
    key = jax.random.PRNGKey(0)
    k_x, k_p = jax.random.split(key)

    inchannel = 16          # -> input dim 32, hidden 64 (SimNet(inchannel=16))
    batch = 333             # not a tile multiple -> exercises padding + masking

    x = jax.random.normal(k_x, (batch, 2 * inchannel), jnp.float32)
    params = init_params(k_p, inchannel)

    out = simnet_forward(x, params, tile_n=128)   # 3 batch tiles at this small size
    out = jax.block_until_ready(out)
    assert out.shape == (batch, 1)

    ref_m = simnet_reference_matched(x, params)   # matches kernel numerics (bf16 matmuls)
    ref_f = simnet_reference_f32(x, params)       # full-f32 PyTorch-style reference
    err_m = float(jnp.max(jnp.abs(out - ref_m)))
    err_f = float(jnp.max(jnp.abs(out - ref_f)))
    assert err_m < 2e-3, f"mismatch vs bf16-matched reference: {err_m}"
    assert err_f < 5e-2, f"mismatch vs f32 reference: {err_f}"

    print("KERNEL_OK")
</pallas_src>

<mosaic_0001>
module attributes {stable_mosaic.version = 11 : i64} {
  func.func @_stats1_kernel(%arg0: i32, %arg1: memref<128x32xbf16, #tpu.memory_space<vmem>>, %arg2: memref<32x64xbf16, #tpu.memory_space<vmem>>, %arg3: memref<1x64xf32, #tpu.memory_space<vmem>>, %arg4: memref<1x64xf32, #tpu.memory_space<vmem>>, %arg5: memref<1x64xf32, #tpu.memory_space<vmem>>) attributes {dimension_semantics = [#tpu.dimension_semantics<arbitrary>], iteration_bounds = array<i64: 3>, scalar_prefetch = 0 : i64, scratch_operands = 0 : i64, tpu.core_type = #tpu.core_type<tc>, window_params = [{transform_indices = @transform_0, window_bounds = array<i64: 128, 32>}, {pipeline_mode = #tpu.pipeline_mode<synchronous>, transform_indices = @transform_1, window_bounds = array<i64: 32, 64>}, {pipeline_mode = #tpu.pipeline_mode<synchronous>, transform_indices = @transform_2, window_bounds = array<i64: 1, 64>}, {pipeline_mode = #tpu.pipeline_mode<synchronous>, transform_indices = @transform_3, window_bounds = array<i64: 1, 64>}, {pipeline_mode = #tpu.pipeline_mode<synchronous>, transform_indices = @transform_4, window_bounds = array<i64: 1, 64>}]} {
    %c0_i32 = arith.constant 0 : i32
    %0 = arith.cmpi eq, %arg0, %c0_i32 : i32
    %1 = arith.extui %0 : i1 to i32
    %c0_i32_0 = arith.constant 0 : i32
    %2 = arith.cmpi ne, %1, %c0_i32_0 : i32
    scf.if %2 {
      %cst_16 = arith.constant 0.000000e+00 : f32
      %30 = vector.broadcast %cst_16 : f32 to vector<1x64xf32>
      %c0_17 = arith.constant 0 : index
      %c0_18 = arith.constant 0 : index
      %31 = vector.load %arg4[%c0_17, %c0_18] : memref<1x64xf32, #tpu.memory_space<vmem>>, vector<1x64xf32>
      tpu.vector_store %arg4[%c0_17, %c0_18], %30 {strides = array<i32>} : memref<1x64xf32, #tpu.memory_space<vmem>>, vector<1x64xf32>,
      %cst_19 = arith.constant 0.000000e+00 : f32
      %32 = vector.broadcast %cst_19 : f32 to vector<1x64xf32>
      %c0_20 = arith.constant 0 : index
      %c0_21 = arith.constant 0 : index
      %33 = vector.load %arg5[%c0_20, %c0_21] : memref<1x64xf32, #tpu.memory_space<vmem>>, vector<1x64xf32>
      tpu.vector_store %arg5[%c0_20, %c0_21], %32 {strides = array<i32>} : memref<1x64xf32, #tpu.memory_space<vmem>>, vector<1x64xf32>,
    } else {
    }
    %c128_i32 = arith.constant 128 : i32
    %3 = arith.muli %arg0, %c128_i32 : i32
    %4 = tpu.iota {dimensions = array<i32: 0>} : vector<128x1xi32>
    %5 = vector.broadcast %3 : i32 to vector<128x1xi32>
    %6 = arith.addi %5, %4 : vector<128x1xi32>
    %c333_i32 = arith.constant 333 : i32
    %7 = vector.broadcast %c333_i32 : i32 to vector<128x1xi32>
    %8 = arith.cmpi slt, %6, %7 : vector<128x1xi32>
    %9 = arith.extui %8 : vector<128x1xi1> to vector<128x1xi32>
    %10 = arith.sitofp %9 : vector<128x1xi32> to vector<128x1xf32>
    %c0 = arith.constant 0 : index
    %c0_1 = arith.constant 0 : index
    %11 = vector.load %arg1[%c0, %c0_1] : memref<128x32xbf16, #tpu.memory_space<vmem>>, vector<128x32xbf16>
    %c0_2 = arith.constant 0 : index
    %c0_3 = arith.constant 0 : index
    %12 = vector.load %arg2[%c0_2, %c0_3] : memref<32x64xbf16, #tpu.memory_space<vmem>>, vector<32x64xbf16>
    %cst = arith.constant dense<0.000000e+00> : vector<128x64xf32>
    %13 = tpu.matmul %11, %12, %cst {dimension_numbers = #tpu.dot_dimension_numbers<[1], [0], [0], [1], [0, 0, 1, 1], [], []>} : vector<128x32xbf16>, vector<32x64xbf16>, vector<128x64xf32> -> vector<128x64xf32>
    %c0_4 = arith.constant 0 : index
    %c0_5 = arith.constant 0 : index
    %14 = vector.load %arg3[%c0_4, %c0_5] : memref<1x64xf32, #tpu.memory_space<vmem>>, vector<1x64xf32>
    %15 = vector.broadcast %14 : vector<1x64xf32> to vector<128x64xf32>
    %16 = arith.addf %13, %15 : vector<128x64xf32>
    %17 = vector.broadcast %10 : vector<128x1xf32> to vector<128x64xf32>
    %18 = arith.mulf %16, %17 : vector<128x64xf32>
    %c0_6 = arith.constant 0 : index
    %c0_7 = arith.constant 0 : index
    %19 = vector.load %arg4[%c0_6, %c0_7] : memref<1x64xf32, #tpu.memory_space<vmem>>, vector<1x64xf32>
    %cst_8 = arith.constant dense<0.000000e+00> : vector<64xf32>
    %20 = vector.multi_reduction <add>, %18, %cst_8 [0] : vector<128x64xf32> to vector<64xf32>
    %21 = vector.shape_cast %20 : vector<64xf32> to vector<1x64xf32>
    %22 = arith.addf %19, %21 : vector<1x64xf32>
    %c0_9 = arith.constant 0 : index
    %c0_10 = arith.constant 0 : index
    %23 = vector.load %arg4[%c0_9, %c0_10] : memref<1x64xf32, #tpu.memory_space<vmem>>, vector<1x64xf32>
    tpu.vector_store %arg4[%c0_9, %c0_10], %22 {strides = array<i32>} : memref<1x64xf32, #tpu.memory_space<vmem>>, vector<1x64xf32>,
    %c0_11 = arith.constant 0 : index
    %c0_12 = arith.constant 0 : index
    %24 = vector.load %arg5[%c0_11, %c0_12] : memref<1x64xf32, #tpu.memory_space<vmem>>, vector<1x64xf32>
    %25 = arith.mulf %18, %18 : vector<128x64xf32>
    %cst_13 = arith.constant dense<0.000000e+00> : vector<64xf32>
    %26 = vector.multi_reduction <add>, %25, %cst_13 [0] : vector<128x64xf32> to vector<64xf32>
    %27 = vector.shape_cast %26 : vector<64xf32> to vector<1x64xf32>
    %28 = arith.addf %24, %27 : vector<1x64xf32>
    %c0_14 = arith.constant 0 : index
    %c0_15 = arith.constant 0 : index
    %29 = vector.load %arg5[%c0_14, %c0_15] : memref<1x64xf32, #tpu.memory_space<vmem>>, vector<1x64xf32>
    tpu.vector_store %arg5[%c0_14, %c0_15], %28 {strides = array<i32>} : memref<1x64xf32, #tpu.memory_space<vmem>>, vector<1x64xf32>,
    return
  }
  func.func @transform_0(%arg0: i32) -> (i32, i32) {
    %c0_i32 = arith.constant 0 : i32
    %c0_i32_0 = arith.constant 0 : i32
    return %arg0, %c0_i32 : i32, i32
  }
  func.func @transform_1(%arg0: i32) -> (i32, i32) {
    %c0_i32 = arith.constant 0 : i32
    %c0_i32_0 = arith.constant 0 : i32
    %c0_i32_1 = arith.constant 0 : i32
    return %c0_i32, %c0_i32_0 : i32, i32
  }
  func.func @transform_2(%arg0: i32) -> (i32, i32) {
    %c0_i32 = arith.constant 0 : i32
    %c0_i32_0 = arith.constant 0 : i32
    %c0_i32_1 = arith.constant 0 : i32
    return %c0_i32, %c0_i32_0 : i32, i32
  }
  func.func @transform_3(%arg0: i32) -> (i32, i32) {
    %c0_i32 = arith.constant 0 : i32
    %c0_i32_0 = arith.constant 0 : i32
    %c0_i32_1 = arith.constant 0 : i32
    return %c0_i32, %c0_i32_0 : i32, i32
  }
  func.func @transform_4(%arg0: i32) -> (i32, i32) {
    %c0_i32 = arith.constant 0 : i32
    %c0_i32_0 = arith.constant 0 : i32
    %c0_i32_1 = arith.constant 0 : i32
    return %c0_i32, %c0_i32_0 : i32, i32
  }
}

module attributes {stable_mosaic.version = 11 : i64} {
  func.func @_apply_kernel(%arg0: i32, %arg1: memref<128x32xbf16, #tpu.memory_space<vmem>>, %arg2: memref<32x64xbf16, #tpu.memory_space<vmem>>, %arg3: memref<1x64xf32, #tpu.memory_space<vmem>>, %arg4: memref<1x64xf32, #tpu.memory_space<vmem>>, %arg5: memref<1x64xf32, #tpu.memory_space<vmem>>, %arg6: memref<64x64xbf16, #tpu.memory_space<vmem>>, %arg7: memref<1x64xf32, #tpu.memory_space<vmem>>, %arg8: memref<1x64xf32, #tpu.memory_space<vmem>>, %arg9: memref<1x64xf32, #tpu.memory_space<vmem>>, %arg10: memref<1x64xf32, #tpu.memory_space<vmem>>, %arg11: memref<1x1xf32, #tpu.memory_space<vmem>>, %arg12: memref<1x64xf32, #tpu.memory_space<vmem>>, %arg13: memref<1x64xf32, #tpu.memory_space<vmem>>, %arg14: memref<1x64xf32, #tpu.memory_space<vmem>>, %arg15: memref<1x64xf32, #tpu.memory_space<vmem>>, %arg16: memref<128x1xf32, #tpu.memory_space<vmem>>) attributes {dimension_semantics = [#tpu.dimension_semantics<parallel>], iteration_bounds = array<i64: 3>, scalar_prefetch = 0 : i64, scratch_operands = 0 : i64, tpu.core_type = #tpu.core_type<tc>, window_params = [{transform_indices = @transform_0, window_bounds = array<i64: 128, 32>}, {pipeline_mode = #tpu.pipeline_mode<synchronous>, transform_indices = @transform_1, window_bounds = array<i64: 32, 64>}, {pipeline_mode = #tpu.pipeline_mode<synchronous>, transform_indices = @transform_2, window_bounds = array<i64: 1, 64>}, {pipeline_mode = #tpu.pipeline_mode<synchronous>, transform_indices = @transform_3, window_bounds = array<i64: 1, 64>}, {pipeline_mode = #tpu.pipeline_mode<synchronous>, transform_indices = @transform_4, window_bounds = array<i64: 1, 64>}, {pipeline_mode = #tpu.pipeline_mode<synchronous>, transform_indices = @transform_5, window_bounds = array<i64: 64, 64>}, {pipeline_mode = #tpu.pipeline_mode<synchronous>, transform_indices = @transform_6, window_bounds = array<i64: 1, 64>}, {pipeline_mode = #tpu.pipeline_mode<synchronous>, transform_indices = @transform_7, window_bounds = array<i64: 1, 64>}, {pipeline_mode = #tpu.pipeline_mode<synchronous>, transform_indices = @transform_8, window_bounds = array<i64: 1, 64>}, {pipeline_mode = #tpu.pipeline_mode<synchronous>, transform_indices = @transform_9, window_bounds = array<i64: 1, 64>}, {pipeline_mode = #tpu.pipeline_mode<synchronous>, transform_indices = @transform_10, window_bounds = array<i64: 1, 1>}, {pipeline_mode = #tpu.pipeline_mode<synchronous>, transform_indices = @transform_11, window_bounds = array<i64: 1, 64>}, {pipeline_mode = #tpu.pipeline_mode<synchronous>, transform_indices = @transform_12, window_bounds = array<i64: 1, 64>}, {pipeline_mode = #tpu.pipeline_mode<synchronous>, transform_indices = @transform_13, window_bounds = array<i64: 1, 64>}, {pipeline_mode = #tpu.pipeline_mode<synchronous>, transform_indices = @transform_14, window_bounds = array<i64: 1, 64>}, {transform_indices = @transform_15, window_bounds = array<i64: 128, 1>}]} {
    %c0 = arith.constant 0 : index
    %c0_0 = arith.constant 0 : index
    %0 = vector.load %arg1[%c0, %c0_0] : memref<128x32xbf16, #tpu.memory_space<vmem>>, vector<128x32xbf16>
    %c0_1 = arith.constant 0 : index
    %c0_2 = arith.constant 0 : index
    %1 = vector.load %arg2[%c0_1, %c0_2] : memref<32x64xbf16, #tpu.memory_space<vmem>>, vector<32x64xbf16>
    %cst = arith.constant dense<0.000000e+00> : vector<128x64xf32>
    %2 = tpu.matmul %0, %1, %cst {dimension_numbers = #tpu.dot_dimension_numbers<[1], [0], [0], [1], [0, 0, 1, 1], [], []>} : vector<128x32xbf16>, vector<32x64xbf16>, vector<128x64xf32> -> vector<128x64xf32>
    %c0_3 = arith.constant 0 : index
    %c0_4 = arith.constant 0 : index
    %3 = vector.load %arg3[%c0_3, %c0_4] : memref<1x64xf32, #tpu.memory_space<vmem>>, vector<1x64xf32>
    %4 = vector.broadcast %3 : vector<1x64xf32> to vector<128x64xf32>
    %5 = arith.addf %2, %4 : vector<128x64xf32>
    %c0_5 = arith.constant 0 : index
    %c0_6 = arith.constant 0 : index
    %6 = vector.load %arg4[%c0_5, %c0_6] : memref<1x64xf32, #tpu.memory_space<vmem>>, vector<1x64xf32>
    %c0_7 = arith.constant 0 : index
    %c0_8 = arith.constant 0 : index
    %7 = vector.load %arg5[%c0_7, %c0_8] : memref<1x64xf32, #tpu.memory_space<vmem>>, vector<1x64xf32>
    %c0_9 = arith.constant 0 : index
    %c0_10 = arith.constant 0 : index
    %8 = vector.load %arg12[%c0_9, %c0_10] : memref<1x64xf32, #tpu.memory_space<vmem>>, vector<1x64xf32>
    %cst_11 = arith.constant 0.00300300308 : f32
    %9 = vector.broadcast %cst_11 : f32 to vector<1x64xf32>
    %10 = arith.mulf %8, %9 : vector<1x64xf32>
    %c0_12 = arith.constant 0 : index
    %c0_13 = arith.constant 0 : index
    %11 = vector.load %arg13[%c0_12, %c0_13] : memref<1x64xf32, #tpu.memory_space<vmem>>, vector<1x64xf32>
    %cst_14 = arith.constant 0.00300300308 : f32
    %12 = vector.broadcast %cst_14 : f32 to vector<1x64xf32>
    %13 = arith.mulf %11, %12 : vector<1x64xf32>
    %14 = arith.mulf %10, %10 : vector<1x64xf32>
    %15 = arith.subf %13, %14 : vector<1x64xf32>
    %cst_15 = arith.constant 0.000000e+00 : f32
    %16 = vector.broadcast %cst_15 : f32 to vector<1x64xf32>
    %17 = arith.maximumf %15, %16 : vector<1x64xf32>
    %cst_16 = arith.constant 9.99999974E-6 : f32
    %18 = vector.broadcast %cst_16 : f32 to vector<1x64xf32>
    %19 = arith.addf %17, %18 : vector<1x64xf32>
    %20 = math.rsqrt %19 : vector<1x64xf32>
    %21 = arith.mulf %6, %20 : vector<1x64xf32>
    %22 = arith.mulf %10, %21 : vector<1x64xf32>
    %23 = arith.subf %7, %22 : vector<1x64xf32>
    %24 = vector.broadcast %21 : vector<1x64xf32> to vector<128x64xf32>
    %25 = arith.mulf %5, %24 : vector<128x64xf32>
    %26 = vector.broadcast %23 : vector<1x64xf32> to vector<128x64xf32>
    %27 = arith.addf %25, %26 : vector<128x64xf32>
    %cst_17 = arith.constant 0.000000e+00 : f32
    %28 = vector.broadcast %cst_17 : f32 to vector<128x64xf32>
    %29 = arith.maximumf %27, %28 : vector<128x64xf32>
    %30 = arith.truncf %29 : vector<128x64xf32> to vector<128x64xbf16>
    %c0_18 = arith.constant 0 : index
    %c0_19 = arith.constant 0 : index
    %31 = vector.load %arg6[%c0_18, %c0_19] : memref<64x64xbf16, #tpu.memory_space<vmem>>, vector<64x64xbf16>
    %cst_20 = arith.constant dense<0.000000e+00> : vector<128x64xf32>
    %32 = tpu.matmul %30, %31, %cst_20 {dimension_numbers = #tpu.dot_dimension_numbers<[1], [0], [0], [1], [0, 0, 1, 1], [], []>} : vector<128x64xbf16>, vector<64x64xbf16>, vector<128x64xf32> -> vector<128x64xf32>
    %c0_21 = arith.constant 0 : index
    %c0_22 = arith.constant 0 : index
    %33 = vector.load %arg7[%c0_21, %c0_22] : memref<1x64xf32, #tpu.memory_space<vmem>>, vector<1x64xf32>
    %34 = vector.broadcast %33 : vector<1x64xf32> to vector<128x64xf32>
    %35 = arith.addf %32, %34 : vector<128x64xf32>
    %c0_23 = arith.constant 0 : index
    %c0_24 = arith.constant 0 : index
    %36 = vector.load %arg8[%c0_23, %c0_24] : memref<1x64xf32, #tpu.memory_space<vmem>>, vector<1x64xf32>
    %c0_25 = arith.constant 0 : index
    %c0_26 = arith.constant 0 : index
    %37 = vector.load %arg9[%c0_25, %c0_26] : memref<1x64xf32, #tpu.memory_space<vmem>>, vector<1x64xf32>
    %c0_27 = arith.constant 0 : index
    %c0_28 = arith.constant 0 : index
    %38 = vector.load %arg14[%c0_27, %c0_28] : memref<1x64xf32, #tpu.memory_space<vmem>>, vector<1x64xf32>
    %cst_29 = arith.constant 0.00300300308 : f32
    %39 = vector.broadcast %cst_29 : f32 to vector<1x64xf32>
    %40 = arith.mulf %38, %39 : vector<1x64xf32>
    %c0_30 = arith.constant 0 : index
    %c0_31 = arith.constant 0 : index
    %41 = vector.load %arg15[%c0_30, %c0_31] : memref<1x64xf32, #tpu.memory_space<vmem>>, vector<1x64xf32>
    %cst_32 = arith.constant 0.00300300308 : f32
    %42 = vector.broadcast %cst_32 : f32 to vector<1x64xf32>
    %43 = arith.mulf %41, %42 : vector<1x64xf32>
    %44 = arith.mulf %40, %40 : vector<1x64xf32>
    %45 = arith.subf %43, %44 : vector<1x64xf32>
    %cst_33 = arith.constant 0.000000e+00 : f32
    %46 = vector.broadcast %cst_33 : f32 to vector<1x64xf32>
    %47 = arith.maximumf %45, %46 : vector<1x64xf32>
    %cst_34 = arith.constant 9.99999974E-6 : f32
    %48 = vector.broadcast %cst_34 : f32 to vector<1x64xf32>
    %49 = arith.addf %47, %48 : vector<1x64xf32>
    %50 = math.rsqrt %49 : vector<1x64xf32>
    %51 = arith.mulf %36, %50 : vector<1x64xf32>
    %52 = arith.mulf %40, %51 : vector<1x64xf32>
    %53 = arith.subf %37, %52 : vector<1x64xf32>
    %54 = vector.broadcast %51 : vector<1x64xf32> to vector<128x64xf32>
    %55 = arith.mulf %35, %54 : vector<128x64xf32>
    %56 = vector.broadcast %53 : vector<1x64xf32> to vector<128x64xf32>
    %57 = arith.addf %55, %56 : vector<128x64xf32>
    %cst_35 = arith.constant 0.000000e+00 : f32
    %58 = vector.broadcast %cst_35 : f32 to vector<128x64xf32>
    %59 = arith.maximumf %57, %58 : vector<128x64xf32>
    %c0_36 = arith.constant 0 : index
    %c0_37 = arith.constant 0 : index
    %60 = vector.load %arg10[%c0_36, %c0_37] : memref<1x64xf32, #tpu.memory_space<vmem>>, vector<1x64xf32>
    %61 = vector.broadcast %60 : vector<1x64xf32> to vector<128x64xf32>
    %62 = arith.mulf %59, %61 : vector<128x64xf32>
    %cst_38 = arith.constant dense<0.000000e+00> : vector<128xf32>
    %63 = vector.multi_reduction <add>, %62, %cst_38 [1] : vector<128x64xf32> to vector<128xf32>
    %64 = vector.shape_cast %63 : vector<128xf32> to vector<128x1xf32>
    %c0_39 = arith.constant 0 : index
    %c0_40 = arith.constant 0 : index
    %65 = vector.load %arg11[%c0_39, %c0_40] : memref<1x1xf32, #tpu.memory_space<vmem>>, vector<1x1xf32>
    %66 = vector.broadcast %65 : vector<1x1xf32> to vector<128x1xf32>
    %67 = arith.addf %64, %66 : vector<128x1xf32>
    %68 = arith.negf %67 : vector<128x1xf32>
    %69 = math.exp %68 : vector<128x1xf32>
    %cst_41 = arith.constant 1.000000e+00 : f32
    %70 = vector.broadcast %cst_41 : f32 to vector<128x1xf32>
    %71 = arith.addf %70, %69 : vector<128x1xf32>
    %72 = arith.divf %70, %71 : vector<128x1xf32>
    %c0_42 = arith.constant 0 : index
    %c0_43 = arith.constant 0 : index
    %73 = vector.load %arg16[%c0_42, %c0_43] : memref<128x1xf32, #tpu.memory_space<vmem>>, vector<128x1xf32>
    tpu.vector_store %arg16[%c0_42, %c0_43], %72 {strides = array<i32>} : memref<128x1xf32, #tpu.memory_space<vmem>>, vector<128x1xf32>,
    return
  }
  func.func @transform_0(%arg0: i32) -> (i32, i32) {
    %c0_i32 = arith.constant 0 : i32
    %c0_i32_0 = arith.constant 0 : i32
    return %arg0, %c0_i32 : i32, i32
  }
  func.func @transform_1(%arg0: i32) -> (i32, i32) {
    %c0_i32 = arith.constant 0 : i32
    %c0_i32_0 = arith.constant 0 : i32
    %c0_i32_1 = arith.constant 0 : i32
    return %c0_i32, %c0_i32_0 : i32, i32
  }
  func.func @transform_2(%arg0: i32) -> (i32, i32) {
    %c0_i32 = arith.constant 0 : i32
    %c0_i32_0 = arith.constant 0 : i32
    %c0_i32_1 = arith.constant 0 : i32
    return %c0_i32, %c0_i32_0 : i32, i32
  }
  func.func @transform_3(%arg0: i32) -> (i32, i32) {
    %c0_i32 = arith.constant 0 : i32
    %c0_i32_0 = arith.constant 0 : i32
    %c0_i32_1 = arith.constant 0 : i32
    return %c0_i32, %c0_i32_0 : i32, i32
  }
  func.func @transform_4(%arg0: i32) -> (i32, i32) {
    %c0_i32 = arith.constant 0 : i32
    %c0_i32_0 = arith.constant 0 : i32
    %c0_i32_1 = arith.constant 0 : i32
    return %c0_i32, %c0_i32_0 : i32, i32
  }
  func.func @transform_5(%arg0: i32) -> (i32, i32) {
    %c0_i32 = arith.constant 0 : i32
    %c0_i32_0 = arith.constant 0 : i32
    %c0_i32_1 = arith.constant 0 : i32
    return %c0_i32, %c0_i32_0 : i32, i32
  }
  func.func @transform_6(%arg0: i32) -> (i32, i32) {
    %c0_i32 = arith.constant 0 : i32
    %c0_i32_0 = arith.constant 0 : i32
    %c0_i32_1 = arith.constant 0 : i32
    return %c0_i32, %c0_i32_0 : i32, i32
  }
  func.func @transform_7(%arg0: i32) -> (i32, i32) {
    %c0_i32 = arith.constant 0 : i32
    %c0_i32_0 = arith.constant 0 : i32
    %c0_i32_1 = arith.constant 0 : i32
    return %c0_i32, %c0_i32_0 : i32, i32
  }
  func.func @transform_8(%arg0: i32) -> (i32, i32) {
    %c0_i32 = arith.constant 0 : i32
    %c0_i32_0 = arith.constant 0 : i32
    %c0_i32_1 = arith.constant 0 : i32
    return %c0_i32, %c0_i32_0 : i32, i32
  }
  func.func @transform_9(%arg0: i32) -> (i32, i32) {
    %c0_i32 = arith.constant 0 : i32
    %c0_i32_0 = arith.constant 0 : i32
    %c0_i32_1 = arith.constant 0 : i32
    return %c0_i32, %c0_i32_0 : i32, i32
  }
  func.func @transform_10(%arg0: i32) -> (i32, i32) {
    %c0_i32 = arith.constant 0 : i32
    %c0_i32_0 = arith.constant 0 : i32
    %c0_i32_1 = arith.constant 0 : i32
    return %c0_i32, %c0_i32_0 : i32, i32
  }
  func.func @transform_11(%arg0: i32) -> (i32, i32) {
    %c0_i32 = arith.constant 0 : i32
    %c0_i32_0 = arith.constant 0 : i32
    %c0_i32_1 = arith.constant 0 : i32
    return %c0_i32, %c0_i32_0 : i32, i32
  }
  func.func @transform_12(%arg0: i32) -> (i32, i32) {
    %c0_i32 = arith.constant 0 : i32
    %c0_i32_0 = arith.constant 0 : i32
    %c0_i32_1 = arith.constant 0 : i32
    return %c0_i32, %c0_i32_0 : i32, i32
  }
  func.func @transform_13(%arg0: i32) -> (i32, i32) {
    %c0_i32 = arith.constant 0 : i32
    %c0_i32_0 = arith.constant 0 : i32
    %c0_i32_1 = arith.constant 0 : i32
    return %c0_i32, %c0_i32_0 : i32, i32
  }
  func.func @transform_14(%arg0: i32) -> (i32, i32) {
    %c0_i32 = arith.constant 0 : i32
    %c0_i32_0 = arith.constant 0 : i32
    %c0_i32_1 = arith.constant 0 : i32
    return %c0_i32, %c0_i32_0 : i32, i32
  }
  func.func @transform_15(%arg0: i32) -> (i32, i32) {
    %c0_i32 = arith.constant 0 : i32
    %c0_i32_0 = arith.constant 0 : i32
    return %arg0, %c0_i32 : i32, i32
  }
}

module attributes {stable_mosaic.version = 11 : i64} {
  func.func @_stats2_kernel(%arg0: i32, %arg1: memref<128x32xbf16, #tpu.memory_space<vmem>>, %arg2: memref<32x64xbf16, #tpu.memory_space<vmem>>, %arg3: memref<1x64xf32, #tpu.memory_space<vmem>>, %arg4: memref<1x64xf32, #tpu.memory_space<vmem>>, %arg5: memref<1x64xf32, #tpu.memory_space<vmem>>, %arg6: memref<64x64xbf16, #tpu.memory_space<vmem>>, %arg7: memref<1x64xf32, #tpu.memory_space<vmem>>, %arg8: memref<1x64xf32, #tpu.memory_space<vmem>>, %arg9: memref<1x64xf32, #tpu.memory_space<vmem>>, %arg10: memref<1x64xf32, #tpu.memory_space<vmem>>, %arg11: memref<1x64xf32, #tpu.memory_space<vmem>>) attributes {dimension_semantics = [#tpu.dimension_semantics<arbitrary>], iteration_bounds = array<i64: 3>, scalar_prefetch = 0 : i64, scratch_operands = 0 : i64, tpu.core_type = #tpu.core_type<tc>, window_params = [{transform_indices = @transform_0, window_bounds = array<i64: 128, 32>}, {pipeline_mode = #tpu.pipeline_mode<synchronous>, transform_indices = @transform_1, window_bounds = array<i64: 32, 64>}, {pipeline_mode = #tpu.pipeline_mode<synchronous>, transform_indices = @transform_2, window_bounds = array<i64: 1, 64>}, {pipeline_mode = #tpu.pipeline_mode<synchronous>, transform_indices = @transform_3, window_bounds = array<i64: 1, 64>}, {pipeline_mode = #tpu.pipeline_mode<synchronous>, transform_indices = @transform_4, window_bounds = array<i64: 1, 64>}, {pipeline_mode = #tpu.pipeline_mode<synchronous>, transform_indices = @transform_5, window_bounds = array<i64: 64, 64>}, {pipeline_mode = #tpu.pipeline_mode<synchronous>, transform_indices = @transform_6, window_bounds = array<i64: 1, 64>}, {pipeline_mode = #tpu.pipeline_mode<synchronous>, transform_indices = @transform_7, window_bounds = array<i64: 1, 64>}, {pipeline_mode = #tpu.pipeline_mode<synchronous>, transform_indices = @transform_8, window_bounds = array<i64: 1, 64>}, {pipeline_mode = #tpu.pipeline_mode<synchronous>, transform_indices = @transform_9, window_bounds = array<i64: 1, 64>}, {pipeline_mode = #tpu.pipeline_mode<synchronous>, transform_indices = @transform_10, window_bounds = array<i64: 1, 64>}]} {
    %c0_i32 = arith.constant 0 : i32
    %0 = arith.cmpi eq, %arg0, %c0_i32 : i32
    %1 = arith.extui %0 : i1 to i32
    %c0_i32_0 = arith.constant 0 : i32
    %2 = arith.cmpi ne, %1, %c0_i32_0 : i32
    scf.if %2 {
      %cst_34 = arith.constant 0.000000e+00 : f32
      %60 = vector.broadcast %cst_34 : f32 to vector<1x64xf32>
      %c0_35 = arith.constant 0 : index
      %c0_36 = arith.constant 0 : index
      %61 = vector.load %arg10[%c0_35, %c0_36] : memref<1x64xf32, #tpu.memory_space<vmem>>, vector<1x64xf32>
      tpu.vector_store %arg10[%c0_35, %c0_36], %60 {strides = array<i32>} : memref<1x64xf32, #tpu.memory_space<vmem>>, vector<1x64xf32>,
      %cst_37 = arith.constant 0.000000e+00 : f32
      %62 = vector.broadcast %cst_37 : f32 to vector<1x64xf32>
      %c0_38 = arith.constant 0 : index
      %c0_39 = arith.constant 0 : index
      %63 = vector.load %arg11[%c0_38, %c0_39] : memref<1x64xf32, #tpu.memory_space<vmem>>, vector<1x64xf32>
      tpu.vector_store %arg11[%c0_38, %c0_39], %62 {strides = array<i32>} : memref<1x64xf32, #tpu.memory_space<vmem>>, vector<1x64xf32>,
    } else {
    }
    %c128_i32 = arith.constant 128 : i32
    %3 = arith.muli %arg0, %c128_i32 : i32
    %4 = tpu.iota {dimensions = array<i32: 0>} : vector<128x1xi32>
    %5 = vector.broadcast %3 : i32 to vector<128x1xi32>
    %6 = arith.addi %5, %4 : vector<128x1xi32>
    %c333_i32 = arith.constant 333 : i32
    %7 = vector.broadcast %c333_i32 : i32 to vector<128x1xi32>
    %8 = arith.cmpi slt, %6, %7 : vector<128x1xi32>
    %9 = arith.extui %8 : vector<128x1xi1> to vector<128x1xi32>
    %10 = arith.sitofp %9 : vector<128x1xi32> to vector<128x1xf32>
    %c0 = arith.constant 0 : index
    %c0_1 = arith.constant 0 : index
    %11 = vector.load %arg1[%c0, %c0_1] : memref<128x32xbf16, #tpu.memory_space<vmem>>, vector<128x32xbf16>
    %c0_2 = arith.constant 0 : index
    %c0_3 = arith.constant 0 : index
    %12 = vector.load %arg2[%c0_2, %c0_3] : memref<32x64xbf16, #tpu.memory_space<vmem>>, vector<32x64xbf16>
    %cst = arith.constant dense<0.000000e+00> : vector<128x64xf32>
    %13 = tpu.matmul %11, %12, %cst {dimension_numbers = #tpu.dot_dimension_numbers<[1], [0], [0], [1], [0, 0, 1, 1], [], []>} : vector<128x32xbf16>, vector<32x64xbf16>, vector<128x64xf32> -> vector<128x64xf32>
    %c0_4 = arith.constant 0 : index
    %c0_5 = arith.constant 0 : index
    %14 = vector.load %arg3[%c0_4, %c0_5] : memref<1x64xf32, #tpu.memory_space<vmem>>, vector<1x64xf32>
    %15 = vector.broadcast %14 : vector<1x64xf32> to vector<128x64xf32>
    %16 = arith.addf %13, %15 : vector<128x64xf32>
    %c0_6 = arith.constant 0 : index
    %c0_7 = arith.constant 0 : index
    %17 = vector.load %arg4[%c0_6, %c0_7] : memref<1x64xf32, #tpu.memory_space<vmem>>, vector<1x64xf32>
    %c0_8 = arith.constant 0 : index
    %c0_9 = arith.constant 0 : index
    %18 = vector.load %arg5[%c0_8, %c0_9] : memref<1x64xf32, #tpu.memory_space<vmem>>, vector<1x64xf32>
    %c0_10 = arith.constant 0 : index
    %c0_11 = arith.constant 0 : index
    %19 = vector.load %arg8[%c0_10, %c0_11] : memref<1x64xf32, #tpu.memory_space<vmem>>, vector<1x64xf32>
    %cst_12 = arith.constant 0.00300300308 : f32
    %20 = vector.broadcast %cst_12 : f32 to vector<1x64xf32>
    %21 = arith.mulf %19, %20 : vector<1x64xf32>
    %c0_13 = arith.constant 0 : index
    %c0_14 = arith.constant 0 : index
    %22 = vector.load %arg9[%c0_13, %c0_14] : memref<1x64xf32, #tpu.memory_space<vmem>>, vector<1x64xf32>
    %cst_15 = arith.constant 0.00300300308 : f32
    %23 = vector.broadcast %cst_15 : f32 to vector<1x64xf32>
    %24 = arith.mulf %22, %23 : vector<1x64xf32>
    %25 = arith.mulf %21, %21 : vector<1x64xf32>
    %26 = arith.subf %24, %25 : vector<1x64xf32>
    %cst_16 = arith.constant 0.000000e+00 : f32
    %27 = vector.broadcast %cst_16 : f32 to vector<1x64xf32>
    %28 = arith.maximumf %26, %27 : vector<1x64xf32>
    %cst_17 = arith.constant 9.99999974E-6 : f32
    %29 = vector.broadcast %cst_17 : f32 to vector<1x64xf32>
    %30 = arith.addf %28, %29 : vector<1x64xf32>
    %31 = math.rsqrt %30 : vector<1x64xf32>
    %32 = arith.mulf %17, %31 : vector<1x64xf32>
    %33 = arith.mulf %21, %32 : vector<1x64xf32>
    %34 = arith.subf %18, %33 : vector<1x64xf32>
    %35 = vector.broadcast %32 : vector<1x64xf32> to vector<128x64xf32>
    %36 = arith.mulf %16, %35 : vector<128x64xf32>
    %37 = vector.broadcast %34 : vector<1x64xf32> to vector<128x64xf32>
    %38 = arith.addf %36, %37 : vector<128x64xf32>
    %cst_18 = arith.constant 0.000000e+00 : f32
    %39 = vector.broadcast %cst_18 : f32 to vector<128x64xf32>
    %40 = arith.maximumf %38, %39 : vector<128x64xf32>
    %41 = arith.truncf %40 : vector<128x64xf32> to vector<128x64xbf16>
    %c0_19 = arith.constant 0 : index
    %c0_20 = arith.constant 0 : index
    %42 = vector.load %arg6[%c0_19, %c0_20] : memref<64x64xbf16, #tpu.memory_space<vmem>>, vector<64x64xbf16>
    %cst_21 = arith.constant dense<0.000000e+00> : vector<128x64xf32>
    %43 = tpu.matmul %41, %42, %cst_21 {dimension_numbers = #tpu.dot_dimension_numbers<[1], [0], [0], [1], [0, 0, 1, 1], [], []>} : vector<128x64xbf16>, vector<64x64xbf16>, vector<128x64xf32> -> vector<128x64xf32>
    %c0_22 = arith.constant 0 : index
    %c0_23 = arith.constant 0 : index
    %44 = vector.load %arg7[%c0_22, %c0_23] : memref<1x64xf32, #tpu.memory_space<vmem>>, vector<1x64xf32>
    %45 = vector.broadcast %44 : vector<1x64xf32> to vector<128x64xf32>
    %46 = arith.addf %43, %45 : vector<128x64xf32>
    %47 = vector.broadcast %10 : vector<128x1xf32> to vector<128x64xf32>
    %48 = arith.mulf %46, %47 : vector<128x64xf32>
    %c0_24 = arith.constant 0 : index
    %c0_25 = arith.constant 0 : index
    %49 = vector.load %arg10[%c0_24, %c0_25] : memref<1x64xf32, #tpu.memory_space<vmem>>, vector<1x64xf32>
    %cst_26 = arith.constant dense<0.000000e+00> : vector<64xf32>
    %50 = vector.multi_reduction <add>, %48, %cst_26 [0] : vector<128x64xf32> to vector<64xf32>
    %51 = vector.shape_cast %50 : vector<64xf32> to vector<1x64xf32>
    %52 = arith.addf %49, %51 : vector<1x64xf32>
    %c0_27 = arith.constant 0 : index
    %c0_28 = arith.constant 0 : index
    %53 = vector.load %arg10[%c0_27, %c0_28] : memref<1x64xf32, #tpu.memory_space<vmem>>, vector<1x64xf32>
    tpu.vector_store %arg10[%c0_27, %c0_28], %52 {strides = array<i32>} : memref<1x64xf32, #tpu.memory_space<vmem>>, vector<1x64xf32>,
    %c0_29 = arith.constant 0 : index
    %c0_30 = arith.constant 0 : index
    %54 = vector.load %arg11[%c0_29, %c0_30] : memref<1x64xf32, #tpu.memory_space<vmem>>, vector<1x64xf32>
    %55 = arith.mulf %48, %48 : vector<128x64xf32>
    %cst_31 = arith.constant dense<0.000000e+00> : vector<64xf32>
    %56 = vector.multi_reduction <add>, %55, %cst_31 [0] : vector<128x64xf32> to vector<64xf32>
    %57 = vector.shape_cast %56 : vector<64xf32> to vector<1x64xf32>
    %58 = arith.addf %54, %57 : vector<1x64xf32>
    %c0_32 = arith.constant 0 : index
    %c0_33 = arith.constant 0 : index
    %59 = vector.load %arg11[%c0_32, %c0_33] : memref<1x64xf32, #tpu.memory_space<vmem>>, vector<1x64xf32>
    tpu.vector_store %arg11[%c0_32, %c0_33], %58 {strides = array<i32>} : memref<1x64xf32, #tpu.memory_space<vmem>>, vector<1x64xf32>,
    return
  }
  func.func @transform_0(%arg0: i32) -> (i32, i32) {
    %c0_i32 = arith.constant 0 : i32
    %c0_i32_0 = arith.constant 0 : i32
    return %arg0, %c0_i32 : i32, i32
  }
  func.func @transform_1(%arg0: i32) -> (i32, i32) {
    %c0_i32 = arith.constant 0 : i32
    %c0_i32_0 = arith.constant 0 : i32
    %c0_i32_1 = arith.constant 0 : i32
    return %c0_i32, %c0_i32_0 : i32, i32
  }
  func.func @transform_2(%arg0: i32) -> (i32, i32) {
    %c0_i32 = arith.constant 0 : i32
    %c0_i32_0 = arith.constant 0 : i32
    %c0_i32_1 = arith.constant 0 : i32
    return %c0_i32, %c0_i32_0 : i32, i32
  }
  func.func @transform_3(%arg0: i32) -> (i32, i32) {
    %c0_i32 = arith.constant 0 : i32
    %c0_i32_0 = arith.constant 0 : i32
    %c0_i32_1 = arith.constant 0 : i32
    return %c0_i32, %c0_i32_0 : i32, i32
  }
  func.func @transform_4(%arg0: i32) -> (i32, i32) {
    %c0_i32 = arith.constant 0 : i32
    %c0_i32_0 = arith.constant 0 : i32
    %c0_i32_1 = arith.constant 0 : i32
    return %c0_i32, %c0_i32_0 : i32, i32
  }
  func.func @transform_5(%arg0: i32) -> (i32, i32) {
    %c0_i32 = arith.constant 0 : i32
    %c0_i32_0 = arith.constant 0 : i32
    %c0_i32_1 = arith.constant 0 : i32
    return %c0_i32, %c0_i32_0 : i32, i32
  }
  func.func @transform_6(%arg0: i32) -> (i32, i32) {
    %c0_i32 = arith.constant 0 : i32
    %c0_i32_0 = arith.constant 0 : i32
    %c0_i32_1 = arith.constant 0 : i32
    return %c0_i32, %c0_i32_0 : i32, i32
  }
  func.func @transform_7(%arg0: i32) -> (i32, i32) {
    %c0_i32 = arith.constant 0 : i32
    %c0_i32_0 = arith.constant 0 : i32
    %c0_i32_1 = arith.constant 0 : i32
    return %c0_i32, %c0_i32_0 : i32, i32
  }
  func.func @transform_8(%arg0: i32) -> (i32, i32) {
    %c0_i32 = arith.constant 0 : i32
    %c0_i32_0 = arith.constant 0 : i32
    %c0_i32_1 = arith.constant 0 : i32
    return %c0_i32, %c0_i32_0 : i32, i32
  }
  func.func @transform_9(%arg0: i32) -> (i32, i32) {
    %c0_i32 = arith.constant 0 : i32
    %c0_i32_0 = arith.constant 0 : i32
    %c0_i32_1 = arith.constant 0 : i32
    return %c0_i32, %c0_i32_0 : i32, i32
  }
  func.func @transform_10(%arg0: i32) -> (i32, i32) {
    %c0_i32 = arith.constant 0 : i32
    %c0_i32_0 = arith.constant 0 : i32
    %c0_i32_1 = arith.constant 0 : i32
    return %c0_i32, %c0_i32_0 : i32, i32
  }
}

</mosaic_0001>

<llo_original>
// kernel: simnet_forward.3
$region0: #{simnet_forward.3}
  #allocation0 [shape = 'u32[]', space=smem, size = 0x4, offset = 0x4, fixed_abs, tag = 'smem constant byte address 0x4 - core index']
  #allocation1 [shape = 'u32[144,128]{1,0:T(1,128)}', space=vmem, size = 0x12000, scoped, tag = 'internal scratch']
  %s0 = inlined_call_operand.vmem [shape: bf16[384,32], index: 0, kind: input, shape index: {}]
  %s1 = inlined_call_operand.vmem [shape: bf16[32,64], index: 1, kind: input, shape index: {}]
  %s2 = inlined_call_operand.vmem [shape: f32[1,64], index: 2, kind: input, shape index: {}]
  %s3 = inlined_call_operand.vmem [shape: f32[1,64], index: 3, kind: output, shape index: {0}]
  %s4 = inlined_call_operand.vmem [shape: f32[1,64], index: 4, kind: output, shape index: {1}]
  %5 = xla_tuple %s3, %s4
  %s6 = sld [smem:[#allocation0]]
  $region57: #{simnet_forward.3} parent=0
    _
  %s8 = ssub.s32 1, %s6
  %s9 = scalar_select 0, %s8, %s6
  loop: start=0, step=1, limit=5
  $region2: #{simnet_forward.3} parent=0 // loop_pre_header
    _
  $region3: #{simnet_forward.3} parent=0 // loop_header
    %s11 = sphi 0, %s15
    %p12 = scmp.ge.s32.totalorder %s11, 5
    %s21 = sphi 0, %s23
    %s24 = sphi 0, %s21
    %s25 = sphi 0, %s24
    %s41 = sphi 0, %s25
    %s45 = sphi 0, %s45
    %s47 = sphi 0, %s45
    %s48 = sphi 0, %s47
    %s62 = sphi 0, %s48
    %s66 = sphi 0, %s66
    %s68 = sphi 0, %s66
    %s69 = sphi 0, %s68
    %s83 = sphi 0, %s69
    %s87 = sphi 0, %s87
    %s89 = sphi 0, %s87
    %s90 = sphi 0, %s89
    %s104 = sphi 0, %s90
    %s108 = sphi 0, %s108
    %s110 = sphi 0, %s108
    %s111 = sphi 0, %s110
    %s125 = sphi 0, %s111
  $region4: #{simnet_forward.3} parent=0 // loop_header_branch
    %14 = sbr.rel (%p12) target = $region8
  $region5: #{simnet_forward.3} parent=0 // loop_body
    %s16 = ssub.s32 %s11, 1
    %s17 = ssub.s32 %s11, 2
    %s18 = sadd.s32 %s11, 1
    %s19 = ssub.s32 %s11, %s18
    %p20 = scmp.eq.s32.totalorder %s19, 0
    %s22 = sadd.s32 %s21, 1
    %s23 = scalar_select %p20, %s21, %s22
    %p26 = pneg %p20
    %p27 = scmp.eq.s32.totalorder %s11, 2
    %p28 = por %p26, %p27
    %p29 = scmp.ne.s32.totalorder %s21, %s24
    %p30 = scmp.eq.s32.totalorder %s11, 0
    %p31 = por %p29, %p30
    %p32 = scmp.ne.s32.totalorder %s21, %s24
    %p33 = scmp.eq.s32.totalorder %s16, 2
    %p34 = por %p32, %p33
    %p35 = scmp.ne.s32.totalorder %s24, %s25
    %p36 = scmp.eq.s32.totalorder %s16, 0
    %p37 = por %p35, %p36
    %p38 = scmp.ne.s32.totalorder %s24, %s25
    %p39 = scmp.eq.s32.totalorder %s17, 2
    %p40 = por %p38, %p39
    %p42 = scmp.ne.s32.totalorder %s25, %s41
    %p43 = scmp.eq.s32.totalorder %s17, 0
    %p44 = por %p42, %p43
    %s46 = sadd.s32 %s45, 1
    %p49 = scmp.eq.s32.totalorder %s11, 2
    %p50 = scmp.ne.s32.totalorder %s45, %s47
    %p51 = scmp.eq.s32.totalorder %s11, 0
    %p52 = por %p50, %p51
    %p53 = scmp.ne.s32.totalorder %s45, %s47
    %p54 = scmp.eq.s32.totalorder %s16, 2
    %p55 = por %p53, %p54
    %p56 = scmp.ne.s32.totalorder %s47, %s48
    %p57 = scmp.eq.s32.totalorder %s16, 0
    %p58 = por %p56, %p57
    %p59 = scmp.ne.s32.totalorder %s47, %s48
    %p60 = scmp.eq.s32.totalorder %s17, 2
    %p61 = por %p59, %p60
    %p63 = scmp.ne.s32.totalorder %s48, %s62
    %p64 = scmp.eq.s32.totalorder %s17, 0
    %p65 = por %p63, %p64
    %s67 = sadd.s32 %s66, 1
    %p70 = scmp.eq.s32.totalorder %s11, 2
    %p71 = scmp.ne.s32.totalorder %s66, %s68
    %p72 = scmp.eq.s32.totalorder %s11, 0
    %p73 = por %p71, %p72
    %p74 = scmp.ne.s32.totalorder %s66, %s68
    %p75 = scmp.eq.s32.totalorder %s16, 2
    %p76 = por %p74, %p75
    %p77 = scmp.ne.s32.totalorder %s68, %s69
    %p78 = scmp.eq.s32.totalorder %s16, 0
    %p79 = por %p77, %p78
    %p80 = scmp.ne.s32.totalorder %s68, %s69
    %p81 = scmp.eq.s32.totalorder %s17, 2
    %p82 = por %p80, %p81
    %p84 = scmp.ne.s32.totalorder %s69, %s83
    %p85 = scmp.eq.s32.totalorder %s17, 0
    %p86 = por %p84, %p85
    %s88 = sadd.s32 %s87, 1
    %p91 = scmp.eq.s32.totalorder %s11, 2
    %p92 = scmp.ne.s32.totalorder %s87, %s89
    %p93 = scmp.eq.s32.totalorder %s11, 0
    %p94 = por %p92, %p93
    %p95 = scmp.ne.s32.totalorder %s87, %s89
    %p96 = scmp.eq.s32.totalorder %s16, 2
    %p97 = por %p95, %p96
    %p98 = scmp.ne.s32.totalorder %s89, %s90
    %p99 = scmp.eq.s32.totalorder %s16, 0
    %p100 = por %p98, %p99
    %p101 = scmp.ne.s32.totalorder %s89, %s90
    %p102 = scmp.eq.s32.totalorder %s17, 2
    %p103 = por %p101, %p102
    %p105 = scmp.ne.s32.totalorder %s90, %s104
    %p106 = scmp.eq.s32.totalorder %s17, 0
    %p107 = por %p105, %p106
    %s109 = sadd.s32 %s108, 1
    %p112 = scmp.eq.s32.totalorder %s11, 2
    %p113 = scmp.ne.s32.totalorder %s108, %s110
    %p114 = scmp.eq.s32.totalorder %s11, 0
    %p115 = por %p113, %p114
    %p116 = scmp.ne.s32.totalorder %s108, %s110
    %p117 = scmp.eq.s32.totalorder %s16, 2
    %p118 = por %p116, %p117
    %p119 = scmp.ne.s32.totalorder %s110, %s111
    %p120 = scmp.eq.s32.totalorder %s16, 0
    %p121 = por %p119, %p120
    %p122 = scmp.ne.s32.totalorder %s110, %s111
    %p123 = scmp.eq.s32.totalorder %s17, 2
    %p124 = por %p122, %p123
    %p126 = scmp.ne.s32.totalorder %s111, %s125
    %p127 = scmp.eq.s32.totalorder %s17, 0
    %p128 = por %p126, %p127
    %p129 = scmp.le.s32.totalorder 1, %s11
    %p130 = scmp.lt.s32.totalorder %s11, 4
    %p131 = pnand %p129, %p130
    %p132 = pneg %p131
    // Predicated region
    $region9: #{simnet_forward.3} parent=5 // pred_check
      _
    $region10: #{simnet_forward.3} parent=5 // pred_check_branch
      %134 = sbr.rel (%p131) target = $region12
    $region11: #{simnet_forward.3} parent=5 // pred_region
      %s135 = ssub.s32 %s11, 1
      // Predicated region
      $region13: #{simnet_forward.3} parent=11 // pred_check
        %p136 = pneg %p58
      $region14: #{simnet_forward.3} parent=11 // pred_check_branch
        %138 = sbr.rel (%p136) target = $region16
      $region15: #{simnet_forward.3} parent=11 // pred_region
        _
      $region16: #{simnet_forward.3} parent=11 // pred_fallthru
        _
      // Predicated region
      $region17: #{simnet_forward.3} parent=11 // pred_check
        %p139 = pneg %p79
      $region18: #{simnet_forward.3} parent=11 // pred_check_branch
        %141 = sbr.rel (%p139) target = $region20
      $region19: #{simnet_forward.3} parent=11 // pred_region
        _
      $region20: #{simnet_forward.3} parent=11 // pred_fallthru
        _
    $region12: #{simnet_forward.3} parent=5 // pred_fallthru
      _
    %p142 = scmp.lt.s32.totalorder %s11, 3
    // Predicated region
    $region21: #{simnet_forward.3} parent=5 // pred_check
      %p143 = pneg %p142
    $region22: #{simnet_forward.3} parent=5 // pred_check_branch
      %145 = sbr.rel (%p143) target = $region24
    $region23: #{simnet_forward.3} parent=5 // pred_region
      // Predicated region
      $region25: #{simnet_forward.3} parent=23 // pred_check
        %p146 = pneg %p31
      $region26: #{simnet_forward.3} parent=23 // pred_check_branch
        %148 = sbr.rel (%p146) target = $region28
      $region27: #{simnet_forward.3} parent=23 // pred_region
        %s149 = smul.u32 16, %s11
        %p150 = scmp.lt.s32.totalorder %s149, 47
        %s151 = scalar_select %p150, %s149, 47
        %s152 = smul.addr %s151, 4
        %s153 = scalar_lea.vmem %s0, %s152
        %s154 = smul.u32 16, %s11
      $region28: #{simnet_forward.3} parent=23 // pred_fallthru
        _
    $region24: #{simnet_forward.3} parent=5 // pred_fallthru
      _
    %p155 = scmp.le.s32.totalorder 1, %s11
    %p156 = scmp.lt.s32.totalorder %s11, 4
    %p157 = pnand %p155, %p156
    %p158 = pneg %p157
    // Predicated region
    $region29: #{simnet_forward.3} parent=5 // pred_check
      _
    $region30: #{simnet_forward.3} parent=5 // pred_check_branch
      %160 = sbr.rel (%p157) target = $region32
    $region31: #{simnet_forward.3} parent=5 // pred_region
      %s161 = ssub.s32 %s11, 1
      %s162 = smul.u32 16, %s16
      %p163 = scmp.lt.s32.totalorder %s162, 47
      %s164 = scalar_select %p163, %s162, 47
      %s165 = smul.addr %s164, 4
      %s166 = scalar_lea.vmem %s0, %s165
      %p167 = pneg %p37
      %p168 = pneg %p34
      %p169 = pneg %p58
      %p170 = pneg %p55
      %p171 = pneg %p79
      %p172 = pneg %p76
      %p173 = pneg %p100
      %p174 = pneg %p97
      %p175 = pneg %p121
      %p176 = pneg %p118
      %s177 = smul.u32 16, %s16
      %p178 = scmp.lt.s32.totalorder %s177, 47
      %s179 = scalar_select %p178, %s177, 47
      %s180 = smul.addr %s179, 4
      %s181 = scalar_lea.vmem %s0, %s180
      %s182 = smul.u32 16, %s16
      %p184 = scmp.eq.s32.totalorder %s16, 0
      // Predicated region
      $region33: #{simnet_forward.3} parent=31 // pred_check
        %p185 = pneg %p184
      $region34: #{simnet_forward.3} parent=31 // pred_check_branch
        %187 = sbr.rel (%p185) target = $region36
      $region35: #{simnet_forward.3} parent=31 // pred_region
        %vm188 = vcmask 516096
        %189 = vst.msk [vmem:[%s3] sm:$0x1] %vm188, 0.0
        %190 = vst.msk [vmem:[%s4] sm:$0x1] %vm188, 0.0
      $region36: #{simnet_forward.3} parent=31 // pred_fallthru
        _
      %s191 = smul.u32 %s16, 128
      %v192 = vlaneseq
      %v193 = vshrl.u32 %v192, 7
      %v194 = vadd.s32 %v193, 8
      %v195 = vadd.s32 %v193, 16
      %v196 = vadd.s32 %v193, 24
      %v197 = vadd.s32 %v193, 32
      %v198 = vadd.s32 %v193, 40
      %v199 = vadd.s32 %v193, 48
      %v200 = vadd.s32 %v193, 56
      %v201 = vadd.s32 %v193, 64
      %v202 = vadd.s32 %v193, 72
      %v203 = vadd.s32 %v193, 80
      %v204 = vadd.s32 %v193, 88
      %v205 = vadd.s32 %v193, 96
      %v206 = vadd.s32 %v193, 104
      %v207 = vadd.s32 %v193, 112
      %v208 = vadd.s32 %v193, 120
      %v209 = vstv %s191
      %v210 = vadd.s32 %v209, %v193
      %v211 = vadd.s32 %v209, %v194
      %v212 = vadd.s32 %v209, %v195
      %v213 = vadd.s32 %v209, %v196
      %v214 = vadd.s32 %v209, %v197
      %v215 = vadd.s32 %v209, %v198
      %v216 = vadd.s32 %v209, %v199
      %v217 = vadd.s32 %v209, %v200
      %v218 = vadd.s32 %v209, %v201
      %v219 = vadd.s32 %v209, %v202
      %v220 = vadd.s32 %v209, %v203
      %v221 = vadd.s32 %v209, %v204
      %v222 = vadd.s32 %v209, %v205
      %v223 = vadd.s32 %v209, %v206
      %v224 = vadd.s32 %v209, %v207
      %v225 = vadd.s32 %v209, %v208
      %vm226 = vcmp.lt.s32.totalorder %v210, 333
      %vm227 = vcmp.lt.s32.totalorder %v211, 333
      %vm228 = vcmp.lt.s32.totalorder %v212, 333
      %vm229 = vcmp.lt.s32.totalorder %v213, 333
      %vm230 = vcmp.lt.s32.totalorder %v214, 333
      %vm231 = vcmp.lt.s32.totalorder %v215, 333
      %vm232 = vcmp.lt.s32.totalorder %v216, 333
      %vm233 = vcmp.lt.s32.totalorder %v217, 333
      %vm234 = vcmp.lt.s32.totalorder %v218, 333
      %vm235 = vcmp.lt.s32.totalorder %v219, 333
      %vm236 = vcmp.lt.s32.totalorder %v220, 333
      %vm237 = vcmp.lt.s32.totalorder %v221, 333
      %vm238 = vcmp.lt.s32.totalorder %v222, 333
      %vm239 = vcmp.lt.s32.totalorder %v223, 333
      %vm240 = vcmp.lt.s32.totalorder %v224, 333
      %vm241 = vcmp.lt.s32.totalorder %v225, 333
      %v242 = vsel %vm226, 1, 0
      %v243 = vsel %vm227, 1, 0
      %v244 = vsel %vm228, 1, 0
      %v245 = vsel %vm229, 1, 0
      %v246 = vsel %vm230, 1, 0
      %v247 = vsel %vm231, 1, 0
      %v248 = vsel %vm232, 1, 0
      %v249 = vsel %vm233, 1, 0
      %v250 = vsel %vm234, 1, 0
      %v251 = vsel %vm235, 1, 0
      %v252 = vsel %vm236, 1, 0
      %v253 = vsel %vm237, 1, 0
      %v254 = vsel %vm238, 1, 0
      %v255 = vsel %vm239, 1, 0
      %v256 = vsel %vm240, 1, 0
      %v257 = vsel %vm241, 1, 0
      %v258 = vcvt.s32.f32 %v242
      %v259 = vcvt.s32.f32 %v243
      %v260 = vcvt.s32.f32 %v244
      %v261 = vcvt.s32.f32 %v245
      %v262 = vcvt.s32.f32 %v246
      %v263 = vcvt.s32.f32 %v247
      %v264 = vcvt.s32.f32 %v248
      %v265 = vcvt.s32.f32 %v249
      %v266 = vcvt.s32.f32 %v250
      %v267 = vcvt.s32.f32 %v251
      %v268 = vcvt.s32.f32 %v252
      %v269 = vcvt.s32.f32 %v253
      %v270 = vcvt.s32.f32 %v254
      %v271 = vcvt.s32.f32 %v255
      %v272 = vcvt.s32.f32 %v256
      %v273 = vcvt.s32.f32 %v257
      %v274 = vld [vmem:[%s181] sm:$0xf]
      %v275 = vld [vmem:[%s181 + $0x4] sm:$0xf]
      %v276 = vld [vmem:[%s181 + $0x8] sm:$0xf]
      %v277 = vld [vmem:[%s181 + $0xc] sm:$0xf]
      %v278 = vld [vmem:[%s181 + $0x10] sm:$0xf]
      %v279 = vld [vmem:[%s181 + $0x14] sm:$0xf]
      %v280 = vld [vmem:[%s181 + $0x18] sm:$0xf]
      %v281 = vld [vmem:[%s181 + $0x1c] sm:$0xf]
      %v282 = vld [vmem:[%s181 + $0x20] sm:$0xf]
      %v283 = vld [vmem:[%s181 + $0x24] sm:$0xf]
      %v284 = vld [vmem:[%s181 + $0x28] sm:$0xf]
      %v285 = vld [vmem:[%s181 + $0x2c] sm:$0xf]
      %v286 = vld [vmem:[%s181 + $0x30] sm:$0xf]
      %v287 = vld [vmem:[%s181 + $0x34] sm:$0xf]
      %v288 = vld [vmem:[%s181 + $0x38] sm:$0xf]
      %v289 = vld [vmem:[%s181 + $0x3c] sm:$0xf]
      %v290 = vld [vmem:[%s1] sm:$0xf]
      %v291 = vld [vmem:[%s1 + $0x4] sm:$0xf]
      %v292 = vld [vmem:[%s1 + $0x8] sm:$0xf]
      %v293 = vld [vmem:[%s1 + $0xc] sm:$0xf]
      %v294 = vld [vmem:[%s2] sm:$0x1]
      %v296 = vlaneseq
      %v297 = vshrl.u32 %v296, 7
      %v298 = vsub.s32 0, %v297
      %v299 = vrot.slane %v294, %v298
      %v317 = vunpack.c.l.b16 %v274
      %v318 = vunpack.c.l.b16 %v275
      %v319 = vunpack.c.l.b16 %v276
      %v320 = vunpack.c.l.b16 %v277
      %v321 = vunpack.c.l.b16 %v278
      %v322 = vunpack.c.l.b16 %v279
      %v323 = vunpack.c.l.b16 %v280
      %v324 = vunpack.c.l.b16 %v281
      %v325 = vunpack.c.l.b16 %v282
      %v326 = vunpack.c.l.b16 %v283
      %v327 = vunpack.c.l.b16 %v284
      %v328 = vunpack.c.l.b16 %v285
      %v329 = vunpack.c.l.b16 %v286
      %v330 = vunpack.c.l.b16 %v287
      %v331 = vunpack.c.l.b16 %v288
      %v332 = vunpack.c.l.b16 %v289
      %v333 = vpack.c.b16 %v318, %v317
      %v334 = vpack.c.b16 %v320, %v319
      %v335 = vpack.c.b16 %v322, %v321
      %v336 = vpack.c.b16 %v324, %v323
      %v337 = vpack.c.b16 %v326, %v325
      %v338 = vpack.c.b16 %v328, %v327
      %v339 = vpack.c.b16 %v330, %v329
      %v340 = vpack.c.b16 %v332, %v331
      %v345 = vunpack.c.l.b16 %v290
      %v346 = vunpack.c.l.b16 %v291
      %v347 = vunpack.c.l.b16 %v292
      %v348 = vunpack.c.l.b16 %v293
      %v349 = vpack.c.b16 %v346, %v345
      %v350 = vpack.c.b16 %v348, %v347
      %vm353 = vcmask 261120
      %v355 = vsel %vm353, %v333, 0
      %v358 = vsel %vm353, %v334, 0
      %v361 = vsel %vm353, %v335, 0
      %v364 = vsel %vm353, %v336, 0
      %v367 = vsel %vm353, %v337, 0
      %v370 = vsel %vm353, %v338, 0
      %v373 = vsel %vm353, %v339, 0
      %v376 = vsel %vm353, %v340, 0
      %378 = vmatprep.subr.bf16.mxu0 0
      %379 = vmatpush1.bf16.msra.mxu0 %v349
      %380 = vmatprep.subr.bf16.mxu0 0
      %381 = vmatpush1.bf16.msra.mxu0 %v350
      %382 = vmatprep.subr.bf16.mxu0 0
      %383 = vmatpush1.bf16.msra.mxu0 0
      %384 = vmatprep.subr.bf16.mxu0 0
      %385 = vmatpush1.bf16.msra.mxu0 0
      %386 = vmatprep.subr.bf16.mxu0 0
      %387 = vmatpush1.bf16.msra.mxu0 0
      %388 = vmatprep.subr.bf16.mxu0 0
      %389 = vmatpush1.bf16.msra.mxu0 0
      %390 = vmatprep.subr.bf16.mxu0 0
      %391 = vmatpush1.bf16.msra.mxu0 0
      %392 = vmatprep.subr.bf16.mxu0 0
      %393 = vmatpush1.bf16.msra.mxu0 0
      %394 = vmatprep.subr.bf16.mxu0 0
      %395 = vmatpush1.bf16.msra.mxu0 0
      %396 = vmatprep.subr.bf16.mxu0 0
      %397 = vmatpush1.bf16.msra.mxu0 0
      %398 = vmatprep.subr.bf16.mxu0 0
      %399 = vmatpush1.bf16.msra.mxu0 0
      %400 = vmatprep.subr.bf16.mxu0 0
      %401 = vmatpush1.bf16.msra.mxu0 0
      %402 = vmatprep.subr.bf16.mxu0 0
      %403 = vmatpush1.bf16.msra.mxu0 0
      %404 = vmatprep.subr.bf16.mxu0 0
      %405 = vmatpush1.bf16.msra.mxu0 0
      %406 = vmatprep.subr.bf16.mxu0 0
      %407 = vmatpush1.bf16.msra.mxu0 0
      %408 = vmatprep.subr.bf16.mxu0 0
      %409 = vmatpush1.bf16.msra.mxu0 0
      %410 = vmatprep.mubr.bf16.mxu0 0
      %411 = vmatmul.mubr.bf16.gmra.mrb[0].mxu0 %v355
      %v412 = vpop.f32.mrb[0].mxu0
      %v413 = vadd.f32 %v299, %v412
      %v414 = vpop.f32.mrb[0].mxu0
      %v415 = vpop.f32.mrb[0].mxu0
      %v416 = vadd.f32 %v299, %v415
      %v417 = vpop.f32.mrb[0].mxu0
      %418 = vmatprep.mubr.bf16.mxu0 0
      %419 = vmatmul.mubr.bf16.gmra.mrb[0].mxu0 %v358
      %v420 = vpop.f32.mrb[0].mxu0
      %v421 = vadd.f32 %v299, %v420
      %v422 = vpop.f32.mrb[0].mxu0
      %v423 = vpop.f32.mrb[0].mxu0
      %v424 = vadd.f32 %v299, %v423
      %v425 = vpop.f32.mrb[0].mxu0
      %426 = vmatprep.mubr.bf16.mxu0 0
      %427 = vmatmul.mubr.bf16.gmra.mrb[0].mxu0 %v361
      %v428 = vpop.f32.mrb[0].mxu0
      %v429 = vadd.f32 %v299, %v428
      %v430 = vpop.f32.mrb[0].mxu0
      %v431 = vpop.f32.mrb[0].mxu0
      %v432 = vadd.f32 %v299, %v431
      %v433 = vpop.f32.mrb[0].mxu0
      %434 = vmatprep.mubr.bf16.mxu0 0
      %435 = vmatmul.mubr.bf16.gmra.mrb[0].mxu0 %v364
      %v436 = vpop.f32.mrb[0].mxu0
      %v437 = vadd.f32 %v299, %v436
      %v438 = vpop.f32.mrb[0].mxu0
      %v439 = vpop.f32.mrb[0].mxu0
      %v440 = vadd.f32 %v299, %v439
      %v441 = vpop.f32.mrb[0].mxu0
      %442 = vmatprep.mubr.bf16.mxu0 0
      %443 = vmatmul.mubr.bf16.gmra.mrb[0].mxu0 %v367
      %v444 = vpop.f32.mrb[0].mxu0
      %v445 = vadd.f32 %v299, %v444
      %v446 = vpop.f32.mrb[0].mxu0
      %v447 = vpop.f32.mrb[0].mxu0
      %v448 = vadd.f32 %v299, %v447
      %v449 = vpop.f32.mrb[0].mxu0
      %450 = vmatprep.mubr.bf16.mxu0 0
      %451 = vmatmul.mubr.bf16.gmra.mrb[0].mxu0 %v370
      %v452 = vpop.f32.mrb[0].mxu0
      %v453 = vadd.f32 %v299, %v452
      %v454 = vpop.f32.mrb[0].mxu0
      %v455 = vpop.f32.mrb[0].mxu0
      %v456 = vadd.f32 %v299, %v455
      %v457 = vpop.f32.mrb[0].mxu0
      %458 = vmatprep.mubr.bf16.mxu0 0
      %459 = vmatmul.mubr.bf16.gmra.mrb[0].mxu0 %v373
      %v460 = vpop.f32.mrb[0].mxu0
      %v461 = vadd.f32 %v299, %v460
      %v462 = vpop.f32.mrb[0].mxu0
      %v463 = vpop.f32.mrb[0].mxu0
      %v464 = vadd.f32 %v299, %v463
      %v465 = vpop.f32.mrb[0].mxu0
      %466 = vmatprep.mubr.bf16.mxu0 0
      %467 = vmatmul.mubr.bf16.gmra.mrb[0].mxu0 %v376
      %v468 = vpop.f32.mrb[0].mxu0
      %v469 = vadd.f32 %v299, %v468
      %v470 = vpop.f32.mrb[0].mxu0
      %v471 = vpop.f32.mrb[0].mxu0
      %v472 = vadd.f32 %v299, %v471
      %v473 = vpop.f32.mrb[0].mxu0
      %474 = vdwg.mxu0
      %v475 = vmul.f32 %v413, %v258
      %v476 = vmul.f32 %v416, %v259
      %v477 = vmul.f32 %v421, %v260
      %v478 = vmul.f32 %v424, %v261
      %v479 = vmul.f32 %v429, %v262
      %v480 = vmul.f32 %v432, %v263
      %v481 = vmul.f32 %v437, %v264
      %v482 = vmul.f32 %v440, %v265
      %v483 = vmul.f32 %v445, %v266
      %v484 = vmul.f32 %v448, %v267
      %v485 = vmul.f32 %v453, %v268
      %v486 = vmul.f32 %v456, %v269
      %v487 = vmul.f32 %v461, %v270
      %v488 = vmul.f32 %v464, %v271
      %v489 = vmul.f32 %v469, %v272
      %v490 = vmul.f32 %v472, %v273
      %v491 = vld [vmem:[%s3] sm:$0x1]
      %vm492 = vcmask 523264
      %v493 = vsel %vm492, %v475, 0.0
      %v494 = vsel %vm492, %v476, 0.0
      %v495 = vadd.f32 %v493, %v494
      %v496 = vsel %vm492, %v477, 0.0
      %v497 = vadd.f32 %v495, %v496
      %v498 = vsel %vm492, %v478, 0.0
      %v499 = vadd.f32 %v497, %v498
      %v500 = vsel %vm492, %v479, 0.0
      %v501 = vadd.f32 %v499, %v500
      %v502 = vsel %vm492, %v480, 0.0
      %v503 = vadd.f32 %v501, %v502
      %v504 = vsel %vm492, %v481, 0.0
      %v505 = vadd.f32 %v503, %v504
      %v506 = vsel %vm492, %v482, 0.0
      %v507 = vadd.f32 %v505, %v506
      %v508 = vsel %vm492, %v483, 0.0
      %v509 = vadd.f32 %v507, %v508
      %v510 = vsel %vm492, %v484, 0.0
      %v511 = vadd.f32 %v509, %v510
      %v512 = vsel %vm492, %v485, 0.0
      %v513 = vadd.f32 %v511, %v512
      %v514 = vsel %vm492, %v486, 0.0
      %v515 = vadd.f32 %v513, %v514
      %v516 = vsel %vm492, %v487, 0.0
      %v517 = vadd.f32 %v515, %v516
      %v518 = vsel %vm492, %v488, 0.0
      %v519 = vadd.f32 %v517, %v518
      %v520 = vsel %vm492, %v489, 0.0
      %v521 = vadd.f32 %v519, %v520
      %v522 = vsel %vm492, %v490, 0.0
      %v523 = vadd.f32 %v521, %v522
      %v524 = vrot.slane %v523, 4
      %v525 = vadd.f32 %v523, %v524
      %v526 = vrot.slane %v525, 2
      %v527 = vadd.f32 %v525, %v526
      %v528 = vrot.slane %v527, 1
      %v529 = vadd.f32 %v527, %v528
      %v530 = vadd.f32 %v491, %v529
      %vm531 = vcmask 516096
      %532 = vst.msk [vmem:[%s3] sm:$0x1] %vm531, %v530
      %v533 = vld [vmem:[%s4] sm:$0x1]
      %v534 = vmul.f32 %v475, %v475
      %v535 = vmul.f32 %v476, %v476
      %v536 = vmul.f32 %v477, %v477
      %v537 = vmul.f32 %v478, %v478
      %v538 = vmul.f32 %v479, %v479
      %v539 = vmul.f32 %v480, %v480
      %v540 = vmul.f32 %v481, %v481
      %v541 = vmul.f32 %v482, %v482
      %v542 = vmul.f32 %v483, %v483
      %v543 = vmul.f32 %v484, %v484
      %v544 = vmul.f32 %v485, %v485
      %v545 = vmul.f32 %v486, %v486
      %v546 = vmul.f32 %v487, %v487
      %v547 = vmul.f32 %v488, %v488
      %v548 = vmul.f32 %v489, %v489
      %v549 = vmul.f32 %v490, %v490
      %v550 = vsel %vm492, %v534, 0.0
      %v551 = vsel %vm492, %v535, 0.0
      %v552 = vadd.f32 %v550, %v551
      %v553 = vsel %vm492, %v536, 0.0
      %v554 = vadd.f32 %v552, %v553
      %v555 = vsel %vm492, %v537, 0.0
      %v556 = vadd.f32 %v554, %v555
      %v557 = vsel %vm492, %v538, 0.0
      %v558 = vadd.f32 %v556, %v557
      %v559 = vsel %vm492, %v539, 0.0
      %v560 = vadd.f32 %v558, %v559
      %v561 = vsel %vm492, %v540, 0.0
      %v562 = vadd.f32 %v560, %v561
      %v563 = vsel %vm492, %v541, 0.0
      %v564 = vadd.f32 %v562, %v563
      %v565 = vsel %vm492, %v542, 0.0
      %v566 = vadd.f32 %v564, %v565
      %v567 = vsel %vm492, %v543, 0.0
      %v568 = vadd.f32 %v566, %v567
      %v569 = vsel %vm492, %v544, 0.0
      %v570 = vadd.f32 %v568, %v569
      %v571 = vsel %vm492, %v545, 0.0
      %v572 = vadd.f32 %v570, %v571
      %v573 = vsel %vm492, %v546, 0.0
      %v574 = vadd.f32 %v572, %v573
      %v575 = vsel %vm492, %v547, 0.0
      %v576 = vadd.f32 %v574, %v575
      %v577 = vsel %vm492, %v548, 0.0
      %v578 = vadd.f32 %v576, %v577
      %v579 = vsel %vm492, %v549, 0.0
      %v580 = vadd.f32 %v578, %v579
      %v581 = vrot.slane %v580, 4
      %v582 = vadd.f32 %v580, %v581
      %v583 = vrot.slane %v582, 2
      %v584 = vadd.f32 %v582, %v583
      %v585 = vrot.slane %v584, 1
      %v586 = vadd.f32 %v584, %v585
      %v587 = vadd.f32 %v533, %v586
      %588 = vst.msk [vmem:[%s4] sm:$0x1] %vm531, %v587
      // Predicated region
      $region37: #{simnet_forward.3} parent=31 // pred_check
        %p589 = pneg %p97
      $region38: #{simnet_forward.3} parent=31 // pred_check_branch
        %591 = sbr.rel (%p589) target = $region40
      $region39: #{simnet_forward.3} parent=31 // pred_region
        _
      $region40: #{simnet_forward.3} parent=31 // pred_fallthru
        _
      // Predicated region
      $region41: #{simnet_forward.3} parent=31 // pred_check
        %p592 = pneg %p118
      $region42: #{simnet_forward.3} parent=31 // pred_check_branch
        %594 = sbr.rel (%p592) target = $region44
      $region43: #{simnet_forward.3} parent=31 // pred_region
        _
      $region44: #{simnet_forward.3} parent=31 // pred_fallthru
        _
      // Predicated region
      $region45: #{simnet_forward.3} parent=31 // pred_check
        %p595 = pneg %p97
      $region46: #{simnet_forward.3} parent=31 // pred_check_branch
        %597 = sbr.rel (%p595) target = $region48
      $region47: #{simnet_forward.3} parent=31 // pred_region
        _
      $region48: #{simnet_forward.3} parent=31 // pred_fallthru
        _
      // Predicated region
      $region49: #{simnet_forward.3} parent=31 // pred_check
        %p598 = pneg %p118
      $region50: #{simnet_forward.3} parent=31 // pred_check_branch
        %600 = sbr.rel (%p598) target = $region52
      $region51: #{simnet_forward.3} parent=31 // pred_region
        _
      $region52: #{simnet_forward.3} parent=31 // pred_fallthru
        _
    $region32: #{simnet_forward.3} parent=5 // pred_fallthru
      _
    %p601 = scmp.le.s32.totalorder 2, %s11
    // Predicated region
    $region53: #{simnet_forward.3} parent=5 // pred_check
      %p602 = pneg %p601
    $region54: #{simnet_forward.3} parent=5 // pred_check_branch
      %604 = sbr.rel (%p602) target = $region56
    $region55: #{simnet_forward.3} parent=5 // pred_region
      %s605 = ssub.s32 %s11, 2
    $region56: #{simnet_forward.3} parent=5 // pred_fallthru
      _
  $region6: #{simnet_forward.3} parent=0 // loop_footer
    %s15 = sadd.s32 1, %s11
  $region7: #{simnet_forward.3} parent=0 // loop_footer_branch
    %10 = sbr.rel target = $region3
  $region8: #{simnet_forward.3} parent=0 // loop_exit
    _

// kernel: simnet_forward.4
$region0: #{simnet_forward.4}
  #allocation0 [shape = 'u32[]', space=smem, size = 0x4, offset = 0x4, fixed_abs, tag = 'smem constant byte address 0x4 - core index']
  #allocation1 [shape = 'u32[144,128]{1,0:T(1,128)}', space=vmem, size = 0x12000, scoped, tag = 'internal scratch']
  %s0 = inlined_call_operand.vmem [shape: bf16[384,32], index: 0, kind: input, shape index: {}]
  %s1 = inlined_call_operand.vmem [shape: bf16[32,64], index: 1, kind: input, shape index: {}]
  %s2 = inlined_call_operand.vmem [shape: f32[1,64], index: 2, kind: input, shape index: {}]
  %s3 = inlined_call_operand.vmem [shape: f32[1,64], index: 3, kind: input, shape index: {}]
  %s4 = inlined_call_operand.vmem [shape: f32[1,64], index: 4, kind: input, shape index: {}]
  %s5 = inlined_call_operand.vmem [shape: bf16[64,64], index: 5, kind: input, shape index: {}]
  %s6 = inlined_call_operand.vmem [shape: f32[1,64], index: 6, kind: input, shape index: {}]
  %s7 = inlined_call_operand.vmem [shape: f32[1,64], index: 7, kind: input, shape index: {}]
  %s8 = inlined_call_operand.vmem [shape: f32[1,64], index: 8, kind: input, shape index: {}]
  %s9 = inlined_call_operand.vmem [shape: f32[1,64], index: 9, kind: output, shape index: {0}]
  %s10 = inlined_call_operand.vmem [shape: f32[1,64], index: 10, kind: output, shape index: {1}]
  %11 = xla_tuple %s9, %s10
  %s12 = sld [smem:[#allocation0]]
  $region81: #{simnet_forward.4} parent=0
    _
  %s14 = ssub.s32 1, %s12
  %s15 = scalar_select 0, %s14, %s12
  loop: start=0, step=1, limit=5
  $region2: #{simnet_forward.4} parent=0 // loop_pre_header
    _
  $region3: #{simnet_forward.4} parent=0 // loop_header
    %s17 = sphi 0, %s21
    %p18 = scmp.ge.s32.totalorder %s17, 5
    %s27 = sphi 0, %s29
    %s30 = sphi 0, %s27
    %s31 = sphi 0, %s30
    %s47 = sphi 0, %s31
    %s51 = sphi 0, %s51
    %s53 = sphi 0, %s51
    %s54 = sphi 0, %s53
    %s68 = sphi 0, %s54
    %s72 = sphi 0, %s72
    %s74 = sphi 0, %s72
    %s75 = sphi 0, %s74
    %s89 = sphi 0, %s75
    %s93 = sphi 0, %s93
    %s95 = sphi 0, %s93
    %s96 = sphi 0, %s95
    %s110 = sphi 0, %s96
    %s114 = sphi 0, %s114
    %s116 = sphi 0, %s114
    %s117 = sphi 0, %s116
    %s131 = sphi 0, %s117
    %s135 = sphi 0, %s135
    %s137 = sphi 0, %s135
    %s138 = sphi 0, %s137
    %s152 = sphi 0, %s138
    %s156 = sphi 0, %s156
    %s158 = sphi 0, %s156
    %s159 = sphi 0, %s158
    %s173 = sphi 0, %s159
    %s177 = sphi 0, %s177
    %s179 = sphi 0, %s177
    %s180 = sphi 0, %s179
    %s194 = sphi 0, %s180
    %s198 = sphi 0, %s198
    %s200 = sphi 0, %s198
    %s201 = sphi 0, %s200
    %s215 = sphi 0, %s201
    %s219 = sphi 0, %s219
    %s221 = sphi 0, %s219
    %s222 = sphi 0, %s221
    %s236 = sphi 0, %s222
    %s240 = sphi 0, %s240
    %s242 = sphi 0, %s240
    %s243 = sphi 0, %s242
    %s257 = sphi 0, %s243
  $region4: #{simnet_forward.4} parent=0 // loop_header_branch
    %20 = sbr.rel (%p18) target = $region8
  $region5: #{simnet_forward.4} parent=0 // loop_body
    %s22 = ssub.s32 %s17, 1
    %s23 = ssub.s32 %s17, 2
    %s24 = sadd.s32 %s17, 1
    %s25 = ssub.s32 %s17, %s24
    %p26 = scmp.eq.s32.totalorder %s25, 0
    %s28 = sadd.s32 %s27, 1
    %s29 = scalar_select %p26, %s27, %s28
    %p32 = pneg %p26
    %p33 = scmp.eq.s32.totalorder %s17, 2
    %p34 = por %p32, %p33
    %p35 = scmp.ne.s32.totalorder %s27, %s30
    %p36 = scmp.eq.s32.totalorder %s17, 0
    %p37 = por %p35, %p36
    %p38 = scmp.ne.s32.totalorder %s27, %s30
    %p39 = scmp.eq.s32.totalorder %s22, 2
    %p40 = por %p38, %p39
    %p41 = scmp.ne.s32.totalorder %s30, %s31
    %p42 = scmp.eq.s32.totalorder %s22, 0
    %p43 = por %p41, %p42
    %p44 = scmp.ne.s32.totalorder %s30, %s31
    %p45 = scmp.eq.s32.totalorder %s23, 2
    %p46 = por %p44, %p45
    %p48 = scmp.ne.s32.totalorder %s31, %s47
    %p49 = scmp.eq.s32.totalorder %s23, 0
    %p50 = por %p48, %p49
    %s52 = sadd.s32 %s51, 1
    %p55 = scmp.eq.s32.totalorder %s17, 2
    %p56 = scmp.ne.s32.totalorder %s51, %s53
    %p57 = scmp.eq.s32.totalorder %s17, 0
    %p58 = por %p56, %p57
    %p59 = scmp.ne.s32.totalorder %s51, %s53
    %p60 = scmp.eq.s32.totalorder %s22, 2
    %p61 = por %p59, %p60
    %p62 = scmp.ne.s32.totalorder %s53, %s54
    %p63 = scmp.eq.s32.totalorder %s22, 0
    %p64 = por %p62, %p63
    %p65 = scmp.ne.s32.totalorder %s53, %s54
    %p66 = scmp.eq.s32.totalorder %s23, 2
    %p67 = por %p65, %p66
    %p69 = scmp.ne.s32.totalorder %s54, %s68
    %p70 = scmp.eq.s32.totalorder %s23, 0
    %p71 = por %p69, %p70
    %s73 = sadd.s32 %s72, 1
    %p76 = scmp.eq.s32.totalorder %s17, 2
    %p77 = scmp.ne.s32.totalorder %s72, %s74
    %p78 = scmp.eq.s32.totalorder %s17, 0
    %p79 = por %p77, %p78
    %p80 = scmp.ne.s32.totalorder %s72, %s74
    %p81 = scmp.eq.s32.totalorder %s22, 2
    %p82 = por %p80, %p81
    %p83 = scmp.ne.s32.totalorder %s74, %s75
    %p84 = scmp.eq.s32.totalorder %s22, 0
    %p85 = por %p83, %p84
    %p86 = scmp.ne.s32.totalorder %s74, %s75
    %p87 = scmp.eq.s32.totalorder %s23, 2
    %p88 = por %p86, %p87
    %p90 = scmp.ne.s32.totalorder %s75, %s89
    %p91 = scmp.eq.s32.totalorder %s23, 0
    %p92 = por %p90, %p91
    %s94 = sadd.s32 %s93, 1
    %p97 = scmp.eq.s32.totalorder %s17, 2
    %p98 = scmp.ne.s32.totalorder %s93, %s95
    %p99 = scmp.eq.s32.totalorder %s17, 0
    %p100 = por %p98, %p99
    %p101 = scmp.ne.s32.totalorder %s93, %s95
    %p102 = scmp.eq.s32.totalorder %s22, 2
    %p103 = por %p101, %p102
    %p104 = scmp.ne.s32.totalorder %s95, %s96
    %p105 = scmp.eq.s32.totalorder %s22, 0
    %p106 = por %p104, %p105
    %p107 = scmp.ne.s32.totalorder %s95, %s96
    %p108 = scmp.eq.s32.totalorder %s23, 2
    %p109 = por %p107, %p108
    %p111 = scmp.ne.s32.totalorder %s96, %s110
    %p112 = scmp.eq.s32.totalorder %s23, 0
    %p113 = por %p111, %p112
    %s115 = sadd.s32 %s114, 1
    %p118 = scmp.eq.s32.totalorder %s17, 2
    %p119 = scmp.ne.s32.totalorder %s114, %s116
    %p120 = scmp.eq.s32.totalorder %s17, 0
    %p121 = por %p119, %p120
    %p122 = scmp.ne.s32.totalorder %s114, %s116
    %p123 = scmp.eq.s32.totalorder %s22, 2
    %p124 = por %p122, %p123
    %p125 = scmp.ne.s32.totalorder %s116, %s117
    %p126 = scmp.eq.s32.totalorder %s22, 0
    %p127 = por %p125, %p126
    %p128 = scmp.ne.s32.totalorder %s116, %s117
    %p129 = scmp.eq.s32.totalorder %s23, 2
    %p130 = por %p128, %p129
    %p132 = scmp.ne.s32.totalorder %s117, %s131
    %p133 = scmp.eq.s32.totalorder %s23, 0
    %p134 = por %p132, %p133
    %s136 = sadd.s32 %s135, 1
    %p139 = scmp.eq.s32.totalorder %s17, 2
    %p140 = scmp.ne.s32.totalorder %s135, %s137
    %p141 = scmp.eq.s32.totalorder %s17, 0
    %p142 = por %p140, %p141
    %p143 = scmp.ne.s32.totalorder %s135, %s137
    %p144 = scmp.eq.s32.totalorder %s22, 2
    %p145 = por %p143, %p144
    %p146 = scmp.ne.s32.totalorder %s137, %s138
    %p147 = scmp.eq.s32.totalorder %s22, 0
    %p148 = por %p146, %p147
    %p149 = scmp.ne.s32.totalorder %s137, %s138
    %p150 = scmp.eq.s32.totalorder %s23, 2
    %p151 = por %p149, %p150
    %p153 = scmp.ne.s32.totalorder %s138, %s152
    %p154 = scmp.eq.s32.totalorder %s23, 0
    %p155 = por %p153, %p154
    %s157 = sadd.s32 %s156, 1
    %p160 = scmp.eq.s32.totalorder %s17, 2
    %p161 = scmp.ne.s32.totalorder %s156, %s158
    %p162 = scmp.eq.s32.totalorder %s17, 0
    %p163 = por %p161, %p162
    %p164 = scmp.ne.s32.totalorder %s156, %s158
    %p165 = scmp.eq.s32.totalorder %s22, 2
    %p166 = por %p164, %p165
    %p167 = scmp.ne.s32.totalorder %s158, %s159
    %p168 = scmp.eq.s32.totalorder %s22, 0
    %p169 = por %p167, %p168
    %p170 = scmp.ne.s32.totalorder %s158, %s159
    %p171 = scmp.eq.s32.totalorder %s23, 2
    %p172 = por %p170, %p171
    %p174 = scmp.ne.s32.totalorder %s159, %s173
    %p175 = scmp.eq.s32.totalorder %s23, 0
    %p176 = por %p174, %p175
    %s178 = sadd.s32 %s177, 1
    %p181 = scmp.eq.s32.totalorder %s17, 2
    %p182 = scmp.ne.s32.totalorder %s177, %s179
    %p183 = scmp.eq.s32.totalorder %s17, 0
    %p184 = por %p182, %p183
    %p185 = scmp.ne.s32.totalorder %s177, %s179
    %p186 = scmp.eq.s32.totalorder %s22, 2
    %p187 = por %p185, %p186
    %p188 = scmp.ne.s32.totalorder %s179, %s180
    %p189 = scmp.eq.s32.totalorder %s22, 0
    %p190 = por %p188, %p189
    %p191 = scmp.ne.s32.totalorder %s179, %s180
    %p192 = scmp.eq.s32.totalorder %s23, 2
    %p193 = por %p191, %p192
    %p195 = scmp.ne.s32.totalorder %s180, %s194
    %p196 = scmp.eq.s32.totalorder %s23, 0
    %p197 = por %p195, %p196
    %s199 = sadd.s32 %s198, 1
    %p202 = scmp.eq.s32.totalorder %s17, 2
    %p203 = scmp.ne.s32.totalorder %s198, %s200
    %p204 = scmp.eq.s32.totalorder %s17, 0
    %p205 = por %p203, %p204
    %p206 = scmp.ne.s32.totalorder %s198, %s200
    %p207 = scmp.eq.s32.totalorder %s22, 2
    %p208 = por %p206, %p207
    %p209 = scmp.ne.s32.totalorder %s200, %s201
    %p210 = scmp.eq.s32.totalorder %s22, 0
    %p211 = por %p209, %p210
    %p212 = scmp.ne.s32.totalorder %s200, %s201
    %p213 = scmp.eq.s32.totalorder %s23, 2
    %p214 = por %p212, %p213
    %p216 = scmp.ne.s32.totalorder %s201, %s215
    %p217 = scmp.eq.s32.totalorder %s23, 0
    %p218 = por %p216, %p217
    %s220 = sadd.s32 %s219, 1
    %p223 = scmp.eq.s32.totalorder %s17, 2
    %p224 = scmp.ne.s32.totalorder %s219, %s221
    %p225 = scmp.eq.s32.totalorder %s17, 0
    %p226 = por %p224, %p225
    %p227 = scmp.ne.s32.totalorder %s219, %s221
    %p228 = scmp.eq.s32.totalorder %s22, 2
    %p229 = por %p227, %p228
    %p230 = scmp.ne.s32.totalorder %s221, %s222
    %p231 = scmp.eq.s32.totalorder %s22, 0
    %p232 = por %p230, %p231
    %p233 = scmp.ne.s32.totalorder %s221, %s222
    %p234 = scmp.eq.s32.totalorder %s23, 2
    %p235 = por %p233, %p234
    %p237 = scmp.ne.s32.totalorder %s222, %s236
    %p238 = scmp.eq.s32.totalorder %s23, 0
    %p239 = por %p237, %p238
    %s241 = sadd.s32 %s240, 1
    %p244 = scmp.eq.s32.totalorder %s17, 2
    %p245 = scmp.ne.s32.totalorder %s240, %s242
    %p246 = scmp.eq.s32.totalorder %s17, 0
    %p247 = por %p245, %p246
    %p248 = scmp.ne.s32.totalorder %s240, %s242
    %p249 = scmp.eq.s32.totalorder %s22, 2
    %p250 = por %p248, %p249
    %p251 = scmp.ne.s32.totalorder %s242, %s243
    %p252 = scmp.eq.s32.totalorder %s22, 0
    %p253 = por %p251, %p252
    %p254 = scmp.ne.s32.totalorder %s242, %s243
    %p255 = scmp.eq.s32.totalorder %s23, 2
    %p256 = por %p254, %p255
    %p258 = scmp.ne.s32.totalorder %s243, %s257
    %p259 = scmp.eq.s32.totalorder %s23, 0
    %p260 = por %p258, %p259
    %p261 = scmp.le.s32.totalorder 1, %s17
    %p262 = scmp.lt.s32.totalorder %s17, 4
    %p263 = pnand %p261, %p262
    %p264 = pneg %p263
    // Predicated region
    $region9: #{simnet_forward.4} parent=5 // pred_check
      _
    $region10: #{simnet_forward.4} parent=5 // pred_check_branch
      %266 = sbr.rel (%p263) target = $region12
    $region11: #{simnet_forward.4} parent=5 // pred_region
      %s267 = ssub.s32 %s17, 1
      // Predicated region
      $region13: #{simnet_forward.4} parent=11 // pred_check
        %p268 = pneg %p64
      $region14: #{simnet_forward.4} parent=11 // pred_check_branch
        %270 = sbr.rel (%p268) target = $region16
      $region15: #{simnet_forward.4} parent=11 // pred_region
        _
      $region16: #{simnet_forward.4} parent=11 // pred_fallthru
        _
      // Predicated region
      $region17: #{simnet_forward.4} parent=11 // pred_check
        %p271 = pneg %p85
      $region18: #{simnet_forward.4} parent=11 // pred_check_branch
        %273 = sbr.rel (%p271) target = $region20
      $region19: #{simnet_forward.4} parent=11 // pred_region
        _
      $region20: #{simnet_forward.4} parent=11 // pred_fallthru
        _
      // Predicated region
      $region21: #{simnet_forward.4} parent=11 // pred_check
        %p274 = pneg %p106
      $region22: #{simnet_forward.4} parent=11 // pred_check_branch
        %276 = sbr.rel (%p274) target = $region24
      $region23: #{simnet_forward.4} parent=11 // pred_region
        _
      $region24: #{simnet_forward.4} parent=11 // pred_fallthru
        _
      // Predicated region
      $region25: #{simnet_forward.4} parent=11 // pred_check
        %p277 = pneg %p127
      $region26: #{simnet_forward.4} parent=11 // pred_check_branch
        %279 = sbr.rel (%p277) target = $region28
      $region27: #{simnet_forward.4} parent=11 // pred_region
        _
      $region28: #{simnet_forward.4} parent=11 // pred_fallthru
        _
      // Predicated region
      $region29: #{simnet_forward.4} parent=11 // pred_check
        %p280 = pneg %p148
      $region30: #{simnet_forward.4} parent=11 // pred_check_branch
        %282 = sbr.rel (%p280) target = $region32
      $region31: #{simnet_forward.4} parent=11 // pred_region
        _
      $region32: #{simnet_forward.4} parent=11 // pred_fallthru
        _
      // Predicated region
      $region33: #{simnet_forward.4} parent=11 // pred_check
        %p283 = pneg %p169
      $region34: #{simnet_forward.4} parent=11 // pred_check_branch
        %285 = sbr.rel (%p283) target = $region36
      $region35: #{simnet_forward.4} parent=11 // pred_region
        _
      $region36: #{simnet_forward.4} parent=11 // pred_fallthru
        _
      // Predicated region
      $region37: #{simnet_forward.4} parent=11 // pred_check
        %p286 = pneg %p190
      $region38: #{simnet_forward.4} parent=11 // pred_check_branch
        %288 = sbr.rel (%p286) target = $region40
      $region39: #{simnet_forward.4} parent=11 // pred_region
        _
      $region40: #{simnet_forward.4} parent=11 // pred_fallthru
        _
      // Predicated region
      $region41: #{simnet_forward.4} parent=11 // pred_check
        %p289 = pneg %p211
      $region42: #{simnet_forward.4} parent=11 // pred_check_branch
        %291 = sbr.rel (%p289) target = $region44
      $region43: #{simnet_forward.4} parent=11 // pred_region
        _
      $region44: #{simnet_forward.4} parent=11 // pred_fallthru
        _
    $region12: #{simnet_forward.4} parent=5 // pred_fallthru
      _
    %p292 = scmp.lt.s32.totalorder %s17, 3
    // Predicated region
    $region45: #{simnet_forward.4} parent=5 // pred_check
      %p293 = pneg %p292
    $region46: #{simnet_forward.4} parent=5 // pred_check_branch
      %295 = sbr.rel (%p293) target = $region48
    $region47: #{simnet_forward.4} parent=5 // pred_region
      // Predicated region
      $region49: #{simnet_forward.4} parent=47 // pred_check
        %p296 = pneg %p37
      $region50: #{simnet_forward.4} parent=47 // pred_check_branch
        %298 = sbr.rel (%p296) target = $region52
      $region51: #{simnet_forward.4} parent=47 // pred_region
        %s299 = smul.u32 16, %s17
        %p300 = scmp.lt.s32.totalorder %s299, 47
        %s301 = scalar_select %p300, %s299, 47
        %s302 = smul.addr %s301, 4
        %s303 = scalar_lea.vmem %s0, %s302
        %s304 = smul.u32 16, %s17
      $region52: #{simnet_forward.4} parent=47 // pred_fallthru
        _
    $region48: #{simnet_forward.4} parent=5 // pred_fallthru
      _
    %p305 = scmp.le.s32.totalorder 1, %s17
    %p306 = scmp.lt.s32.totalorder %s17, 4
    %p307 = pnand %p305, %p306
    %p308 = pneg %p307
    // Predicated region
    $region53: #{simnet_forward.4} parent=5 // pred_check
      _
    $region54: #{simnet_forward.4} parent=5 // pred_check_branch
      %310 = sbr.rel (%p307) target = $region56
    $region55: #{simnet_forward.4} parent=5 // pred_region
      %s311 = ssub.s32 %s17, 1
      %s312 = smul.u32 16, %s22
      %p313 = scmp.lt.s32.totalorder %s312, 47
      %s314 = scalar_select %p313, %s312, 47
      %s315 = smul.addr %s314, 4
      %s316 = scalar_lea.vmem %s0, %s315
      %p317 = pneg %p43
      %p318 = pneg %p40
      %p319 = pneg %p64
      %p320 = pneg %p61
      %p321 = pneg %p85
      %p322 = pneg %p82
      %p323 = pneg %p106
      %p324 = pneg %p103
      %p325 = pneg %p127
      %p326 = pneg %p124
      %p327 = pneg %p148
      %p328 = pneg %p145
      %p329 = pneg %p169
      %p330 = pneg %p166
      %p331 = pneg %p190
      %p332 = pneg %p187
      %p333 = pneg %p211
      %p334 = pneg %p208
      %p335 = pneg %p232
      %p336 = pneg %p229
      %p337 = pneg %p253
      %p338 = pneg %p250
      %s339 = smul.u32 16, %s22
      %p340 = scmp.lt.s32.totalorder %s339, 47
      %s341 = scalar_select %p340, %s339, 47
      %s342 = smul.addr %s341, 4
      %s343 = scalar_lea.vmem %s0, %s342
      %s344 = smul.u32 16, %s22
      %p346 = scmp.eq.s32.totalorder %s22, 0
      // Predicated region
      $region57: #{simnet_forward.4} parent=55 // pred_check
        %p347 = pneg %p346
      $region58: #{simnet_forward.4} parent=55 // pred_check_branch
        %349 = sbr.rel (%p347) target = $region60
      $region59: #{simnet_forward.4} parent=55 // pred_region
        %vm350 = vcmask 516096
        %351 = vst.msk [vmem:[%s9] sm:$0x1] %vm350, 0.0
        %352 = vst.msk [vmem:[%s10] sm:$0x1] %vm350, 0.0
      $region60: #{simnet_forward.4} parent=55 // pred_fallthru
        _
      %s353 = smul.u32 %s22, 128
      %v354 = vlaneseq
      %v355 = vshrl.u32 %v354, 7
      %v356 = vadd.s32 %v355, 8
      %v357 = vadd.s32 %v355, 16
      %v358 = vadd.s32 %v355, 24
      %v359 = vadd.s32 %v355, 32
      %v360 = vadd.s32 %v355, 40
      %v361 = vadd.s32 %v355, 48
      %v362 = vadd.s32 %v355, 56
      %v363 = vadd.s32 %v355, 64
      %v364 = vadd.s32 %v355, 72
      %v365 = vadd.s32 %v355, 80
      %v366 = vadd.s32 %v355, 88
      %v367 = vadd.s32 %v355, 96
      %v368 = vadd.s32 %v355, 104
      %v369 = vadd.s32 %v355, 112
      %v370 = vadd.s32 %v355, 120
      %v371 = vstv %s353
      %v372 = vadd.s32 %v371, %v355
      %v373 = vadd.s32 %v371, %v356
      %v374 = vadd.s32 %v371, %v357
      %v375 = vadd.s32 %v371, %v358
      %v376 = vadd.s32 %v371, %v359
      %v377 = vadd.s32 %v371, %v360
      %v378 = vadd.s32 %v371, %v361
      %v379 = vadd.s32 %v371, %v362
      %v380 = vadd.s32 %v371, %v363
      %v381 = vadd.s32 %v371, %v364
      %v382 = vadd.s32 %v371, %v365
      %v383 = vadd.s32 %v371, %v366
      %v384 = vadd.s32 %v371, %v367
      %v385 = vadd.s32 %v371, %v368
      %v386 = vadd.s32 %v371, %v369
      %v387 = vadd.s32 %v371, %v370
      %vm388 = vcmp.lt.s32.totalorder %v372, 333
      %vm389 = vcmp.lt.s32.totalorder %v373, 333
      %vm390 = vcmp.lt.s32.totalorder %v374, 333
      %vm391 = vcmp.lt.s32.totalorder %v375, 333
      %vm392 = vcmp.lt.s32.totalorder %v376, 333
      %vm393 = vcmp.lt.s32.totalorder %v377, 333
      %vm394 = vcmp.lt.s32.totalorder %v378, 333
      %vm395 = vcmp.lt.s32.totalorder %v379, 333
      %vm396 = vcmp.lt.s32.totalorder %v380, 333
      %vm397 = vcmp.lt.s32.totalorder %v381, 333
      %vm398 = vcmp.lt.s32.totalorder %v382, 333
      %vm399 = vcmp.lt.s32.totalorder %v383, 333
      %vm400 = vcmp.lt.s32.totalorder %v384, 333
      %vm401 = vcmp.lt.s32.totalorder %v385, 333
      %vm402 = vcmp.lt.s32.totalorder %v386, 333
      %vm403 = vcmp.lt.s32.totalorder %v387, 333
      %v404 = vsel %vm388, 1, 0
      %v405 = vsel %vm389, 1, 0
      %v406 = vsel %vm390, 1, 0
      %v407 = vsel %vm391, 1, 0
      %v408 = vsel %vm392, 1, 0
      %v409 = vsel %vm393, 1, 0
      %v410 = vsel %vm394, 1, 0
      %v411 = vsel %vm395, 1, 0
      %v412 = vsel %vm396, 1, 0
      %v413 = vsel %vm397, 1, 0
      %v414 = vsel %vm398, 1, 0
      %v415 = vsel %vm399, 1, 0
      %v416 = vsel %vm400, 1, 0
      %v417 = vsel %vm401, 1, 0
      %v418 = vsel %vm402, 1, 0
      %v419 = vsel %vm403, 1, 0
      %v420 = vcvt.s32.f32 %v404
      %v421 = vcvt.s32.f32 %v405
      %v422 = vcvt.s32.f32 %v406
      %v423 = vcvt.s32.f32 %v407
      %v424 = vcvt.s32.f32 %v408
      %v425 = vcvt.s32.f32 %v409
      %v426 = vcvt.s32.f32 %v410
      %v427 = vcvt.s32.f32 %v411
      %v428 = vcvt.s32.f32 %v412
      %v429 = vcvt.s32.f32 %v413
      %v430 = vcvt.s32.f32 %v414
      %v431 = vcvt.s32.f32 %v415
      %v432 = vcvt.s32.f32 %v416
      %v433 = vcvt.s32.f32 %v417
      %v434 = vcvt.s32.f32 %v418
      %v435 = vcvt.s32.f32 %v419
      %v436 = vld [vmem:[%s343] sm:$0xf]
      %v437 = vld [vmem:[%s343 + $0x4] sm:$0xf]
      %v438 = vld [vmem:[%s343 + $0x8] sm:$0xf]
      %v439 = vld [vmem:[%s343 + $0xc] sm:$0xf]
      %v440 = vld [vmem:[%s343 + $0x10] sm:$0xf]
      %v441 = vld [vmem:[%s343 + $0x14] sm:$0xf]
      %v442 = vld [vmem:[%s343 + $0x18] sm:$0xf]
      %v443 = vld [vmem:[%s343 + $0x1c] sm:$0xf]
      %v444 = vld [vmem:[%s343 + $0x20] sm:$0xf]
      %v445 = vld [vmem:[%s343 + $0x24] sm:$0xf]
      %v446 = vld [vmem:[%s343 + $0x28] sm:$0xf]
      %v447 = vld [vmem:[%s343 + $0x2c] sm:$0xf]
      %v448 = vld [vmem:[%s343 + $0x30] sm:$0xf]
      %v449 = vld [vmem:[%s343 + $0x34] sm:$0xf]
      %v450 = vld [vmem:[%s343 + $0x38] sm:$0xf]
      %v451 = vld [vmem:[%s343 + $0x3c] sm:$0xf]
      %v452 = vld [vmem:[%s1] sm:$0xf]
      %v453 = vld [vmem:[%s1 + $0x4] sm:$0xf]
      %v454 = vld [vmem:[%s1 + $0x8] sm:$0xf]
      %v455 = vld [vmem:[%s1 + $0xc] sm:$0xf]
      %v456 = vld [vmem:[%s2] sm:$0x1]
      %v458 = vlaneseq
      %v459 = vshrl.u32 %v458, 7
      %v460 = vsub.s32 0, %v459
      %v461 = vrot.slane %v456, %v460
      %v479 = vunpack.c.l.b16 %v436
      %v480 = vunpack.c.l.b16 %v437
      %v481 = vunpack.c.l.b16 %v438
      %v482 = vunpack.c.l.b16 %v439
      %v483 = vunpack.c.l.b16 %v440
      %v484 = vunpack.c.l.b16 %v441
      %v485 = vunpack.c.l.b16 %v442
      %v486 = vunpack.c.l.b16 %v443
      %v487 = vunpack.c.l.b16 %v444
      %v488 = vunpack.c.l.b16 %v445
      %v489 = vunpack.c.l.b16 %v446
      %v490 = vunpack.c.l.b16 %v447
      %v491 = vunpack.c.l.b16 %v448
      %v492 = vunpack.c.l.b16 %v449
      %v493 = vunpack.c.l.b16 %v450
      %v494 = vunpack.c.l.b16 %v451
      %v495 = vpack.c.b16 %v480, %v479
      %v496 = vpack.c.b16 %v482, %v481
      %v497 = vpack.c.b16 %v484, %v483
      %v498 = vpack.c.b16 %v486, %v485
      %v499 = vpack.c.b16 %v488, %v487
      %v500 = vpack.c.b16 %v490, %v489
      %v501 = vpack.c.b16 %v492, %v491
      %v502 = vpack.c.b16 %v494, %v493
      %v507 = vunpack.c.l.b16 %v452
      %v508 = vunpack.c.l.b16 %v453
      %v509 = vunpack.c.l.b16 %v454
      %v510 = vunpack.c.l.b16 %v455
      %v511 = vpack.c.b16 %v508, %v507
      %v512 = vpack.c.b16 %v510, %v509
      %vm515 = vcmask 261120
      %v517 = vsel %vm515, %v495, 0
      %v520 = vsel %vm515, %v496, 0
      %v523 = vsel %vm515, %v497, 0
      %v526 = vsel %vm515, %v498, 0
      %v529 = vsel %vm515, %v499, 0
      %v532 = vsel %vm515, %v500, 0
      %v535 = vsel %vm515, %v501, 0
      %v538 = vsel %vm515, %v502, 0
      %540 = vmatprep.subr.bf16.mxu0 0
      %541 = vmatpush1.bf16.msra.mxu0 %v511
      %542 = vmatprep.subr.bf16.mxu0 0
      %543 = vmatpush1.bf16.msra.mxu0 %v512
      %544 = vmatprep.subr.bf16.mxu0 0
      %545 = vmatpush1.bf16.msra.mxu0 0
      %546 = vmatprep.subr.bf16.mxu0 0
      %547 = vmatpush1.bf16.msra.mxu0 0
      %548 = vmatprep.subr.bf16.mxu0 0
      %549 = vmatpush1.bf16.msra.mxu0 0
      %550 = vmatprep.subr.bf16.mxu0 0
      %551 = vmatpush1.bf16.msra.mxu0 0
      %552 = vmatprep.subr.bf16.mxu0 0
      %553 = vmatpush1.bf16.msra.mxu0 0
      %554 = vmatprep.subr.bf16.mxu0 0
      %555 = vmatpush1.bf16.msra.mxu0 0
      %556 = vmatprep.subr.bf16.mxu0 0
      %557 = vmatpush1.bf16.msra.mxu0 0
      %558 = vmatprep.subr.bf16.mxu0 0
      %559 = vmatpush1.bf16.msra.mxu0 0
      %560 = vmatprep.subr.bf16.mxu0 0
      %561 = vmatpush1.bf16.msra.mxu0 0
      %562 = vmatprep.subr.bf16.mxu0 0
      %563 = vmatpush1.bf16.msra.mxu0 0
      %564 = vmatprep.subr.bf16.mxu0 0
      %565 = vmatpush1.bf16.msra.mxu0 0
      %566 = vmatprep.subr.bf16.mxu0 0
      %567 = vmatpush1.bf16.msra.mxu0 0
      %568 = vmatprep.subr.bf16.mxu0 0
      %569 = vmatpush1.bf16.msra.mxu0 0
      %570 = vmatprep.subr.bf16.mxu0 0
      %571 = vmatpush1.bf16.msra.mxu0 0
      %572 = vmatprep.mubr.bf16.mxu0 0
      %573 = vmatmul.mubr.bf16.gmra.mrb[0].mxu0 %v517
      %v574 = vpop.f32.mrb[0].mxu0
      %v575 = vadd.f32 %v461, %v574
      %v576 = vpop.f32.mrb[0].mxu0
      %v577 = vpop.f32.mrb[0].mxu0
      %v578 = vadd.f32 %v461, %v577
      %v579 = vpop.f32.mrb[0].mxu0
      %580 = vmatprep.mubr.bf16.mxu0 0
      %581 = vmatmul.mubr.bf16.gmra.mrb[0].mxu0 %v520
      %v582 = vpop.f32.mrb[0].mxu0
      %v583 = vadd.f32 %v461, %v582
      %v584 = vpop.f32.mrb[0].mxu0
      %v585 = vpop.f32.mrb[0].mxu0
      %v586 = vadd.f32 %v461, %v585
      %v587 = vpop.f32.mrb[0].mxu0
      %588 = vmatprep.mubr.bf16.mxu0 0
      %589 = vmatmul.mubr.bf16.gmra.mrb[0].mxu0 %v523
      %v590 = vpop.f32.mrb[0].mxu0
      %v591 = vadd.f32 %v461, %v590
      %v592 = vpop.f32.mrb[0].mxu0
      %v593 = vpop.f32.mrb[0].mxu0
      %v594 = vadd.f32 %v461, %v593
      %v595 = vpop.f32.mrb[0].mxu0
      %596 = vmatprep.mubr.bf16.mxu0 0
      %597 = vmatmul.mubr.bf16.gmra.mrb[0].mxu0 %v526
      %v598 = vpop.f32.mrb[0].mxu0
      %v599 = vadd.f32 %v461, %v598
      %v600 = vpop.f32.mrb[0].mxu0
      %v601 = vpop.f32.mrb[0].mxu0
      %v602 = vadd.f32 %v461, %v601
      %v603 = vpop.f32.mrb[0].mxu0
      %604 = vmatprep.mubr.bf16.mxu0 0
      %605 = vmatmul.mubr.bf16.gmra.mrb[0].mxu0 %v529
      %v606 = vpop.f32.mrb[0].mxu0
      %v607 = vadd.f32 %v461, %v606
      %v608 = vpop.f32.mrb[0].mxu0
      %v609 = vpop.f32.mrb[0].mxu0
      %v610 = vadd.f32 %v461, %v609
      %v611 = vpop.f32.mrb[0].mxu0
      %612 = vmatprep.mubr.bf16.mxu0 0
      %613 = vmatmul.mubr.bf16.gmra.mrb[0].mxu0 %v532
      %v614 = vpop.f32.mrb[0].mxu0
      %v615 = vadd.f32 %v461, %v614
      %v616 = vpop.f32.mrb[0].mxu0
      %v617 = vpop.f32.mrb[0].mxu0
      %v618 = vadd.f32 %v461, %v617
      %v619 = vpop.f32.mrb[0].mxu0
      %620 = vmatprep.mubr.bf16.mxu0 0
      %621 = vmatmul.mubr.bf16.gmra.mrb[0].mxu0 %v535
      %v622 = vpop.f32.mrb[0].mxu0
      %v623 = vadd.f32 %v461, %v622
      %v624 = vpop.f32.mrb[0].mxu0
      %v625 = vpop.f32.mrb[0].mxu0
      %v626 = vadd.f32 %v461, %v625
      %v627 = vpop.f32.mrb[0].mxu0
      %628 = vmatprep.mubr.bf16.mxu0 0
      %629 = vmatmul.mubr.bf16.gmra.mrb[0].mxu0 %v538
      %v630 = vpop.f32.mrb[0].mxu0
      %v631 = vadd.f32 %v461, %v630
      %v632 = vpop.f32.mrb[0].mxu0
      %v633 = vpop.f32.mrb[0].mxu0
      %v634 = vadd.f32 %v461, %v633
      %v635 = vpop.f32.mrb[0].mxu0
      %636 = vdwg.mxu0
      %v637 = vld [vmem:[%s3] sm:$0x1]
      %v638 = vld [vmem:[%s4] sm:$0x1]
      %v639 = vld [vmem:[%s7] sm:$0x1]
      %v640 = vmul.f32 %v639, 0.003003003
      %v641 = vld [vmem:[%s8] sm:$0x1]
      %v642 = vmul.f32 %v641, 0.003003003
      %v643 = vmul.f32 %v640, %v640
      %v644 = vsub.f32 %v642, %v643
      %v645 = vmax.f32 %v644, 0.0
      %v646 = vadd.f32 %v645, 1e-05
      %v647 = vrsqrt.pop %v646
      %v648 = vmul.f32 %v637, %v647
      %v649 = vmul.f32 %v640, %v648
      %v650 = vsub.f32 %v638, %v649
      %v652 = vlaneseq
      %v653 = vshrl.u32 %v652, 7
      %v654 = vsub.s32 0, %v653
      %v655 = vrot.slane %v648, %v654
      %v657 = vmul.f32 %v575, %v655
      %v658 = vmul.f32 %v578, %v655
      %v659 = vmul.f32 %v583, %v655
      %v660 = vmul.f32 %v586, %v655
      %v661 = vmul.f32 %v591, %v655
      %v662 = vmul.f32 %v594, %v655
      %v663 = vmul.f32 %v599, %v655
      %v664 = vmul.f32 %v602, %v655
      %v665 = vmul.f32 %v607, %v655
      %v666 = vmul.f32 %v610, %v655
      %v667 = vmul.f32 %v615, %v655
      %v668 = vmul.f32 %v618, %v655
      %v669 = vmul.f32 %v623, %v655
      %v670 = vmul.f32 %v626, %v655
      %v671 = vmul.f32 %v631, %v655
      %v672 = vmul.f32 %v634, %v655
      %v674 = vlaneseq
      %v675 = vshrl.u32 %v674, 7
      %v676 = vsub.s32 0, %v675
      %v677 = vrot.slane %v650, %v676
      %v679 = vadd.f32 %v657, %v677
      %v680 = vadd.f32 %v658, %v677
      %v681 = vadd.f32 %v659, %v677
      %v682 = vadd.f32 %v660, %v677
      %v683 = vadd.f32 %v661, %v677
      %v684 = vadd.f32 %v662, %v677
      %v685 = vadd.f32 %v663, %v677
      %v686 = vadd.f32 %v664, %v677
      %v687 = vadd.f32 %v665, %v677
      %v688 = vadd.f32 %v666, %v677
      %v689 = vadd.f32 %v667, %v677
      %v690 = vadd.f32 %v668, %v677
      %v691 = vadd.f32 %v669, %v677
      %v692 = vadd.f32 %v670, %v677
      %v693 = vadd.f32 %v671, %v677
      %v694 = vadd.f32 %v672, %v677
      %v695 = vmax.f32 %v679, 0.0
      %v696 = vmax.f32 %v680, 0.0
      %v697 = vmax.f32 %v681, 0.0
      %v698 = vmax.f32 %v682, 0.0
      %v699 = vmax.f32 %v683, 0.0
      %v700 = vmax.f32 %v684, 0.0
      %v701 = vmax.f32 %v685, 0.0
      %v702 = vmax.f32 %v686, 0.0
      %v703 = vmax.f32 %v687, 0.0
      %v704 = vmax.f32 %v688, 0.0
      %v705 = vmax.f32 %v689, 0.0
      %v706 = vmax.f32 %v690, 0.0
      %v707 = vmax.f32 %v691, 0.0
      %v708 = vmax.f32 %v692, 0.0
      %v709 = vmax.f32 %v693, 0.0
      %v710 = vmax.f32 %v694, 0.0
      %v711 = vpack.c.bf16 %v696, %v695
      %v712 = vpack.c.bf16 %v698, %v697
      %v713 = vpack.c.bf16 %v700, %v699
      %v714 = vpack.c.bf16 %v702, %v701
      %v715 = vpack.c.bf16 %v704, %v703
      %v716 = vpack.c.bf16 %v706, %v705
      %v717 = vpack.c.bf16 %v708, %v707
      %v718 = vpack.c.bf16 %v710, %v709
      %v719 = vld [vmem:[%s5] sm:$0xf]
      %v720 = vld [vmem:[%s5 + $0x4] sm:$0xf]
      %v721 = vld [vmem:[%s5 + $0x8] sm:$0xf]
      %v722 = vld [vmem:[%s5 + $0xc] sm:$0xf]
      %v723 = vld [vmem:[%s5 + $0x10] sm:$0xf]
      %v724 = vld [vmem:[%s5 + $0x14] sm:$0xf]
      %v725 = vld [vmem:[%s5 + $0x18] sm:$0xf]
      %v726 = vld [vmem:[%s5 + $0x1c] sm:$0xf]
      %v727 = vld [vmem:[%s6] sm:$0x1]
      %v729 = vlaneseq
      %v730 = vshrl.u32 %v729, 7
      %v731 = vsub.s32 0, %v730
      %v732 = vrot.slane %v727, %v731
      %v742 = vunpack.c.l.b16 %v719
      %v743 = vunpack.c.l.b16 %v720
      %v744 = vunpack.c.l.b16 %v721
      %v745 = vunpack.c.l.b16 %v722
      %v746 = vunpack.c.l.b16 %v723
      %v747 = vunpack.c.l.b16 %v724
      %v748 = vunpack.c.l.b16 %v725
      %v749 = vunpack.c.l.b16 %v726
      %v750 = vpack.c.b16 %v743, %v742
      %v751 = vpack.c.b16 %v745, %v744
      %v752 = vpack.c.b16 %v747, %v746
      %v753 = vpack.c.b16 %v749, %v748
      %vm758 = vcmask 523264
      %v760 = vsel %vm758, %v711, 0
      %v763 = vsel %vm758, %v712, 0
      %v766 = vsel %vm758, %v713, 0
      %v769 = vsel %vm758, %v714, 0
      %v772 = vsel %vm758, %v715, 0
      %v775 = vsel %vm758, %v716, 0
      %v778 = vsel %vm758, %v717, 0
      %v781 = vsel %vm758, %v718, 0
      %783 = vmatprep.subr.bf16.mxu0 0
      %784 = vmatpush1.bf16.msra.mxu0 %v750
      %785 = vmatprep.subr.bf16.mxu0 0
      %786 = vmatpush1.bf16.msra.mxu0 %v751
      %787 = vmatprep.subr.bf16.mxu0 0
      %788 = vmatpush1.bf16.msra.mxu0 %v752
      %789 = vmatprep.subr.bf16.mxu0 0
      %790 = vmatpush1.bf16.msra.mxu0 %v753
      %791 = vmatprep.subr.bf16.mxu0 0
      %792 = vmatpush1.bf16.msra.mxu0 0
      %793 = vmatprep.subr.bf16.mxu0 0
      %794 = vmatpush1.bf16.msra.mxu0 0
      %795 = vmatprep.subr.bf16.mxu0 0
      %796 = vmatpush1.bf16.msra.mxu0 0
      %797 = vmatprep.subr.bf16.mxu0 0
      %798 = vmatpush1.bf16.msra.mxu0 0
      %799 = vmatprep.subr.bf16.mxu0 0
      %800 = vmatpush1.bf16.msra.mxu0 0
      %801 = vmatprep.subr.bf16.mxu0 0
      %802 = vmatpush1.bf16.msra.mxu0 0
      %803 = vmatprep.subr.bf16.mxu0 0
      %804 = vmatpush1.bf16.msra.mxu0 0
      %805 = vmatprep.subr.bf16.mxu0 0
      %806 = vmatpush1.bf16.msra.mxu0 0
      %807 = vmatprep.subr.bf16.mxu0 0
      %808 = vmatpush1.bf16.msra.mxu0 0
      %809 = vmatprep.subr.bf16.mxu0 0
      %810 = vmatpush1.bf16.msra.mxu0 0
      %811 = vmatprep.subr.bf16.mxu0 0
      %812 = vmatpush1.bf16.msra.mxu0 0
      %813 = vmatprep.subr.bf16.mxu0 0
      %814 = vmatpush1.bf16.msra.mxu0 0
      %815 = vmatprep.mubr.bf16.mxu0 0
      %816 = vmatmul.mubr.bf16.gmra.mrb[0].mxu0 %v760
      %v817 = vpop.f32.mrb[0].mxu0
      %v818 = vadd.f32 %v732, %v817
      %v819 = vpop.f32.mrb[0].mxu0
      %v820 = vpop.f32.mrb[0].mxu0
      %v821 = vadd.f32 %v732, %v820
      %v822 = vpop.f32.mrb[0].mxu0
      %823 = vmatprep.mubr.bf16.mxu0 0
      %824 = vmatmul.mubr.bf16.gmra.mrb[0].mxu0 %v763
      %v825 = vpop.f32.mrb[0].mxu0
      %v826 = vadd.f32 %v732, %v825
      %v827 = vpop.f32.mrb[0].mxu0
      %v828 = vpop.f32.mrb[0].mxu0
      %v829 = vadd.f32 %v732, %v828
      %v830 = vpop.f32.mrb[0].mxu0
      %831 = vmatprep.mubr.bf16.mxu0 0
      %832 = vmatmul.mubr.bf16.gmra.mrb[0].mxu0 %v766
      %v833 = vpop.f32.mrb[0].mxu0
      %v834 = vadd.f32 %v732, %v833
      %v835 = vpop.f32.mrb[0].mxu0
      %v836 = vpop.f32.mrb[0].mxu0
      %v837 = vadd.f32 %v732, %v836
      %v838 = vpop.f32.mrb[0].mxu0
      %839 = vmatprep.mubr.bf16.mxu0 0
      %840 = vmatmul.mubr.bf16.gmra.mrb[0].mxu0 %v769
      %v841 = vpop.f32.mrb[0].mxu0
      %v842 = vadd.f32 %v732, %v841
      %v843 = vpop.f32.mrb[0].mxu0
      %v844 = vpop.f32.mrb[0].mxu0
      %v845 = vadd.f32 %v732, %v844
      %v846 = vpop.f32.mrb[0].mxu0
      %847 = vmatprep.mubr.bf16.mxu0 0
      %848 = vmatmul.mubr.bf16.gmra.mrb[0].mxu0 %v772
      %v849 = vpop.f32.mrb[0].mxu0
      %v850 = vadd.f32 %v732, %v849
      %v851 = vpop.f32.mrb[0].mxu0
      %v852 = vpop.f32.mrb[0].mxu0
      %v853 = vadd.f32 %v732, %v852
      %v854 = vpop.f32.mrb[0].mxu0
      %855 = vmatprep.mubr.bf16.mxu0 0
      %856 = vmatmul.mubr.bf16.gmra.mrb[0].mxu0 %v775
      %v857 = vpop.f32.mrb[0].mxu0
      %v858 = vadd.f32 %v732, %v857
      %v859 = vpop.f32.mrb[0].mxu0
      %v860 = vpop.f32.mrb[0].mxu0
      %v861 = vadd.f32 %v732, %v860
      %v862 = vpop.f32.mrb[0].mxu0
      %863 = vmatprep.mubr.bf16.mxu0 0
      %864 = vmatmul.mubr.bf16.gmra.mrb[0].mxu0 %v778
      %v865 = vpop.f32.mrb[0].mxu0
      %v866 = vadd.f32 %v732, %v865
      %v867 = vpop.f32.mrb[0].mxu0
      %v868 = vpop.f32.mrb[0].mxu0
      %v869 = vadd.f32 %v732, %v868
      %v870 = vpop.f32.mrb[0].mxu0
      %871 = vmatprep.mubr.bf16.mxu0 0
      %872 = vmatmul.mubr.bf16.gmra.mrb[0].mxu0 %v781
      %v873 = vpop.f32.mrb[0].mxu0
      %v874 = vadd.f32 %v732, %v873
      %v875 = vpop.f32.mrb[0].mxu0
      %v876 = vpop.f32.mrb[0].mxu0
      %v877 = vadd.f32 %v732, %v876
      %v878 = vpop.f32.mrb[0].mxu0
      %879 = vdwg.mxu0
      %v880 = vmul.f32 %v818, %v420
      %v881 = vmul.f32 %v821, %v421
      %v882 = vmul.f32 %v826, %v422
      %v883 = vmul.f32 %v829, %v423
      %v884 = vmul.f32 %v834, %v424
      %v885 = vmul.f32 %v837, %v425
      %v886 = vmul.f32 %v842, %v426
      %v887 = vmul.f32 %v845, %v427
      %v888 = vmul.f32 %v850, %v428
      %v889 = vmul.f32 %v853, %v429
      %v890 = vmul.f32 %v858, %v430
      %v891 = vmul.f32 %v861, %v431
      %v892 = vmul.f32 %v866, %v432
      %v893 = vmul.f32 %v869, %v433
      %v894 = vmul.f32 %v874, %v434
      %v895 = vmul.f32 %v877, %v435
      %v896 = vld [vmem:[%s9] sm:$0x1]
      %v897 = vsel %vm758, %v880, 0.0
      %v898 = vsel %vm758, %v881, 0.0
      %v899 = vadd.f32 %v897, %v898
      %v900 = vsel %vm758, %v882, 0.0
      %v901 = vadd.f32 %v899, %v900
      %v902 = vsel %vm758, %v883, 0.0
      %v903 = vadd.f32 %v901, %v902
      %v904 = vsel %vm758, %v884, 0.0
      %v905 = vadd.f32 %v903, %v904
      %v906 = vsel %vm758, %v885, 0.0
      %v907 = vadd.f32 %v905, %v906
      %v908 = vsel %vm758, %v886, 0.0
      %v909 = vadd.f32 %v907, %v908
      %v910 = vsel %vm758, %v887, 0.0
      %v911 = vadd.f32 %v909, %v910
      %v912 = vsel %vm758, %v888, 0.0
      %v913 = vadd.f32 %v911, %v912
      %v914 = vsel %vm758, %v889, 0.0
      %v915 = vadd.f32 %v913, %v914
      %v916 = vsel %vm758, %v890, 0.0
      %v917 = vadd.f32 %v915, %v916
      %v918 = vsel %vm758, %v891, 0.0
      %v919 = vadd.f32 %v917, %v918
      %v920 = vsel %vm758, %v892, 0.0
      %v921 = vadd.f32 %v919, %v920
      %v922 = vsel %vm758, %v893, 0.0
      %v923 = vadd.f32 %v921, %v922
      %v924 = vsel %vm758, %v894, 0.0
      %v925 = vadd.f32 %v923, %v924
      %v926 = vsel %vm758, %v895, 0.0
      %v927 = vadd.f32 %v925, %v926
      %v928 = vrot.slane %v927, 4
      %v929 = vadd.f32 %v927, %v928
      %v930 = vrot.slane %v929, 2
      %v931 = vadd.f32 %v929, %v930
      %v932 = vrot.slane %v931, 1
      %v933 = vadd.f32 %v931, %v932
      %v934 = vadd.f32 %v896, %v933
      %vm935 = vcmask 516096
      %936 = vst.msk [vmem:[%s9] sm:$0x1] %vm935, %v934
      %v937 = vld [vmem:[%s10] sm:$0x1]
      %v938 = vmul.f32 %v880, %v880
      %v939 = vmul.f32 %v881, %v881
      %v940 = vmul.f32 %v882, %v882
      %v941 = vmul.f32 %v883, %v883
      %v942 = vmul.f32 %v884, %v884
      %v943 = vmul.f32 %v885, %v885
      %v944 = vmul.f32 %v886, %v886
      %v945 = vmul.f32 %v887, %v887
      %v946 = vmul.f32 %v888, %v888
      %v947 = vmul.f32 %v889, %v889
      %v948 = vmul.f32 %v890, %v890
      %v949 = vmul.f32 %v891, %v891
      %v950 = vmul.f32 %v892, %v892
      %v951 = vmul.f32 %v893, %v893
      %v952 = vmul.f32 %v894, %v894
      %v953 = vmul.f32 %v895, %v895
      %v954 = vsel %vm758, %v938, 0.0
      %v955 = vsel %vm758, %v939, 0.0
      %v956 = vadd.f32 %v954, %v955
      %v957 = vsel %vm758, %v940, 0.0
      %v958 = vadd.f32 %v956, %v957
      %v959 = vsel %vm758, %v941, 0.0
      %v960 = vadd.f32 %v958, %v959
      %v961 = vsel %vm758, %v942, 0.0
      %v962 = vadd.f32 %v960, %v961
      %v963 = vsel %vm758, %v943, 0.0
      %v964 = vadd.f32 %v962, %v963
      %v965 = vsel %vm758, %v944, 0.0
      %v966 = vadd.f32 %v964, %v965
      %v967 = vsel %vm758, %v945, 0.0
      %v968 = vadd.f32 %v966, %v967
      %v969 = vsel %vm758, %v946, 0.0
      %v970 = vadd.f32 %v968, %v969
      %v971 = vsel %vm758, %v947, 0.0
      %v972 = vadd.f32 %v970, %v971
      %v973 = vsel %vm758, %v948, 0.0
      %v974 = vadd.f32 %v972, %v973
      %v975 = vsel %vm758, %v949, 0.0
      %v976 = vadd.f32 %v974, %v975
      %v977 = vsel %vm758, %v950, 0.0
      %v978 = vadd.f32 %v976, %v977
      %v979 = vsel %vm758, %v951, 0.0
      %v980 = vadd.f32 %v978, %v979
      %v981 = vsel %vm758, %v952, 0.0
      %v982 = vadd.f32 %v980, %v981
      %v983 = vsel %vm758, %v953, 0.0
      %v984 = vadd.f32 %v982, %v983
      %v985 = vrot.slane %v984, 4
      %v986 = vadd.f32 %v984, %v985
      %v987 = vrot.slane %v986, 2
      %v988 = vadd.f32 %v986, %v987
      %v989 = vrot.slane %v988, 1
      %v990 = vadd.f32 %v988, %v989
      %v991 = vadd.f32 %v937, %v990
      %992 = vst.msk [vmem:[%s10] sm:$0x1] %vm935, %v991
      // Predicated region
      $region61: #{simnet_forward.4} parent=55 // pred_check
        %p993 = pneg %p229
      $region62: #{simnet_forward.4} parent=55 // pred_check_branch
        %995 = sbr.rel (%p993) target = $region64
      $region63: #{simnet_forward.4} parent=55 // pred_region
        _
      $region64: #{simnet_forward.4} parent=55 // pred_fallthru
        _
      // Predicated region
      $region65: #{simnet_forward.4} parent=55 // pred_check
        %p996 = pneg %p250
      $region66: #{simnet_forward.4} parent=55 // pred_check_branch
        %998 = sbr.rel (%p996) target = $region68
      $region67: #{simnet_forward.4} parent=55 // pred_region
        _
      $region68: #{simnet_forward.4} parent=55 // pred_fallthru
        _
      // Predicated region
      $region69: #{simnet_forward.4} parent=55 // pred_check
        %p999 = pneg %p229
      $region70: #{simnet_forward.4} parent=55 // pred_check_branch
        %1001 = sbr.rel (%p999) target = $region72
      $region71: #{simnet_forward.4} parent=55 // pred_region
        _
      $region72: #{simnet_forward.4} parent=55 // pred_fallthru
        _
      // Predicated region
      $region73: #{simnet_forward.4} parent=55 // pred_check
        %p1002 = pneg %p250
      $region74: #{simnet_forward.4} parent=55 // pred_check_branch
        %1004 = sbr.rel (%p1002) target = $region76
      $region75: #{simnet_forward.4} parent=55 // pred_region
        _
      $region76: #{simnet_forward.4} parent=55 // pred_fallthru
        _
    $region56: #{simnet_forward.4} parent=5 // pred_fallthru
      _
    %p1005 = scmp.le.s32.totalorder 2, %s17
    // Predicated region
    $region77: #{simnet_forward.4} parent=5 // pred_check
      %p1006 = pneg %p1005
    $region78: #{simnet_forward.4} parent=5 // pred_check_branch
      %1008 = sbr.rel (%p1006) target = $region80
    $region79: #{simnet_forward.4} parent=5 // pred_region
      %s1009 = ssub.s32 %s17, 2
    $region80: #{simnet_forward.4} parent=5 // pred_fallthru
      _
  $region6: #{simnet_forward.4} parent=0 // loop_footer
    %s21 = sadd.s32 1, %s17
  $region7: #{simnet_forward.4} parent=0 // loop_footer_branch
    %16 = sbr.rel target = $region3
  $region8: #{simnet_forward.4} parent=0 // loop_exit
    _

// kernel: simnet_forward.5
$region0: #{simnet_forward.5}
  #allocation0 [shape = 'u32[]', space=smem, size = 0x4, offset = 0x4, fixed_abs, tag = 'smem constant byte address 0x4 - core index']
  #allocation1 [shape = 'u32[144,128]{1,0:T(1,128)}', space=vmem, size = 0x12000, scoped, tag = 'internal scratch']
  #allocation2 [shape = 'f32[1,1]{1,0:T(1,128)S(1)}', space=vmem, size = 0x200, scoped, tag = 'scoped memory for simnet_forward.5']
  %s0 = inlined_call_operand.vmem [shape: bf16[384,32], index: 0, kind: input, shape index: {}]
  %s1 = inlined_call_operand.vmem [shape: bf16[32,64], index: 1, kind: input, shape index: {}]
  %s2 = inlined_call_operand.vmem [shape: f32[1,64], index: 2, kind: input, shape index: {}]
  %s3 = inlined_call_operand.vmem [shape: f32[1,64], index: 3, kind: input, shape index: {}]
  %s4 = inlined_call_operand.vmem [shape: f32[1,64], index: 4, kind: input, shape index: {}]
  %s5 = inlined_call_operand.vmem [shape: bf16[64,64], index: 5, kind: input, shape index: {}]
  %s6 = inlined_call_operand.vmem [shape: f32[1,64], index: 6, kind: input, shape index: {}]
  %s7 = inlined_call_operand.vmem [shape: f32[1,64], index: 7, kind: input, shape index: {}]
  %s8 = inlined_call_operand.vmem [shape: f32[1,64], index: 8, kind: input, shape index: {}]
  %s9 = inlined_call_operand.vmem [shape: f32[1,64], index: 9, kind: input, shape index: {}]
  %s10 = inlined_call_operand.<no memory space> [shape: f32[1,1], index: 10, kind: input, shape index: {}]
  %s11 = inlined_call_operand.vmem [shape: f32[1,64], index: 11, kind: input, shape index: {}]
  %s12 = inlined_call_operand.vmem [shape: f32[1,64], index: 12, kind: input, shape index: {}]
  %s13 = inlined_call_operand.vmem [shape: f32[1,64], index: 13, kind: input, shape index: {}]
  %s14 = inlined_call_operand.vmem [shape: f32[1,64], index: 14, kind: input, shape index: {}]
  %s15 = inlined_call_operand.vmem [shape: f32[384,1], index: 15, kind: output, shape index: {}]
  %s16 = sld [smem:[#allocation0]]
  $region93: #{simnet_forward.5} parent=0
    _
  %s18 = ssub.s32 1, %s16
  %s19 = scalar_select 0, %s18, %s16
  %v20 = vstv %s10
  %21 = vst [vmem:[#allocation2] sm:$0x1] %v20
  loop: start=0, step=1, limit=5
  $region2: #{simnet_forward.5} parent=0 // loop_pre_header
    _
  $region3: #{simnet_forward.5} parent=0 // loop_header
    %s23 = sphi 0, %s27
    %p24 = scmp.ge.s32.totalorder %s23, 5
    %s33 = sphi 0, %s35
    %s36 = sphi 0, %s33
    %s37 = sphi 0, %s36
    %s53 = sphi 0, %s37
    %s57 = sphi 0, %s57
    %s59 = sphi 0, %s57
    %s60 = sphi 0, %s59
    %s74 = sphi 0, %s60
    %s78 = sphi 0, %s78
    %s80 = sphi 0, %s78
    %s81 = sphi 0, %s80
    %s95 = sphi 0, %s81
    %s99 = sphi 0, %s99
    %s101 = sphi 0, %s99
    %s102 = sphi 0, %s101
    %s116 = sphi 0, %s102
    %s120 = sphi 0, %s120
    %s122 = sphi 0, %s120
    %s123 = sphi 0, %s122
    %s137 = sphi 0, %s123
    %s141 = sphi 0, %s141
    %s143 = sphi 0, %s141
    %s144 = sphi 0, %s143
    %s158 = sphi 0, %s144
    %s162 = sphi 0, %s162
    %s164 = sphi 0, %s162
    %s165 = sphi 0, %s164
    %s179 = sphi 0, %s165
    %s183 = sphi 0, %s183
    %s185 = sphi 0, %s183
    %s186 = sphi 0, %s185
    %s200 = sphi 0, %s186
    %s204 = sphi 0, %s204
    %s206 = sphi 0, %s204
    %s207 = sphi 0, %s206
    %s221 = sphi 0, %s207
    %s225 = sphi 0, %s225
    %s227 = sphi 0, %s225
    %s228 = sphi 0, %s227
    %s242 = sphi 0, %s228
    %s246 = sphi 0, %s246
    %s248 = sphi 0, %s246
    %s249 = sphi 0, %s248
    %s263 = sphi 0, %s249
    %s267 = sphi 0, %s267
    %s269 = sphi 0, %s267
    %s270 = sphi 0, %s269
    %s284 = sphi 0, %s270
    %s288 = sphi 0, %s288
    %s290 = sphi 0, %s288
    %s291 = sphi 0, %s290
    %s305 = sphi 0, %s291
    %s309 = sphi 0, %s309
    %s311 = sphi 0, %s309
    %s312 = sphi 0, %s311
    %s326 = sphi 0, %s312
    %s330 = sphi 0, %s330
    %s332 = sphi 0, %s330
    %s333 = sphi 0, %s332
    %s347 = sphi 0, %s333
    %s353 = sphi 0, %s355
    %s356 = sphi 0, %s353
    %s357 = sphi 0, %s356
    %s373 = sphi 0, %s357
  $region4: #{simnet_forward.5} parent=0 // loop_header_branch
    %26 = sbr.rel (%p24) target = $region8
  $region5: #{simnet_forward.5} parent=0 // loop_body
    %s28 = ssub.s32 %s23, 1
    %s29 = ssub.s32 %s23, 2
    %s30 = sadd.s32 %s23, 1
    %s31 = ssub.s32 %s23, %s30
    %p32 = scmp.eq.s32.totalorder %s31, 0
    %s34 = sadd.s32 %s33, 1
    %s35 = scalar_select %p32, %s33, %s34
    %p38 = pneg %p32
    %p39 = scmp.eq.s32.totalorder %s23, 2
    %p40 = por %p38, %p39
    %p41 = scmp.ne.s32.totalorder %s33, %s36
    %p42 = scmp.eq.s32.totalorder %s23, 0
    %p43 = por %p41, %p42
    %p44 = scmp.ne.s32.totalorder %s33, %s36
    %p45 = scmp.eq.s32.totalorder %s28, 2
    %p46 = por %p44, %p45
    %p47 = scmp.ne.s32.totalorder %s36, %s37
    %p48 = scmp.eq.s32.totalorder %s28, 0
    %p49 = por %p47, %p48
    %p50 = scmp.ne.s32.totalorder %s36, %s37
    %p51 = scmp.eq.s32.totalorder %s29, 2
    %p52 = por %p50, %p51
    %p54 = scmp.ne.s32.totalorder %s37, %s53
    %p55 = scmp.eq.s32.totalorder %s29, 0
    %p56 = por %p54, %p55
    %s58 = sadd.s32 %s57, 1
    %p61 = scmp.eq.s32.totalorder %s23, 2
    %p62 = scmp.ne.s32.totalorder %s57, %s59
    %p63 = scmp.eq.s32.totalorder %s23, 0
    %p64 = por %p62, %p63
    %p65 = scmp.ne.s32.totalorder %s57, %s59
    %p66 = scmp.eq.s32.totalorder %s28, 2
    %p67 = por %p65, %p66
    %p68 = scmp.ne.s32.totalorder %s59, %s60
    %p69 = scmp.eq.s32.totalorder %s28, 0
    %p70 = por %p68, %p69
    %p71 = scmp.ne.s32.totalorder %s59, %s60
    %p72 = scmp.eq.s32.totalorder %s29, 2
    %p73 = por %p71, %p72
    %p75 = scmp.ne.s32.totalorder %s60, %s74
    %p76 = scmp.eq.s32.totalorder %s29, 0
    %p77 = por %p75, %p76
    %s79 = sadd.s32 %s78, 1
    %p82 = scmp.eq.s32.totalorder %s23, 2
    %p83 = scmp.ne.s32.totalorder %s78, %s80
    %p84 = scmp.eq.s32.totalorder %s23, 0
    %p85 = por %p83, %p84
    %p86 = scmp.ne.s32.totalorder %s78, %s80
    %p87 = scmp.eq.s32.totalorder %s28, 2
    %p88 = por %p86, %p87
    %p89 = scmp.ne.s32.totalorder %s80, %s81
    %p90 = scmp.eq.s32.totalorder %s28, 0
    %p91 = por %p89, %p90
    %p92 = scmp.ne.s32.totalorder %s80, %s81
    %p93 = scmp.eq.s32.totalorder %s29, 2
    %p94 = por %p92, %p93
    %p96 = scmp.ne.s32.totalorder %s81, %s95
    %p97 = scmp.eq.s32.totalorder %s29, 0
    %p98 = por %p96, %p97
    %s100 = sadd.s32 %s99, 1
    %p103 = scmp.eq.s32.totalorder %s23, 2
    %p104 = scmp.ne.s32.totalorder %s99, %s101
    %p105 = scmp.eq.s32.totalorder %s23, 0
    %p106 = por %p104, %p105
    %p107 = scmp.ne.s32.totalorder %s99, %s101
    %p108 = scmp.eq.s32.totalorder %s28, 2
    %p109 = por %p107, %p108
    %p110 = scmp.ne.s32.totalorder %s101, %s102
    %p111 = scmp.eq.s32.totalorder %s28, 0
    %p112 = por %p110, %p111
    %p113 = scmp.ne.s32.totalorder %s101, %s102
    %p114 = scmp.eq.s32.totalorder %s29, 2
    %p115 = por %p113, %p114
    %p117 = scmp.ne.s32.totalorder %s102, %s116
    %p118 = scmp.eq.s32.totalorder %s29, 0
    %p119 = por %p117, %p118
    %s121 = sadd.s32 %s120, 1
    %p124 = scmp.eq.s32.totalorder %s23, 2
    %p125 = scmp.ne.s32.totalorder %s120, %s122
    %p126 = scmp.eq.s32.totalorder %s23, 0
    %p127 = por %p125, %p126
    %p128 = scmp.ne.s32.totalorder %s120, %s122
    %p129 = scmp.eq.s32.totalorder %s28, 2
    %p130 = por %p128, %p129
    %p131 = scmp.ne.s32.totalorder %s122, %s123
    %p132 = scmp.eq.s32.totalorder %s28, 0
    %p133 = por %p131, %p132
    %p134 = scmp.ne.s32.totalorder %s122, %s123
    %p135 = scmp.eq.s32.totalorder %s29, 2
    %p136 = por %p134, %p135
    %p138 = scmp.ne.s32.totalorder %s123, %s137
    %p139 = scmp.eq.s32.totalorder %s29, 0
    %p140 = por %p138, %p139
    %s142 = sadd.s32 %s141, 1
    %p145 = scmp.eq.s32.totalorder %s23, 2
    %p146 = scmp.ne.s32.totalorder %s141, %s143
    %p147 = scmp.eq.s32.totalorder %s23, 0
    %p148 = por %p146, %p147
    %p149 = scmp.ne.s32.totalorder %s141, %s143
    %p150 = scmp.eq.s32.totalorder %s28, 2
    %p151 = por %p149, %p150
    %p152 = scmp.ne.s32.totalorder %s143, %s144
    %p153 = scmp.eq.s32.totalorder %s28, 0
    %p154 = por %p152, %p153
    %p155 = scmp.ne.s32.totalorder %s143, %s144
    %p156 = scmp.eq.s32.totalorder %s29, 2
    %p157 = por %p155, %p156
    %p159 = scmp.ne.s32.totalorder %s144, %s158
    %p160 = scmp.eq.s32.totalorder %s29, 0
    %p161 = por %p159, %p160
    %s163 = sadd.s32 %s162, 1
    %p166 = scmp.eq.s32.totalorder %s23, 2
    %p167 = scmp.ne.s32.totalorder %s162, %s164
    %p168 = scmp.eq.s32.totalorder %s23, 0
    %p169 = por %p167, %p168
    %p170 = scmp.ne.s32.totalorder %s162, %s164
    %p171 = scmp.eq.s32.totalorder %s28, 2
    %p172 = por %p170, %p171
    %p173 = scmp.ne.s32.totalorder %s164, %s165
    %p174 = scmp.eq.s32.totalorder %s28, 0
    %p175 = por %p173, %p174
    %p176 = scmp.ne.s32.totalorder %s164, %s165
    %p177 = scmp.eq.s32.totalorder %s29, 2
    %p178 = por %p176, %p177
    %p180 = scmp.ne.s32.totalorder %s165, %s179
    %p181 = scmp.eq.s32.totalorder %s29, 0
    %p182 = por %p180, %p181
    %s184 = sadd.s32 %s183, 1
    %p187 = scmp.eq.s32.totalorder %s23, 2
    %p188 = scmp.ne.s32.totalorder %s183, %s185
    %p189 = scmp.eq.s32.totalorder %s23, 0
    %p190 = por %p188, %p189
    %p191 = scmp.ne.s32.totalorder %s183, %s185
    %p192 = scmp.eq.s32.totalorder %s28, 2
    %p193 = por %p191, %p192
    %p194 = scmp.ne.s32.totalorder %s185, %s186
    %p195 = scmp.eq.s32.totalorder %s28, 0
    %p196 = por %p194, %p195
    %p197 = scmp.ne.s32.totalorder %s185, %s186
    %p198 = scmp.eq.s32.totalorder %s29, 2
    %p199 = por %p197, %p198
    %p201 = scmp.ne.s32.totalorder %s186, %s200
    %p202 = scmp.eq.s32.totalorder %s29, 0
    %p203 = por %p201, %p202
    %s205 = sadd.s32 %s204, 1
    %p208 = scmp.eq.s32.totalorder %s23, 2
    %p209 = scmp.ne.s32.totalorder %s204, %s206
    %p210 = scmp.eq.s32.totalorder %s23, 0
    %p211 = por %p209, %p210
    %p212 = scmp.ne.s32.totalorder %s204, %s206
    %p213 = scmp.eq.s32.totalorder %s28, 2
    %p214 = por %p212, %p213
    %p215 = scmp.ne.s32.totalorder %s206, %s207
    %p216 = scmp.eq.s32.totalorder %s28, 0
    %p217 = por %p215, %p216
    %p218 = scmp.ne.s32.totalorder %s206, %s207
    %p219 = scmp.eq.s32.totalorder %s29, 2
    %p220 = por %p218, %p219
    %p222 = scmp.ne.s32.totalorder %s207, %s221
    %p223 = scmp.eq.s32.totalorder %s29, 0
    %p224 = por %p222, %p223
    %s226 = sadd.s32 %s225, 1
    %p229 = scmp.eq.s32.totalorder %s23, 2
    %p230 = scmp.ne.s32.totalorder %s225, %s227
    %p231 = scmp.eq.s32.totalorder %s23, 0
    %p232 = por %p230, %p231
    %p233 = scmp.ne.s32.totalorder %s225, %s227
    %p234 = scmp.eq.s32.totalorder %s28, 2
    %p235 = por %p233, %p234
    %p236 = scmp.ne.s32.totalorder %s227, %s228
    %p237 = scmp.eq.s32.totalorder %s28, 0
    %p238 = por %p236, %p237
    %p239 = scmp.ne.s32.totalorder %s227, %s228
    %p240 = scmp.eq.s32.totalorder %s29, 2
    %p241 = por %p239, %p240
    %p243 = scmp.ne.s32.totalorder %s228, %s242
    %p244 = scmp.eq.s32.totalorder %s29, 0
    %p245 = por %p243, %p244
    %s247 = sadd.s32 %s246, 1
    %p250 = scmp.eq.s32.totalorder %s23, 2
    %p251 = scmp.ne.s32.totalorder %s246, %s248
    %p252 = scmp.eq.s32.totalorder %s23, 0
    %p253 = por %p251, %p252
    %p254 = scmp.ne.s32.totalorder %s246, %s248
    %p255 = scmp.eq.s32.totalorder %s28, 2
    %p256 = por %p254, %p255
    %p257 = scmp.ne.s32.totalorder %s248, %s249
    %p258 = scmp.eq.s32.totalorder %s28, 0
    %p259 = por %p257, %p258
    %p260 = scmp.ne.s32.totalorder %s248, %s249
    %p261 = scmp.eq.s32.totalorder %s29, 2
    %p262 = por %p260, %p261
    %p264 = scmp.ne.s32.totalorder %s249, %s263
    %p265 = scmp.eq.s32.totalorder %s29, 0
    %p266 = por %p264, %p265
    %s268 = sadd.s32 %s267, 1
    %p271 = scmp.eq.s32.totalorder %s23, 2
    %p272 = scmp.ne.s32.totalorder %s267, %s269
    %p273 = scmp.eq.s32.totalorder %s23, 0
    %p274 = por %p272, %p273
    %p275 = scmp.ne.s32.totalorder %s267, %s269
    %p276 = scmp.eq.s32.totalorder %s28, 2
    %p277 = por %p275, %p276
    %p278 = scmp.ne.s32.totalorder %s269, %s270
    %p279 = scmp.eq.s32.totalorder %s28, 0
    %p280 = por %p278, %p279
    %p281 = scmp.ne.s32.totalorder %s269, %s270
    %p282 = scmp.eq.s32.totalorder %s29, 2
    %p283 = por %p281, %p282
    %p285 = scmp.ne.s32.totalorder %s270, %s284
    %p286 = scmp.eq.s32.totalorder %s29, 0
    %p287 = por %p285, %p286
    %s289 = sadd.s32 %s288, 1
    %p292 = scmp.eq.s32.totalorder %s23, 2
    %p293 = scmp.ne.s32.totalorder %s288, %s290
    %p294 = scmp.eq.s32.totalorder %s23, 0
    %p295 = por %p293, %p294
    %p296 = scmp.ne.s32.totalorder %s288, %s290
    %p297 = scmp.eq.s32.totalorder %s28, 2
    %p298 = por %p296, %p297
    %p299 = scmp.ne.s32.totalorder %s290, %s291
    %p300 = scmp.eq.s32.totalorder %s28, 0
    %p301 = por %p299, %p300
    %p302 = scmp.ne.s32.totalorder %s290, %s291
    %p303 = scmp.eq.s32.totalorder %s29, 2
    %p304 = por %p302, %p303
    %p306 = scmp.ne.s32.totalorder %s291, %s305
    %p307 = scmp.eq.s32.totalorder %s29, 0
    %p308 = por %p306, %p307
    %s310 = sadd.s32 %s309, 1
    %p313 = scmp.eq.s32.totalorder %s23, 2
    %p314 = scmp.ne.s32.totalorder %s309, %s311
    %p315 = scmp.eq.s32.totalorder %s23, 0
    %p316 = por %p314, %p315
    %p317 = scmp.ne.s32.totalorder %s309, %s311
    %p318 = scmp.eq.s32.totalorder %s28, 2
    %p319 = por %p317, %p318
    %p320 = scmp.ne.s32.totalorder %s311, %s312
    %p321 = scmp.eq.s32.totalorder %s28, 0
    %p322 = por %p320, %p321
    %p323 = scmp.ne.s32.totalorder %s311, %s312
    %p324 = scmp.eq.s32.totalorder %s29, 2
    %p325 = por %p323, %p324
    %p327 = scmp.ne.s32.totalorder %s312, %s326
    %p328 = scmp.eq.s32.totalorder %s29, 0
    %p329 = por %p327, %p328
    %s331 = sadd.s32 %s330, 1
    %p334 = scmp.eq.s32.totalorder %s23, 2
    %p335 = scmp.ne.s32.totalorder %s330, %s332
    %p336 = scmp.eq.s32.totalorder %s23, 0
    %p337 = por %p335, %p336
    %p338 = scmp.ne.s32.totalorder %s330, %s332
    %p339 = scmp.eq.s32.totalorder %s28, 2
    %p340 = por %p338, %p339
    %p341 = scmp.ne.s32.totalorder %s332, %s333
    %p342 = scmp.eq.s32.totalorder %s28, 0
    %p343 = por %p341, %p342
    %p344 = scmp.ne.s32.totalorder %s332, %s333
    %p345 = scmp.eq.s32.totalorder %s29, 2
    %p346 = por %p344, %p345
    %p348 = scmp.ne.s32.totalorder %s333, %s347
    %p349 = scmp.eq.s32.totalorder %s29, 0
    %p350 = por %p348, %p349
    %s351 = ssub.s32 %s23, %s30
    %p352 = scmp.eq.s32.totalorder %s351, 0
    %s354 = sadd.s32 %s353, 1
    %s355 = scalar_select %p352, %s353, %s354
    %p358 = pneg %p352
    %p359 = scmp.eq.s32.totalorder %s23, 2
    %p360 = por %p358, %p359
    %p361 = scmp.ne.s32.totalorder %s353, %s356
    %p362 = scmp.eq.s32.totalorder %s23, 0
    %p363 = por %p361, %p362
    %p364 = scmp.ne.s32.totalorder %s353, %s356
    %p365 = scmp.eq.s32.totalorder %s28, 2
    %p366 = por %p364, %p365
    %p367 = scmp.ne.s32.totalorder %s356, %s357
    %p368 = scmp.eq.s32.totalorder %s28, 0
    %p369 = por %p367, %p368
    %p370 = scmp.ne.s32.totalorder %s356, %s357
    %p371 = scmp.eq.s32.totalorder %s29, 2
    %p372 = por %p370, %p371
    %p374 = scmp.ne.s32.totalorder %s357, %s373
    %p375 = scmp.eq.s32.totalorder %s29, 0
    %p376 = por %p374, %p375
    %p377 = scmp.le.s32.totalorder 1, %s23
    %p378 = scmp.lt.s32.totalorder %s23, 4
    %p379 = pnand %p377, %p378
    %p380 = pneg %p379
    // Predicated region
    $region9: #{simnet_forward.5} parent=5 // pred_check
      _
    $region10: #{simnet_forward.5} parent=5 // pred_check_branch
      %382 = sbr.rel (%p379) target = $region12
    $region11: #{simnet_forward.5} parent=5 // pred_region
      %s383 = ssub.s32 %s23, 1
      // Predicated region
      $region13: #{simnet_forward.5} parent=11 // pred_check
        %p384 = pneg %p70
      $region14: #{simnet_forward.5} parent=11 // pred_check_branch
        %386 = sbr.rel (%p384) target = $region16
      $region15: #{simnet_forward.5} parent=11 // pred_region
        _
      $region16: #{simnet_forward.5} parent=11 // pred_fallthru
        _
      // Predicated region
      $region17: #{simnet_forward.5} parent=11 // pred_check
        %p387 = pneg %p91
      $region18: #{simnet_forward.5} parent=11 // pred_check_branch
        %389 = sbr.rel (%p387) target = $region20
      $region19: #{simnet_forward.5} parent=11 // pred_region
        _
      $region20: #{simnet_forward.5} parent=11 // pred_fallthru
        _
      // Predicated region
      $region21: #{simnet_forward.5} parent=11 // pred_check
        %p390 = pneg %p112
      $region22: #{simnet_forward.5} parent=11 // pred_check_branch
        %392 = sbr.rel (%p390) target = $region24
      $region23: #{simnet_forward.5} parent=11 // pred_region
        _
      $region24: #{simnet_forward.5} parent=11 // pred_fallthru
        _
      // Predicated region
      $region25: #{simnet_forward.5} parent=11 // pred_check
        %p393 = pneg %p133
      $region26: #{simnet_forward.5} parent=11 // pred_check_branch
        %395 = sbr.rel (%p393) target = $region28
      $region27: #{simnet_forward.5} parent=11 // pred_region
        _
      $region28: #{simnet_forward.5} parent=11 // pred_fallthru
        _
      // Predicated region
      $region29: #{simnet_forward.5} parent=11 // pred_check
        %p396 = pneg %p154
      $region30: #{simnet_forward.5} parent=11 // pred_check_branch
        %398 = sbr.rel (%p396) target = $region32
      $region31: #{simnet_forward.5} parent=11 // pred_region
        _
      $region32: #{simnet_forward.5} parent=11 // pred_fallthru
        _
      // Predicated region
      $region33: #{simnet_forward.5} parent=11 // pred_check
        %p399 = pneg %p175
      $region34: #{simnet_forward.5} parent=11 // pred_check_branch
        %401 = sbr.rel (%p399) target = $region36
      $region35: #{simnet_forward.5} parent=11 // pred_region
        _
      $region36: #{simnet_forward.5} parent=11 // pred_fallthru
        _
      // Predicated region
      $region37: #{simnet_forward.5} parent=11 // pred_check
        %p402 = pneg %p196
      $region38: #{simnet_forward.5} parent=11 // pred_check_branch
        %404 = sbr.rel (%p402) target = $region40
      $region39: #{simnet_forward.5} parent=11 // pred_region
        _
      $region40: #{simnet_forward.5} parent=11 // pred_fallthru
        _
      // Predicated region
      $region41: #{simnet_forward.5} parent=11 // pred_check
        %p405 = pneg %p217
      $region42: #{simnet_forward.5} parent=11 // pred_check_branch
        %407 = sbr.rel (%p405) target = $region44
      $region43: #{simnet_forward.5} parent=11 // pred_region
        _
      $region44: #{simnet_forward.5} parent=11 // pred_fallthru
        _
      // Predicated region
      $region45: #{simnet_forward.5} parent=11 // pred_check
        %p408 = pneg %p238
      $region46: #{simnet_forward.5} parent=11 // pred_check_branch
        %410 = sbr.rel (%p408) target = $region48
      $region47: #{simnet_forward.5} parent=11 // pred_region
        _
      $region48: #{simnet_forward.5} parent=11 // pred_fallthru
        _
      // Predicated region
      $region49: #{simnet_forward.5} parent=11 // pred_check
        %p411 = pneg %p259
      $region50: #{simnet_forward.5} parent=11 // pred_check_branch
        %413 = sbr.rel (%p411) target = $region52
      $region51: #{simnet_forward.5} parent=11 // pred_region
        _
      $region52: #{simnet_forward.5} parent=11 // pred_fallthru
        _
      // Predicated region
      $region53: #{simnet_forward.5} parent=11 // pred_check
        %p414 = pneg %p280
      $region54: #{simnet_forward.5} parent=11 // pred_check_branch
        %416 = sbr.rel (%p414) target = $region56
      $region55: #{simnet_forward.5} parent=11 // pred_region
        _
      $region56: #{simnet_forward.5} parent=11 // pred_fallthru
        _
      // Predicated region
      $region57: #{simnet_forward.5} parent=11 // pred_check
        %p417 = pneg %p301
      $region58: #{simnet_forward.5} parent=11 // pred_check_branch
        %419 = sbr.rel (%p417) target = $region60
      $region59: #{simnet_forward.5} parent=11 // pred_region
        _
      $region60: #{simnet_forward.5} parent=11 // pred_fallthru
        _
      // Predicated region
      $region61: #{simnet_forward.5} parent=11 // pred_check
        %p420 = pneg %p322
      $region62: #{simnet_forward.5} parent=11 // pred_check_branch
        %422 = sbr.rel (%p420) target = $region64
      $region63: #{simnet_forward.5} parent=11 // pred_region
        _
      $region64: #{simnet_forward.5} parent=11 // pred_fallthru
        _
      // Predicated region
      $region65: #{simnet_forward.5} parent=11 // pred_check
        %p423 = pneg %p343
      $region66: #{simnet_forward.5} parent=11 // pred_check_branch
        %425 = sbr.rel (%p423) target = $region68
      $region67: #{simnet_forward.5} parent=11 // pred_region
        _
      $region68: #{simnet_forward.5} parent=11 // pred_fallthru
        _
    $region12: #{simnet_forward.5} parent=5 // pred_fallthru
      _
    %p426 = scmp.lt.s32.totalorder %s23, 3
    // Predicated region
    $region69: #{simnet_forward.5} parent=5 // pred_check
      %p427 = pneg %p426
    $region70: #{simnet_forward.5} parent=5 // pred_check_branch
      %429 = sbr.rel (%p427) target = $region72
    $region71: #{simnet_forward.5} parent=5 // pred_region
      // Predicated region
      $region73: #{simnet_forward.5} parent=71 // pred_check
        %p430 = pneg %p43
      $region74: #{simnet_forward.5} parent=71 // pred_check_branch
        %432 = sbr.rel (%p430) target = $region76
      $region75: #{simnet_forward.5} parent=71 // pred_region
        %s433 = smul.u32 16, %s23
        %p434 = scmp.lt.s32.totalorder %s433, 47
        %s435 = scalar_select %p434, %s433, 47
        %s436 = smul.addr %s435, 4
        %s437 = scalar_lea.vmem %s0, %s436
        %s438 = smul.u32 16, %s23
      $region76: #{simnet_forward.5} parent=71 // pred_fallthru
        _
    $region72: #{simnet_forward.5} parent=5 // pred_fallthru
      _
    %p439 = scmp.le.s32.totalorder 1, %s23
    %p440 = scmp.lt.s32.totalorder %s23, 4
    %p441 = pnand %p439, %p440
    %p442 = pneg %p441
    // Predicated region
    $region77: #{simnet_forward.5} parent=5 // pred_check
      _
    $region78: #{simnet_forward.5} parent=5 // pred_check_branch
      %444 = sbr.rel (%p441) target = $region80
    $region79: #{simnet_forward.5} parent=5 // pred_region
      %s445 = ssub.s32 %s23, 1
      %s446 = smul.u32 16, %s28
      %p447 = scmp.lt.s32.totalorder %s446, 47
      %s448 = scalar_select %p447, %s446, 47
      %s449 = smul.addr %s448, 4
      %s450 = scalar_lea.vmem %s0, %s449
      %p451 = pneg %p49
      %p452 = pneg %p46
      %p453 = pneg %p70
      %p454 = pneg %p67
      %p455 = pneg %p91
      %p456 = pneg %p88
      %p457 = pneg %p112
      %p458 = pneg %p109
      %p459 = pneg %p133
      %p460 = pneg %p130
      %p461 = pneg %p154
      %p462 = pneg %p151
      %p463 = pneg %p175
      %p464 = pneg %p172
      %p465 = pneg %p196
      %p466 = pneg %p193
      %p467 = pneg %p217
      %p468 = pneg %p214
      %p469 = pneg %p238
      %p470 = pneg %p235
      %p471 = pneg %p259
      %p472 = pneg %p256
      %p473 = pneg %p280
      %p474 = pneg %p277
      %p475 = pneg %p301
      %p476 = pneg %p298
      %p477 = pneg %p322
      %p478 = pneg %p319
      %p479 = pneg %p343
      %p480 = pneg %p340
      %p481 = pneg %p369
      %p482 = pneg %p366
      %s483 = smul.u32 16, %s28
      %p484 = scmp.lt.s32.totalorder %s483, 47
      %s485 = scalar_select %p484, %s483, 47
      %s486 = smul.addr %s485, 8
      %s487 = scalar_lea.vmem %s15, %s486
      %s488 = smul.u32 16, %s28
      %p489 = scmp.lt.s32.totalorder %s488, 47
      %s490 = scalar_select %p489, %s488, 47
      %s491 = smul.addr %s490, 4
      %s492 = scalar_lea.vmem %s0, %s491
      %s493 = smul.u32 16, %s28
      %s494 = smul.u32 16, %s28
      %p495 = scmp.lt.s32.totalorder %s494, 47
      %s496 = scalar_select %p495, %s494, 47
      %s497 = smul.addr %s496, 8
      %s498 = scalar_lea.vmem %s15, %s497
      %s499 = smul.u32 16, %s28
      %v501 = vld [vmem:[%s492] sm:$0xf]
      %v502 = vld [vmem:[%s492 + $0x4] sm:$0xf]
      %v503 = vld [vmem:[%s492 + $0x8] sm:$0xf]
      %v504 = vld [vmem:[%s492 + $0xc] sm:$0xf]
      %v505 = vld [vmem:[%s492 + $0x10] sm:$0xf]
      %v506 = vld [vmem:[%s492 + $0x14] sm:$0xf]
      %v507 = vld [vmem:[%s492 + $0x18] sm:$0xf]
      %v508 = vld [vmem:[%s492 + $0x1c] sm:$0xf]
      %v509 = vld [vmem:[%s492 + $0x20] sm:$0xf]
      %v510 = vld [vmem:[%s492 + $0x24] sm:$0xf]
      %v511 = vld [vmem:[%s492 + $0x28] sm:$0xf]
      %v512 = vld [vmem:[%s492 + $0x2c] sm:$0xf]
      %v513 = vld [vmem:[%s492 + $0x30] sm:$0xf]
      %v514 = vld [vmem:[%s492 + $0x34] sm:$0xf]
      %v515 = vld [vmem:[%s492 + $0x38] sm:$0xf]
      %v516 = vld [vmem:[%s492 + $0x3c] sm:$0xf]
      %v517 = vld [vmem:[%s1] sm:$0xf]
      %v518 = vld [vmem:[%s1 + $0x4] sm:$0xf]
      %v519 = vld [vmem:[%s1 + $0x8] sm:$0xf]
      %v520 = vld [vmem:[%s1 + $0xc] sm:$0xf]
      %v521 = vld [vmem:[%s2] sm:$0x1]
      %v523 = vlaneseq
      %v524 = vshrl.u32 %v523, 7
      %v525 = vsub.s32 0, %v524
      %v526 = vrot.slane %v521, %v525
      %v544 = vunpack.c.l.b16 %v501
      %v545 = vunpack.c.l.b16 %v502
      %v546 = vunpack.c.l.b16 %v503
      %v547 = vunpack.c.l.b16 %v504
      %v548 = vunpack.c.l.b16 %v505
      %v549 = vunpack.c.l.b16 %v506
      %v550 = vunpack.c.l.b16 %v507
      %v551 = vunpack.c.l.b16 %v508
      %v552 = vunpack.c.l.b16 %v509
      %v553 = vunpack.c.l.b16 %v510
      %v554 = vunpack.c.l.b16 %v511
      %v555 = vunpack.c.l.b16 %v512
      %v556 = vunpack.c.l.b16 %v513
      %v557 = vunpack.c.l.b16 %v514
      %v558 = vunpack.c.l.b16 %v515
      %v559 = vunpack.c.l.b16 %v516
      %v560 = vpack.c.b16 %v545, %v544
      %v561 = vpack.c.b16 %v547, %v546
      %v562 = vpack.c.b16 %v549, %v548
      %v563 = vpack.c.b16 %v551, %v550
      %v564 = vpack.c.b16 %v553, %v552
      %v565 = vpack.c.b16 %v555, %v554
      %v566 = vpack.c.b16 %v557, %v556
      %v567 = vpack.c.b16 %v559, %v558
      %v572 = vunpack.c.l.b16 %v517
      %v573 = vunpack.c.l.b16 %v518
      %v574 = vunpack.c.l.b16 %v519
      %v575 = vunpack.c.l.b16 %v520
      %v576 = vpack.c.b16 %v573, %v572
      %v577 = vpack.c.b16 %v575, %v574
      %vm580 = vcmask 261120
      %v582 = vsel %vm580, %v560, 0
      %v585 = vsel %vm580, %v561, 0
      %v588 = vsel %vm580, %v562, 0
      %v591 = vsel %vm580, %v563, 0
      %v594 = vsel %vm580, %v564, 0
      %v597 = vsel %vm580, %v565, 0
      %v600 = vsel %vm580, %v566, 0
      %v603 = vsel %vm580, %v567, 0
      %605 = vmatprep.subr.bf16.mxu0 0
      %606 = vmatpush1.bf16.msra.mxu0 %v576
      %607 = vmatprep.subr.bf16.mxu0 0
      %608 = vmatpush1.bf16.msra.mxu0 %v577
      %609 = vmatprep.subr.bf16.mxu0 0
      %610 = vmatpush1.bf16.msra.mxu0 0
      %611 = vmatprep.subr.bf16.mxu0 0
      %612 = vmatpush1.bf16.msra.mxu0 0
      %613 = vmatprep.subr.bf16.mxu0 0
      %614 = vmatpush1.bf16.msra.mxu0 0
      %615 = vmatprep.subr.bf16.mxu0 0
      %616 = vmatpush1.bf16.msra.mxu0 0
      %617 = vmatprep.subr.bf16.mxu0 0
      %618 = vmatpush1.bf16.msra.mxu0 0
      %619 = vmatprep.subr.bf16.mxu0 0
      %620 = vmatpush1.bf16.msra.mxu0 0
      %621 = vmatprep.subr.bf16.mxu0 0
      %622 = vmatpush1.bf16.msra.mxu0 0
      %623 = vmatprep.subr.bf16.mxu0 0
      %624 = vmatpush1.bf16.msra.mxu0 0
      %625 = vmatprep.subr.bf16.mxu0 0
      %626 = vmatpush1.bf16.msra.mxu0 0
      %627 = vmatprep.subr.bf16.mxu0 0
      %628 = vmatpush1.bf16.msra.mxu0 0
      %629 = vmatprep.subr.bf16.mxu0 0
      %630 = vmatpush1.bf16.msra.mxu0 0
      %631 = vmatprep.subr.bf16.mxu0 0
      %632 = vmatpush1.bf16.msra.mxu0 0
      %633 = vmatprep.subr.bf16.mxu0 0
      %634 = vmatpush1.bf16.msra.mxu0 0
      %635 = vmatprep.subr.bf16.mxu0 0
      %636 = vmatpush1.bf16.msra.mxu0 0
      %637 = vmatprep.mubr.bf16.mxu0 0
      %638 = vmatmul.mubr.bf16.gmra.mrb[0].mxu0 %v582
      %v639 = vpop.f32.mrb[0].mxu0
      %v640 = vadd.f32 %v526, %v639
      %v641 = vpop.f32.mrb[0].mxu0
      %v642 = vpop.f32.mrb[0].mxu0
      %v643 = vadd.f32 %v526, %v642
      %v644 = vpop.f32.mrb[0].mxu0
      %645 = vmatprep.mubr.bf16.mxu0 0
      %646 = vmatmul.mubr.bf16.gmra.mrb[0].mxu0 %v585
      %v647 = vpop.f32.mrb[0].mxu0
      %v648 = vadd.f32 %v526, %v647
      %v649 = vpop.f32.mrb[0].mxu0
      %v650 = vpop.f32.mrb[0].mxu0
      %v651 = vadd.f32 %v526, %v650
      %v652 = vpop.f32.mrb[0].mxu0
      %653 = vmatprep.mubr.bf16.mxu0 0
      %654 = vmatmul.mubr.bf16.gmra.mrb[0].mxu0 %v588
      %v655 = vpop.f32.mrb[0].mxu0
      %v656 = vadd.f32 %v526, %v655
      %v657 = vpop.f32.mrb[0].mxu0
      %v658 = vpop.f32.mrb[0].mxu0
      %v659 = vadd.f32 %v526, %v658
      %v660 = vpop.f32.mrb[0].mxu0
      %661 = vmatprep.mubr.bf16.mxu0 0
      %662 = vmatmul.mubr.bf16.gmra.mrb[0].mxu0 %v591
      %v663 = vpop.f32.mrb[0].mxu0
      %v664 = vadd.f32 %v526, %v663
      %v665 = vpop.f32.mrb[0].mxu0
      %v666 = vpop.f32.mrb[0].mxu0
      %v667 = vadd.f32 %v526, %v666
      %v668 = vpop.f32.mrb[0].mxu0
      %669 = vmatprep.mubr.bf16.mxu0 0
      %670 = vmatmul.mubr.bf16.gmra.mrb[0].mxu0 %v594
      %v671 = vpop.f32.mrb[0].mxu0
      %v672 = vadd.f32 %v526, %v671
      %v673 = vpop.f32.mrb[0].mxu0
      %v674 = vpop.f32.mrb[0].mxu0
      %v675 = vadd.f32 %v526, %v674
      %v676 = vpop.f32.mrb[0].mxu0
      %677 = vmatprep.mubr.bf16.mxu0 0
      %678 = vmatmul.mubr.bf16.gmra.mrb[0].mxu0 %v597
      %v679 = vpop.f32.mrb[0].mxu0
      %v680 = vadd.f32 %v526, %v679
      %v681 = vpop.f32.mrb[0].mxu0
      %v682 = vpop.f32.mrb[0].mxu0
      %v683 = vadd.f32 %v526, %v682
      %v684 = vpop.f32.mrb[0].mxu0
      %685 = vmatprep.mubr.bf16.mxu0 0
      %686 = vmatmul.mubr.bf16.gmra.mrb[0].mxu0 %v600
      %v687 = vpop.f32.mrb[0].mxu0
      %v688 = vadd.f32 %v526, %v687
      %v689 = vpop.f32.mrb[0].mxu0
      %v690 = vpop.f32.mrb[0].mxu0
      %v691 = vadd.f32 %v526, %v690
      %v692 = vpop.f32.mrb[0].mxu0
      %693 = vmatprep.mubr.bf16.mxu0 0
      %694 = vmatmul.mubr.bf16.gmra.mrb[0].mxu0 %v603
      %v695 = vpop.f32.mrb[0].mxu0
      %v696 = vadd.f32 %v526, %v695
      %v697 = vpop.f32.mrb[0].mxu0
      %v698 = vpop.f32.mrb[0].mxu0
      %v699 = vadd.f32 %v526, %v698
      %v700 = vpop.f32.mrb[0].mxu0
      %701 = vdwg.mxu0
      %v702 = vld [vmem:[%s3] sm:$0x1]
      %v703 = vld [vmem:[%s4] sm:$0x1]
      %v704 = vld [vmem:[%s11] sm:$0x1]
      %v705 = vmul.f32 %v704, 0.003003003
      %v706 = vld [vmem:[%s12] sm:$0x1]
      %v707 = vmul.f32 %v706, 0.003003003
      %v708 = vmul.f32 %v705, %v705
      %v709 = vsub.f32 %v707, %v708
      %v710 = vmax.f32 %v709, 0.0
      %v711 = vadd.f32 %v710, 1e-05
      %v712 = vrsqrt.pop %v711
      %v713 = vmul.f32 %v702, %v712
      %v714 = vmul.f32 %v705, %v713
      %v715 = vsub.f32 %v703, %v714
      %v717 = vlaneseq
      %v718 = vshrl.u32 %v717, 7
      %v719 = vsub.s32 0, %v718
      %v720 = vrot.slane %v713, %v719
      %v722 = vmul.f32 %v640, %v720
      %v723 = vmul.f32 %v643, %v720
      %v724 = vmul.f32 %v648, %v720
      %v725 = vmul.f32 %v651, %v720
      %v726 = vmul.f32 %v656, %v720
      %v727 = vmul.f32 %v659, %v720
      %v728 = vmul.f32 %v664, %v720
      %v729 = vmul.f32 %v667, %v720
      %v730 = vmul.f32 %v672, %v720
      %v731 = vmul.f32 %v675, %v720
      %v732 = vmul.f32 %v680, %v720
      %v733 = vmul.f32 %v683, %v720
      %v734 = vmul.f32 %v688, %v720
      %v735 = vmul.f32 %v691, %v720
      %v736 = vmul.f32 %v696, %v720
      %v737 = vmul.f32 %v699, %v720
      %v739 = vlaneseq
      %v740 = vshrl.u32 %v739, 7
      %v741 = vsub.s32 0, %v740
      %v742 = vrot.slane %v715, %v741
      %v744 = vadd.f32 %v722, %v742
      %v745 = vadd.f32 %v723, %v742
      %v746 = vadd.f32 %v724, %v742
      %v747 = vadd.f32 %v725, %v742
      %v748 = vadd.f32 %v726, %v742
      %v749 = vadd.f32 %v727, %v742
      %v750 = vadd.f32 %v728, %v742
      %v751 = vadd.f32 %v729, %v742
      %v752 = vadd.f32 %v730, %v742
      %v753 = vadd.f32 %v731, %v742
      %v754 = vadd.f32 %v732, %v742
      %v755 = vadd.f32 %v733, %v742
      %v756 = vadd.f32 %v734, %v742
      %v757 = vadd.f32 %v735, %v742
      %v758 = vadd.f32 %v736, %v742
      %v759 = vadd.f32 %v737, %v742
      %v760 = vmax.f32 %v744, 0.0
      %v761 = vmax.f32 %v745, 0.0
      %v762 = vmax.f32 %v746, 0.0
      %v763 = vmax.f32 %v747, 0.0
      %v764 = vmax.f32 %v748, 0.0
      %v765 = vmax.f32 %v749, 0.0
      %v766 = vmax.f32 %v750, 0.0
      %v767 = vmax.f32 %v751, 0.0
      %v768 = vmax.f32 %v752, 0.0
      %v769 = vmax.f32 %v753, 0.0
      %v770 = vmax.f32 %v754, 0.0
      %v771 = vmax.f32 %v755, 0.0
      %v772 = vmax.f32 %v756, 0.0
      %v773 = vmax.f32 %v757, 0.0
      %v774 = vmax.f32 %v758, 0.0
      %v775 = vmax.f32 %v759, 0.0
      %v776 = vpack.c.bf16 %v761, %v760
      %v777 = vpack.c.bf16 %v763, %v762
      %v778 = vpack.c.bf16 %v765, %v764
      %v779 = vpack.c.bf16 %v767, %v766
      %v780 = vpack.c.bf16 %v769, %v768
      %v781 = vpack.c.bf16 %v771, %v770
      %v782 = vpack.c.bf16 %v773, %v772
      %v783 = vpack.c.bf16 %v775, %v774
      %v784 = vld [vmem:[%s5] sm:$0xf]
      %v785 = vld [vmem:[%s5 + $0x4] sm:$0xf]
      %v786 = vld [vmem:[%s5 + $0x8] sm:$0xf]
      %v787 = vld [vmem:[%s5 + $0xc] sm:$0xf]
      %v788 = vld [vmem:[%s5 + $0x10] sm:$0xf]
      %v789 = vld [vmem:[%s5 + $0x14] sm:$0xf]
      %v790 = vld [vmem:[%s5 + $0x18] sm:$0xf]
      %v791 = vld [vmem:[%s5 + $0x1c] sm:$0xf]
      %v792 = vld [vmem:[%s6] sm:$0x1]
      %v794 = vlaneseq
      %v795 = vshrl.u32 %v794, 7
      %v796 = vsub.s32 0, %v795
      %v797 = vrot.slane %v792, %v796
      %v807 = vunpack.c.l.b16 %v784
      %v808 = vunpack.c.l.b16 %v785
      %v809 = vunpack.c.l.b16 %v786
      %v810 = vunpack.c.l.b16 %v787
      %v811 = vunpack.c.l.b16 %v788
      %v812 = vunpack.c.l.b16 %v789
      %v813 = vunpack.c.l.b16 %v790
      %v814 = vunpack.c.l.b16 %v791
      %v815 = vpack.c.b16 %v808, %v807
      %v816 = vpack.c.b16 %v810, %v809
      %v817 = vpack.c.b16 %v812, %v811
      %v818 = vpack.c.b16 %v814, %v813
      %vm823 = vcmask 523264
      %v825 = vsel %vm823, %v776, 0
      %v828 = vsel %vm823, %v777, 0
      %v831 = vsel %vm823, %v778, 0
      %v834 = vsel %vm823, %v779, 0
      %v837 = vsel %vm823, %v780, 0
      %v840 = vsel %vm823, %v781, 0
      %v843 = vsel %vm823, %v782, 0
      %v846 = vsel %vm823, %v783, 0
      %848 = vmatprep.subr.bf16.mxu0 0
      %849 = vmatpush1.bf16.msra.mxu0 %v815
      %850 = vmatprep.subr.bf16.mxu0 0
      %851 = vmatpush1.bf16.msra.mxu0 %v816
      %852 = vmatprep.subr.bf16.mxu0 0
      %853 = vmatpush1.bf16.msra.mxu0 %v817
      %854 = vmatprep.subr.bf16.mxu0 0
      %855 = vmatpush1.bf16.msra.mxu0 %v818
      %856 = vmatprep.subr.bf16.mxu0 0
      %857 = vmatpush1.bf16.msra.mxu0 0
      %858 = vmatprep.subr.bf16.mxu0 0
      %859 = vmatpush1.bf16.msra.mxu0 0
      %860 = vmatprep.subr.bf16.mxu0 0
      %861 = vmatpush1.bf16.msra.mxu0 0
      %862 = vmatprep.subr.bf16.mxu0 0
      %863 = vmatpush1.bf16.msra.mxu0 0
      %864 = vmatprep.subr.bf16.mxu0 0
      %865 = vmatpush1.bf16.msra.mxu0 0
      %866 = vmatprep.subr.bf16.mxu0 0
      %867 = vmatpush1.bf16.msra.mxu0 0
      %868 = vmatprep.subr.bf16.mxu0 0
      %869 = vmatpush1.bf16.msra.mxu0 0
      %870 = vmatprep.subr.bf16.mxu0 0
      %871 = vmatpush1.bf16.msra.mxu0 0
      %872 = vmatprep.subr.bf16.mxu0 0
      %873 = vmatpush1.bf16.msra.mxu0 0
      %874 = vmatprep.subr.bf16.mxu0 0
      %875 = vmatpush1.bf16.msra.mxu0 0
      %876 = vmatprep.subr.bf16.mxu0 0
      %877 = vmatpush1.bf16.msra.mxu0 0
      %878 = vmatprep.subr.bf16.mxu0 0
      %879 = vmatpush1.bf16.msra.mxu0 0
      %880 = vmatprep.mubr.bf16.mxu0 0
      %881 = vmatmul.mubr.bf16.gmra.mrb[0].mxu0 %v825
      %v882 = vpop.f32.mrb[0].mxu0
      %v883 = vadd.f32 %v797, %v882
      %v884 = vpop.f32.mrb[0].mxu0
      %v885 = vpop.f32.mrb[0].mxu0
      %v886 = vadd.f32 %v797, %v885
      %v887 = vpop.f32.mrb[0].mxu0
      %888 = vmatprep.mubr.bf16.mxu0 0
      %889 = vmatmul.mubr.bf16.gmra.mrb[0].mxu0 %v828
      %v890 = vpop.f32.mrb[0].mxu0
      %v891 = vadd.f32 %v797, %v890
      %v892 = vpop.f32.mrb[0].mxu0
      %v893 = vpop.f32.mrb[0].mxu0
      %v894 = vadd.f32 %v797, %v893
      %v895 = vpop.f32.mrb[0].mxu0
      %896 = vmatprep.mubr.bf16.mxu0 0
      %897 = vmatmul.mubr.bf16.gmra.mrb[0].mxu0 %v831
      %v898 = vpop.f32.mrb[0].mxu0
      %v899 = vadd.f32 %v797, %v898
      %v900 = vpop.f32.mrb[0].mxu0
      %v901 = vpop.f32.mrb[0].mxu0
      %v902 = vadd.f32 %v797, %v901
      %v903 = vpop.f32.mrb[0].mxu0
      %904 = vmatprep.mubr.bf16.mxu0 0
      %905 = vmatmul.mubr.bf16.gmra.mrb[0].mxu0 %v834
      %v906 = vpop.f32.mrb[0].mxu0
      %v907 = vadd.f32 %v797, %v906
      %v908 = vpop.f32.mrb[0].mxu0
      %v909 = vpop.f32.mrb[0].mxu0
      %v910 = vadd.f32 %v797, %v909
      %v911 = vpop.f32.mrb[0].mxu0
      %912 = vmatprep.mubr.bf16.mxu0 0
      %913 = vmatmul.mubr.bf16.gmra.mrb[0].mxu0 %v837
      %v914 = vpop.f32.mrb[0].mxu0
      %v915 = vadd.f32 %v797, %v914
      %v916 = vpop.f32.mrb[0].mxu0
      %v917 = vpop.f32.mrb[0].mxu0
      %v918 = vadd.f32 %v797, %v917
      %v919 = vpop.f32.mrb[0].mxu0
      %920 = vmatprep.mubr.bf16.mxu0 0
      %921 = vmatmul.mubr.bf16.gmra.mrb[0].mxu0 %v840
      %v922 = vpop.f32.mrb[0].mxu0
      %v923 = vadd.f32 %v797, %v922
      %v924 = vpop.f32.mrb[0].mxu0
      %v925 = vpop.f32.mrb[0].mxu0
      %v926 = vadd.f32 %v797, %v925
      %v927 = vpop.f32.mrb[0].mxu0
      %928 = vmatprep.mubr.bf16.mxu0 0
      %929 = vmatmul.mubr.bf16.gmra.mrb[0].mxu0 %v843
      %v930 = vpop.f32.mrb[0].mxu0
      %v931 = vadd.f32 %v797, %v930
      %v932 = vpop.f32.mrb[0].mxu0
      %v933 = vpop.f32.mrb[0].mxu0
      %v934 = vadd.f32 %v797, %v933
      %v935 = vpop.f32.mrb[0].mxu0
      %936 = vmatprep.mubr.bf16.mxu0 0
      %937 = vmatmul.mubr.bf16.gmra.mrb[0].mxu0 %v846
      %v938 = vpop.f32.mrb[0].mxu0
      %v939 = vadd.f32 %v797, %v938
      %v940 = vpop.f32.mrb[0].mxu0
      %v941 = vpop.f32.mrb[0].mxu0
      %v942 = vadd.f32 %v797, %v941
      %v943 = vpop.f32.mrb[0].mxu0
      %944 = vdwg.mxu0
      %v945 = vld [vmem:[%s7] sm:$0x1]
      %v946 = vld [vmem:[%s8] sm:$0x1]
      %v947 = vld [vmem:[%s13] sm:$0x1]
      %v948 = vmul.f32 %v947, 0.003003003
      %v949 = vld [vmem:[%s14] sm:$0x1]
      %v950 = vmul.f32 %v949, 0.003003003
      %v951 = vmul.f32 %v948, %v948
      %v952 = vsub.f32 %v950, %v951
      %v953 = vmax.f32 %v952, 0.0
      %v954 = vadd.f32 %v953, 1e-05
      %v955 = vrsqrt.pop %v954
      %v956 = vmul.f32 %v945, %v955
      %v957 = vmul.f32 %v948, %v956
      %v958 = vsub.f32 %v946, %v957
      %v960 = vlaneseq
      %v961 = vshrl.u32 %v960, 7
      %v962 = vsub.s32 0, %v961
      %v963 = vrot.slane %v956, %v962
      %v965 = vmul.f32 %v883, %v963
      %v966 = vmul.f32 %v886, %v963
      %v967 = vmul.f32 %v891, %v963
      %v968 = vmul.f32 %v894, %v963
      %v969 = vmul.f32 %v899, %v963
      %v970 = vmul.f32 %v902, %v963
      %v971 = vmul.f32 %v907, %v963
      %v972 = vmul.f32 %v910, %v963
      %v973 = vmul.f32 %v915, %v963
      %v974 = vmul.f32 %v918, %v963
      %v975 = vmul.f32 %v923, %v963
      %v976 = vmul.f32 %v926, %v963
      %v977 = vmul.f32 %v931, %v963
      %v978 = vmul.f32 %v934, %v963
      %v979 = vmul.f32 %v939, %v963
      %v980 = vmul.f32 %v942, %v963
      %v982 = vlaneseq
      %v983 = vshrl.u32 %v982, 7
      %v984 = vsub.s32 0, %v983
      %v985 = vrot.slane %v958, %v984
      %v987 = vadd.f32 %v965, %v985
      %v988 = vadd.f32 %v966, %v985
      %v989 = vadd.f32 %v967, %v985
      %v990 = vadd.f32 %v968, %v985
      %v991 = vadd.f32 %v969, %v985
      %v992 = vadd.f32 %v970, %v985
      %v993 = vadd.f32 %v971, %v985
      %v994 = vadd.f32 %v972, %v985
      %v995 = vadd.f32 %v973, %v985
      %v996 = vadd.f32 %v974, %v985
      %v997 = vadd.f32 %v975, %v985
      %v998 = vadd.f32 %v976, %v985
      %v999 = vadd.f32 %v977, %v985
      %v1000 = vadd.f32 %v978, %v985
      %v1001 = vadd.f32 %v979, %v985
      %v1002 = vadd.f32 %v980, %v985
      %v1003 = vmax.f32 %v987, 0.0
      %v1004 = vmax.f32 %v988, 0.0
      %v1005 = vmax.f32 %v989, 0.0
      %v1006 = vmax.f32 %v990, 0.0
      %v1007 = vmax.f32 %v991, 0.0
      %v1008 = vmax.f32 %v992, 0.0
      %v1009 = vmax.f32 %v993, 0.0
      %v1010 = vmax.f32 %v994, 0.0
      %v1011 = vmax.f32 %v995, 0.0
      %v1012 = vmax.f32 %v996, 0.0
      %v1013 = vmax.f32 %v997, 0.0
      %v1014 = vmax.f32 %v998, 0.0
      %v1015 = vmax.f32 %v999, 0.0
      %v1016 = vmax.f32 %v1000, 0.0
      %v1017 = vmax.f32 %v1001, 0.0
      %v1018 = vmax.f32 %v1002, 0.0
      %v1019 = vld [vmem:[%s9] sm:$0x1]
      %v1021 = vlaneseq
      %v1022 = vshrl.u32 %v1021, 7
      %v1023 = vsub.s32 0, %v1022
      %v1024 = vrot.slane %v1019, %v1023
      %v1026 = vmul.f32 %v1003, %v1024
      %v1027 = vmul.f32 %v1004, %v1024
      %v1028 = vmul.f32 %v1005, %v1024
      %v1029 = vmul.f32 %v1006, %v1024
      %v1030 = vmul.f32 %v1007, %v1024
      %v1031 = vmul.f32 %v1008, %v1024
      %v1032 = vmul.f32 %v1009, %v1024
      %v1033 = vmul.f32 %v1010, %v1024
      %v1034 = vmul.f32 %v1011, %v1024
      %v1035 = vmul.f32 %v1012, %v1024
      %v1036 = vmul.f32 %v1013, %v1024
      %v1037 = vmul.f32 %v1014, %v1024
      %v1038 = vmul.f32 %v1015, %v1024
      %v1039 = vmul.f32 %v1016, %v1024
      %v1040 = vmul.f32 %v1017, %v1024
      %v1041 = vmul.f32 %v1018, %v1024
      %v1042 = vsel %vm823, %v1026, 0.0
      %1043 = vadd.xlane.f32.xlu0 %v1042
      %v1044 = vpop.xlane.xlu0 %1043
      %v1045 = vsel %vm823, %v1027, 0.0
      %1046 = vadd.xlane.f32.xlu0 %v1045
      %v1047 = vpop.xlane.xlu0 %1046
      %v1048 = vsel %vm823, %v1028, 0.0
      %1049 = vadd.xlane.f32.xlu0 %v1048
      %v1050 = vpop.xlane.xlu0 %1049
      %v1051 = vsel %vm823, %v1029, 0.0
      %1052 = vadd.xlane.f32.xlu0 %v1051
      %v1053 = vpop.xlane.xlu0 %1052
      %v1054 = vsel %vm823, %v1030, 0.0
      %1055 = vadd.xlane.f32.xlu0 %v1054
      %v1056 = vpop.xlane.xlu0 %1055
      %v1057 = vsel %vm823, %v1031, 0.0
      %1058 = vadd.xlane.f32.xlu0 %v1057
      %v1059 = vpop.xlane.xlu0 %1058
      %v1060 = vsel %vm823, %v1032, 0.0
      %1061 = vadd.xlane.f32.xlu0 %v1060
      %v1062 = vpop.xlane.xlu0 %1061
      %v1063 = vsel %vm823, %v1033, 0.0
      %1064 = vadd.xlane.f32.xlu0 %v1063
      %v1065 = vpop.xlane.xlu0 %1064
      %v1066 = vsel %vm823, %v1034, 0.0
      %1067 = vadd.xlane.f32.xlu0 %v1066
      %v1068 = vpop.xlane.xlu0 %1067
      %v1069 = vsel %vm823, %v1035, 0.0
      %1070 = vadd.xlane.f32.xlu0 %v1069
      %v1071 = vpop.xlane.xlu0 %1070
      %v1072 = vsel %vm823, %v1036, 0.0
      %1073 = vadd.xlane.f32.xlu0 %v1072
      %v1074 = vpop.xlane.xlu0 %1073
      %v1075 = vsel %vm823, %v1037, 0.0
      %1076 = vadd.xlane.f32.xlu0 %v1075
      %v1077 = vpop.xlane.xlu0 %1076
      %v1078 = vsel %vm823, %v1038, 0.0
      %1079 = vadd.xlane.f32.xlu0 %v1078
      %v1080 = vpop.xlane.xlu0 %1079
      %v1081 = vsel %vm823, %v1039, 0.0
      %1082 = vadd.xlane.f32.xlu0 %v1081
      %v1083 = vpop.xlane.xlu0 %1082
      %v1084 = vsel %vm823, %v1040, 0.0
      %1085 = vadd.xlane.f32.xlu0 %v1084
      %v1086 = vpop.xlane.xlu0 %1085
      %v1087 = vsel %vm823, %v1041, 0.0
      %1088 = vadd.xlane.f32.xlu0 %v1087
      %v1089 = vpop.xlane.xlu0 %1088
      %v1090 = vld [vmem:[#allocation2] sm:$0x1]
      %v1092 = vlaneseq
      %v1093 = vshrl.u32 %v1092, 7
      %v1094 = vsub.s32 0, %v1093
      %v1095 = vrot.slane %v1090, %v1094
      %v1097 = vadd.f32 %v1044, %v1095
      %v1098 = vadd.f32 %v1047, %v1095
      %v1099 = vadd.f32 %v1050, %v1095
      %v1100 = vadd.f32 %v1053, %v1095
      %v1101 = vadd.f32 %v1056, %v1095
      %v1102 = vadd.f32 %v1059, %v1095
      %v1103 = vadd.f32 %v1062, %v1095
      %v1104 = vadd.f32 %v1065, %v1095
      %v1105 = vadd.f32 %v1068, %v1095
      %v1106 = vadd.f32 %v1071, %v1095
      %v1107 = vadd.f32 %v1074, %v1095
      %v1108 = vadd.f32 %v1077, %v1095
      %v1109 = vadd.f32 %v1080, %v1095
      %v1110 = vadd.f32 %v1083, %v1095
      %v1111 = vadd.f32 %v1086, %v1095
      %v1112 = vadd.f32 %v1089, %v1095
      %v1113 = vxor.u32 %v1097, 2147483648
      %v1114 = vxor.u32 %v1098, 2147483648
      %v1115 = vxor.u32 %v1099, 2147483648
      %v1116 = vxor.u32 %v1100, 2147483648
      %v1117 = vxor.u32 %v1101, 2147483648
      %v1118 = vxor.u32 %v1102, 2147483648
      %v1119 = vxor.u32 %v1103, 2147483648
      %v1120 = vxor.u32 %v1104, 2147483648
      %v1121 = vxor.u32 %v1105, 2147483648
      %v1122 = vxor.u32 %v1106, 2147483648
      %v1123 = vxor.u32 %v1107, 2147483648
      %v1124 = vxor.u32 %v1108, 2147483648
      %v1125 = vxor.u32 %v1109, 2147483648
      %v1126 = vxor.u32 %v1110, 2147483648
      %v1127 = vxor.u32 %v1111, 2147483648
      %v1128 = vxor.u32 %v1112, 2147483648
      %v1129 = vmul.f32 %v1113, 1.442695
      %v1130 = vpow.pop %v1129
      %v1131 = vmul.f32 %v1114, 1.442695
      %v1132 = vpow.pop %v1131
      %v1133 = vmul.f32 %v1115, 1.442695
      %v1134 = vpow.pop %v1133
      %v1135 = vmul.f32 %v1116, 1.442695
      %v1136 = vpow.pop %v1135
      %v1137 = vmul.f32 %v1117, 1.442695
      %v1138 = vpow.pop %v1137
      %v1139 = vmul.f32 %v1118, 1.442695
      %v1140 = vpow.pop %v1139
      %v1141 = vmul.f32 %v1119, 1.442695
      %v1142 = vpow.pop %v1141
      %v1143 = vmul.f32 %v1120, 1.442695
      %v1144 = vpow.pop %v1143
      %v1145 = vmul.f32 %v1121, 1.442695
      %v1146 = vpow.pop %v1145
      %v1147 = vmul.f32 %v1122, 1.442695
      %v1148 = vpow.pop %v1147
      %v1149 = vmul.f32 %v1123, 1.442695
      %v1150 = vpow.pop %v1149
      %v1151 = vmul.f32 %v1124, 1.442695
      %v1152 = vpow.pop %v1151
      %v1153 = vmul.f32 %v1125, 1.442695
      %v1154 = vpow.pop %v1153
      %v1155 = vmul.f32 %v1126, 1.442695
      %v1156 = vpow.pop %v1155
      %v1157 = vmul.f32 %v1127, 1.442695
      %v1158 = vpow.pop %v1157
      %v1159 = vmul.f32 %v1128, 1.442695
      %v1160 = vpow.pop %v1159
      %v1161 = vadd.f32 %v1130, 1.0
      %v1162 = vadd.f32 %v1132, 1.0
      %v1163 = vadd.f32 %v1134, 1.0
      %v1164 = vadd.f32 %v1136, 1.0
      %v1165 = vadd.f32 %v1138, 1.0
      %v1166 = vadd.f32 %v1140, 1.0
      %v1167 = vadd.f32 %v1142, 1.0
      %v1168 = vadd.f32 %v1144, 1.0
      %v1169 = vadd.f32 %v1146, 1.0
      %v1170 = vadd.f32 %v1148, 1.0
      %v1171 = vadd.f32 %v1150, 1.0
      %v1172 = vadd.f32 %v1152, 1.0
      %v1173 = vadd.f32 %v1154, 1.0
      %v1174 = vadd.f32 %v1156, 1.0
      %v1175 = vadd.f32 %v1158, 1.0
      %v1176 = vadd.f32 %v1160, 1.0
      %v1177 = vrcp.pop %v1161
      %v1178 = vmul.f32 1.0, %v1177
      %v1179 = vrcp.pop %v1162
      %v1180 = vmul.f32 1.0, %v1179
      %v1181 = vrcp.pop %v1163
      %v1182 = vmul.f32 1.0, %v1181
      %v1183 = vrcp.pop %v1164
      %v1184 = vmul.f32 1.0, %v1183
      %v1185 = vrcp.pop %v1165
      %v1186 = vmul.f32 1.0, %v1185
      %v1187 = vrcp.pop %v1166
      %v1188 = vmul.f32 1.0, %v1187
      %v1189 = vrcp.pop %v1167
      %v1190 = vmul.f32 1.0, %v1189
      %v1191 = vrcp.pop %v1168
      %v1192 = vmul.f32 1.0, %v1191
      %v1193 = vrcp.pop %v1169
      %v1194 = vmul.f32 1.0, %v1193
      %v1195 = vrcp.pop %v1170
      %v1196 = vmul.f32 1.0, %v1195
      %v1197 = vrcp.pop %v1171
      %v1198 = vmul.f32 1.0, %v1197
      %v1199 = vrcp.pop %v1172
      %v1200 = vmul.f32 1.0, %v1199
      %v1201 = vrcp.pop %v1173
      %v1202 = vmul.f32 1.0, %v1201
      %v1203 = vrcp.pop %v1174
      %v1204 = vmul.f32 1.0, %v1203
      %v1205 = vrcp.pop %v1175
      %v1206 = vmul.f32 1.0, %v1205
      %v1207 = vrcp.pop %v1176
      %v1208 = vmul.f32 1.0, %v1207
      %vm1209 = vcmask 7168
      %1210 = vst.msk [vmem:[%s498] sm:$0xff] %vm1209, %v1178
      %1211 = vst.msk [vmem:[%s498 + $0x8] sm:$0xff] %vm1209, %v1180
      %1212 = vst.msk [vmem:[%s498 + $0x10] sm:$0xff] %vm1209, %v1182
      %1213 = vst.msk [vmem:[%s498 + $0x18] sm:$0xff] %vm1209, %v1184
      %1214 = vst.msk [vmem:[%s498 + $0x20] sm:$0xff] %vm1209, %v1186
      %1215 = vst.msk [vmem:[%s498 + $0x28] sm:$0xff] %vm1209, %v1188
      %1216 = vst.msk [vmem:[%s498 + $0x30] sm:$0xff] %vm1209, %v1190
      %1217 = vst.msk [vmem:[%s498 + $0x38] sm:$0xff] %vm1209, %v1192
      %1218 = vst.msk [vmem:[%s498 + $0x40] sm:$0xff] %vm1209, %v1194
      %1219 = vst.msk [vmem:[%s498 + $0x48] sm:$0xff] %vm1209, %v1196
      %1220 = vst.msk [vmem:[%s498 + $0x50] sm:$0xff] %vm1209, %v1198
      %1221 = vst.msk [vmem:[%s498 + $0x58] sm:$0xff] %vm1209, %v1200
      %1222 = vst.msk [vmem:[%s498 + $0x60] sm:$0xff] %vm1209, %v1202
      %1223 = vst.msk [vmem:[%s498 + $0x68] sm:$0xff] %vm1209, %v1204
      %1224 = vst.msk [vmem:[%s498 + $0x70] sm:$0xff] %vm1209, %v1206
      %1225 = vst.msk [vmem:[%s498 + $0x78] sm:$0xff] %vm1209, %v1208
      %s1226 = smul.u32 16, %s28
      %p1227 = scmp.lt.s32.totalorder %s1226, 47
      %s1228 = scalar_select %p1227, %s1226, 47
      %s1229 = smul.addr %s1228, 8
      %s1230 = scalar_lea.vmem %s15, %s1229
      // Predicated region
      $region81: #{simnet_forward.5} parent=79 // pred_check
        %p1231 = pneg %p366
      $region82: #{simnet_forward.5} parent=79 // pred_check_branch
        %1233 = sbr.rel (%p1231) target = $region84
      $region83: #{simnet_forward.5} parent=79 // pred_region
        %s1234 = smul.u32 16, %s28
      $region84: #{simnet_forward.5} parent=79 // pred_fallthru
        _
    $region80: #{simnet_forward.5} parent=5 // pred_fallthru
      _
    %p1235 = scmp.le.s32.totalorder 2, %s23
    // Predicated region
    $region85: #{simnet_forward.5} parent=5 // pred_check
      %p1236 = pneg %p1235
    $region86: #{simnet_forward.5} parent=5 // pred_check_branch
      %1238 = sbr.rel (%p1236) target = $region88
    $region87: #{simnet_forward.5} parent=5 // pred_region
      %s1239 = ssub.s32 %s23, 2
      // Predicated region
      $region89: #{simnet_forward.5} parent=87 // pred_check
        %p1240 = pneg %p372
      $region90: #{simnet_forward.5} parent=87 // pred_check_branch
        %1242 = sbr.rel (%p1240) target = $region92
      $region91: #{simnet_forward.5} parent=87 // pred_region
        %s1243 = smul.u32 16, %s29
        %p1244 = scmp.lt.s32.totalorder %s1243, 47
        %s1245 = scalar_select %p1244, %s1243, 47
        %s1246 = smul.addr %s1245, 8
        %s1247 = scalar_lea.vmem %s15, %s1246
      $region92: #{simnet_forward.5} parent=87 // pred_fallthru
        _
    $region88: #{simnet_forward.5} parent=5 // pred_fallthru
      _
  $region6: #{simnet_forward.5} parent=0 // loop_footer
    %s27 = sadd.s32 1, %s23
  $region7: #{simnet_forward.5} parent=0 // loop_footer_branch
    %22 = sbr.rel target = $region3
  $region8: #{simnet_forward.5} parent=0 // loop_exit
    _

</llo_original>
